<compile_context>
chip_gen: v6e
topology: v6e:2x2x1
jax: 0.10.0
libtpu: 0.0.40
codegen_flags: <defaults>
</compile_context>

<pallas_src>
import jax
import jax.numpy as jnp
from jax.experimental import pallas as pl
from jax.experimental.pallas import tpu as pltpu  # noqa: F401  (imported per convention)

# ----------------------------- config (small, consistent with the module) ----
B = 2            # batch
N = 8            # sequence length
DIM = 32         # model dim
HEADS = 4
DIM_HEAD = 16
INNER = HEADS * DIM_HEAD          # 64
SCALE = DIM_HEAD ** -0.5


# --------------------------------- kernel ------------------------------------
def _attend(q, k, v):
    """softmax(q k^T * scale) @ v for q, k, v of shape (B, N, DIM_HEAD)."""
    dots = jnp.einsum("bid,bjd->bij", q, k,
                      preferred_element_type=jnp.float32) * SCALE      # (B, N, N)
    dots = dots - jnp.max(dots, axis=-1, keepdims=True)
    p = jnp.exp(dots)
    inv = pl.reciprocal(jnp.sum(p, axis=-1, keepdims=True), approx=True)  # EUP slot
    return jnp.einsum("bij,bjd->bid", p * inv, v,
                      preferred_element_type=jnp.float32)               # (B, N, dh)


def cross_attention_kernel(x1_ref, x2_ref,
                           wq1_ref, wk1_ref, wv1_ref,
                           wq2_ref, wk2_ref, wv2_ref,
                           wo1_ref, bo1_ref, wo2_ref, bo2_ref,
                           y1_ref, y2_ref):
    x1 = x1_ref[...]                        # (B*N, DIM)
    x2 = x2_ref[...]

    acc1 = jnp.zeros((B * N, DIM), jnp.float32)
    acc2 = jnp.zeros((B * N, DIM), jnp.float32)

    for h in range(HEADS):                  # static, unrolled (4 iterations)
        # Per-head projections: leading-axis ref index (free), plain 2-D dots.
        q1 = jnp.dot(x1, wq1_ref[h], preferred_element_type=jnp.float32)  # (B*N, dh)
        k1 = jnp.dot(x1, wk1_ref[h], preferred_element_type=jnp.float32)
        v1 = jnp.dot(x1, wv1_ref[h], preferred_element_type=jnp.float32)
        q2 = jnp.dot(x2, wq2_ref[h], preferred_element_type=jnp.float32)
        k2 = jnp.dot(x2, wk2_ref[h], preferred_element_type=jnp.float32)
        v2 = jnp.dot(x2, wv2_ref[h], preferred_element_type=jnp.float32)

        # (B*N, dh) -> (B, N, dh): leading-dim split only (N == 8 sublanes).
        to_b = lambda t: t.reshape(B, N, DIM_HEAD)

        o1 = _attend(to_b(q1), to_b(k2), to_b(v2))    # x1 queries attend to x2 keys/values
        o2 = _attend(to_b(q2), to_b(k1), to_b(v1))    # x2 queries attend to x1 keys/values

        # Fold the output projection into the head loop -> no head concat.
        acc1 = acc1 + jnp.dot(o1.reshape(B * N, DIM_HEAD), wo1_ref[h],
                              preferred_element_type=jnp.float32)
        acc2 = acc2 + jnp.dot(o2.reshape(B * N, DIM_HEAD), wo2_ref[h],
                              preferred_element_type=jnp.float32)

    y1_ref[...] = acc1 + bo1_ref[...]       # bias (1, DIM) broadcasts over rows
    y2_ref[...] = acc2 + bo2_ref[...]


# -------------------------------- wrapper -------------------------------------
@jax.jit
def cross_attention(x1, x2, params):
    x1f = x1.reshape(B * N, DIM)
    x2f = x2.reshape(B * N, DIM)
    y1f, y2f = pl.pallas_call(
        cross_attention_kernel,
        out_shape=(jax.ShapeDtypeStruct((B * N, DIM), jnp.float32),
                   jax.ShapeDtypeStruct((B * N, DIM), jnp.float32)),
        # No grid / no BlockSpecs: single invocation, full arrays resident in VMEM.
    )(x1f, x2f,
      params["wq1_h"], params["wk1_h"], params["wv1_h"],
      params["wq2_h"], params["wk2_h"], params["wv2_h"],
      params["wo1_h"], params["bo1"],
      params["wo2_h"], params["bo2"])
    return y1f.reshape(B, N, DIM), y2f.reshape(B, N, DIM)


# --------------------------- pure-JAX reference --------------------------------
# Mirrors the PyTorch module exactly (nn.Linear with pre-transposed weights,
# rearrange 'b n (h d) -> b h n d', softmax, projection + bias).
def reference_forward(x1, x2, params):
    def heads(t):
        return t.reshape(B, N, HEADS, DIM_HEAD).transpose(0, 2, 1, 3)   # (B, H, N, dh)

    q1, k1, v1 = map(heads, jnp.split(x1 @ params["wqkv1"], 3, axis=-1))
    q2, k2, v2 = map(heads, jnp.split(x2 @ params["wqkv2"], 3, axis=-1))

    a1 = jax.nn.softmax(jnp.einsum("bhid,bhjd->bhij", q1, k2) * SCALE, axis=-1)
    a2 = jax.nn.softmax(jnp.einsum("bhid,bhjd->bhij", q2, k1) * SCALE, axis=-1)

    o1 = jnp.einsum("bhij,bhjd->bhid", a1, v2).transpose(0, 2, 1, 3).reshape(B, N, INNER)
    o2 = jnp.einsum("bhij,bhjd->bhid", a2, v1).transpose(0, 2, 1, 3).reshape(B, N, INNER)

    y1 = o1 @ params["wo1"] + params["bo1_flat"]
    y2 = o2 @ params["wo2"] + params["bo2_flat"]
    return y1, y2


# ------------------------------ param init -------------------------------------
def init_params(key):
    k1, k2, k3, k4, k5, k6 = jax.random.split(key, 6)
    wqkv1 = 0.05 * jax.random.normal(k1, (DIM, 3 * INNER), jnp.float32)   # to_qkv1 (pre-T)
    wqkv2 = 0.05 * jax.random.normal(k2, (DIM, 3 * INNER), jnp.float32)   # to_qkv2 (pre-T)
    wo1 = 0.05 * jax.random.normal(k3, (INNER, DIM), jnp.float32)         # to_out1 (pre-T)
    wo2 = 0.05 * jax.random.normal(k4, (INNER, DIM), jnp.float32)         # to_out2 (pre-T)
    bo1 = 0.01 * jax.random.normal(k5, (DIM,), jnp.float32)
    bo2 = 0.01 * jax.random.normal(k6, (DIM,), jnp.float32)

    def split_heads(wqkv, part):
        # part: 0 = q, 1 = k, 2 = v  ->  (HEADS, DIM, DIM_HEAD), head-major like
        # rearrange 'b n (h d) -> b h n d'.
        w = wqkv[:, part * INNER:(part + 1) * INNER]
        return w.reshape(DIM, HEADS, DIM_HEAD).transpose(1, 0, 2)

    return {
        # flat (PyTorch-equivalent) layout — used by the reference
        "wqkv1": wqkv1, "wqkv2": wqkv2, "wo1": wo1, "wo2": wo2,
        "bo1_flat": bo1, "bo2_flat": bo2,
        # kernel layout — per-head leading axis, bias as (1, DIM)
        "wq1_h": split_heads(wqkv1, 0), "wk1_h": split_heads(wqkv1, 1), "wv1_h": split_heads(wqkv1, 2),
        "wq2_h": split_heads(wqkv2, 0), "wk2_h": split_heads(wqkv2, 1), "wv2_h": split_heads(wqkv2, 2),
        "wo1_h": wo1.reshape(HEADS, DIM_HEAD, DIM),
        "wo2_h": wo2.reshape(HEADS, DIM_HEAD, DIM),
        "bo1": bo1.reshape(1, DIM), "bo2": bo2.reshape(1, DIM),
    }


# ---------------------------------- main ----------------------------------------
if __name__ == "__main__":
    root = jax.random.PRNGKey(0)
    kx1, kx2, kp = jax.random.split(root, 3)
    x1 = jax.random.normal(kx1, (B, N, DIM), jnp.float32)
    x2 = jax.random.normal(kx2, (B, N, DIM), jnp.float32)
    params = init_params(kp)

    y1, y2 = cross_attention(x1, x2, params)
    y1, y2 = jax.block_until_ready((y1, y2))

    r1, r2 = reference_forward(x1, x2, params)
    assert y1.shape == (B, N, DIM) and y2.shape == (B, N, DIM)
    # tolerance covers the approximate (EUP) reciprocal in the softmax normalization
    assert jnp.allclose(y1, r1, rtol=2e-3, atol=2e-3), "out1 mismatch vs JAX reference"
    assert jnp.allclose(y2, r2, rtol=2e-3, atol=2e-3), "out2 mismatch vs JAX reference"

    print("KERNEL_OK")
</pallas_src>

<mosaic_0001>
module attributes {stable_mosaic.version = 11 : i64} {
  func.func @cross_attention_kernel(%arg0: memref<16x32xf32, #tpu.memory_space<vmem>>, %arg1: memref<16x32xf32, #tpu.memory_space<vmem>>, %arg2: memref<4x32x16xf32, #tpu.memory_space<vmem>>, %arg3: memref<4x32x16xf32, #tpu.memory_space<vmem>>, %arg4: memref<4x32x16xf32, #tpu.memory_space<vmem>>, %arg5: memref<4x32x16xf32, #tpu.memory_space<vmem>>, %arg6: memref<4x32x16xf32, #tpu.memory_space<vmem>>, %arg7: memref<4x32x16xf32, #tpu.memory_space<vmem>>, %arg8: memref<4x16x32xf32, #tpu.memory_space<vmem>>, %arg9: memref<1x32xf32, #tpu.memory_space<vmem>>, %arg10: memref<4x16x32xf32, #tpu.memory_space<vmem>>, %arg11: memref<1x32xf32, #tpu.memory_space<vmem>>, %arg12: memref<16x32xf32, #tpu.memory_space<vmem>>, %arg13: memref<16x32xf32, #tpu.memory_space<vmem>>) attributes {dimension_semantics = [], scalar_prefetch = 0 : i64, scratch_operands = 0 : i64, tpu.core_type = #tpu.core_type<tc>} {
    %c0 = arith.constant 0 : index
    %c0_0 = arith.constant 0 : index
    %0 = vector.load %arg0[%c0, %c0_0] : memref<16x32xf32, #tpu.memory_space<vmem>>, vector<16x32xf32>
    %c0_1 = arith.constant 0 : index
    %c0_2 = arith.constant 0 : index
    %1 = vector.load %arg1[%c0_1, %c0_2] : memref<16x32xf32, #tpu.memory_space<vmem>>, vector<16x32xf32>
    %cst = arith.constant 0.000000e+00 : f32
    %2 = vector.broadcast %cst : f32 to vector<16x32xf32>
    %cst_3 = arith.constant 0.000000e+00 : f32
    %3 = vector.broadcast %cst_3 : f32 to vector<16x32xf32>
    %c0_4 = arith.constant 0 : index
    %c0_5 = arith.constant 0 : index
    %c0_6 = arith.constant 0 : index
    %4 = vector.load %arg2[%c0_4, %c0_5, %c0_6] : memref<4x32x16xf32, #tpu.memory_space<vmem>>, vector<1x32x16xf32>
    %5 = vector.shape_cast %4 : vector<1x32x16xf32> to vector<32x16xf32>
    %cst_7 = arith.constant dense<0.000000e+00> : vector<16x16xf32>
    %6 = tpu.matmul %0, %5, %cst_7 {dimension_numbers = #tpu.dot_dimension_numbers<[1], [0], [0], [1], [0, 0, 1, 1], [], []>} : vector<16x32xf32>, vector<32x16xf32>, vector<16x16xf32> -> vector<16x16xf32>
    %c0_8 = arith.constant 0 : index
    %c0_9 = arith.constant 0 : index
    %c0_10 = arith.constant 0 : index
    %7 = vector.load %arg3[%c0_8, %c0_9, %c0_10] : memref<4x32x16xf32, #tpu.memory_space<vmem>>, vector<1x32x16xf32>
    %8 = vector.shape_cast %7 : vector<1x32x16xf32> to vector<32x16xf32>
    %cst_11 = arith.constant dense<0.000000e+00> : vector<16x16xf32>
    %9 = tpu.matmul %0, %8, %cst_11 {dimension_numbers = #tpu.dot_dimension_numbers<[1], [0], [0], [1], [0, 0, 1, 1], [], []>} : vector<16x32xf32>, vector<32x16xf32>, vector<16x16xf32> -> vector<16x16xf32>
    %c0_12 = arith.constant 0 : index
    %c0_13 = arith.constant 0 : index
    %c0_14 = arith.constant 0 : index
    %10 = vector.load %arg4[%c0_12, %c0_13, %c0_14] : memref<4x32x16xf32, #tpu.memory_space<vmem>>, vector<1x32x16xf32>
    %11 = vector.shape_cast %10 : vector<1x32x16xf32> to vector<32x16xf32>
    %cst_15 = arith.constant dense<0.000000e+00> : vector<16x16xf32>
    %12 = tpu.matmul %0, %11, %cst_15 {dimension_numbers = #tpu.dot_dimension_numbers<[1], [0], [0], [1], [0, 0, 1, 1], [], []>} : vector<16x32xf32>, vector<32x16xf32>, vector<16x16xf32> -> vector<16x16xf32>
    %c0_16 = arith.constant 0 : index
    %c0_17 = arith.constant 0 : index
    %c0_18 = arith.constant 0 : index
    %13 = vector.load %arg5[%c0_16, %c0_17, %c0_18] : memref<4x32x16xf32, #tpu.memory_space<vmem>>, vector<1x32x16xf32>
    %14 = vector.shape_cast %13 : vector<1x32x16xf32> to vector<32x16xf32>
    %cst_19 = arith.constant dense<0.000000e+00> : vector<16x16xf32>
    %15 = tpu.matmul %1, %14, %cst_19 {dimension_numbers = #tpu.dot_dimension_numbers<[1], [0], [0], [1], [0, 0, 1, 1], [], []>} : vector<16x32xf32>, vector<32x16xf32>, vector<16x16xf32> -> vector<16x16xf32>
    %c0_20 = arith.constant 0 : index
    %c0_21 = arith.constant 0 : index
    %c0_22 = arith.constant 0 : index
    %16 = vector.load %arg6[%c0_20, %c0_21, %c0_22] : memref<4x32x16xf32, #tpu.memory_space<vmem>>, vector<1x32x16xf32>
    %17 = vector.shape_cast %16 : vector<1x32x16xf32> to vector<32x16xf32>
    %cst_23 = arith.constant dense<0.000000e+00> : vector<16x16xf32>
    %18 = tpu.matmul %1, %17, %cst_23 {dimension_numbers = #tpu.dot_dimension_numbers<[1], [0], [0], [1], [0, 0, 1, 1], [], []>} : vector<16x32xf32>, vector<32x16xf32>, vector<16x16xf32> -> vector<16x16xf32>
    %c0_24 = arith.constant 0 : index
    %c0_25 = arith.constant 0 : index
    %c0_26 = arith.constant 0 : index
    %19 = vector.load %arg7[%c0_24, %c0_25, %c0_26] : memref<4x32x16xf32, #tpu.memory_space<vmem>>, vector<1x32x16xf32>
    %20 = vector.shape_cast %19 : vector<1x32x16xf32> to vector<32x16xf32>
    %cst_27 = arith.constant dense<0.000000e+00> : vector<16x16xf32>
    %21 = tpu.matmul %1, %20, %cst_27 {dimension_numbers = #tpu.dot_dimension_numbers<[1], [0], [0], [1], [0, 0, 1, 1], [], []>} : vector<16x32xf32>, vector<32x16xf32>, vector<16x16xf32> -> vector<16x16xf32>
    %22 = vector.shape_cast %6 : vector<16x16xf32> to vector<2x8x16xf32>
    %23 = vector.shape_cast %18 : vector<16x16xf32> to vector<2x8x16xf32>
    %24 = vector.shape_cast %21 : vector<16x16xf32> to vector<2x8x16xf32>
    "tpu.trace_start"() <{level = 10 : i32, message = "bid,bjd->bij"}> : () -> ()
    %cst_28 = arith.constant dense<0.000000e+00> : vector<2x8x8xf32>
    %25 = tpu.matmul %22, %23, %cst_28 {dimension_numbers = #tpu.dot_dimension_numbers<[2], [2], [1], [1], [0, 0, 0, 1, 1, 1], [0], [0]>} : vector<2x8x16xf32>, vector<2x8x16xf32>, vector<2x8x8xf32> -> vector<2x8x8xf32>
    "tpu.trace_stop"() : () -> ()
    %cst_29 = arith.constant 2.500000e-01 : f32
    %26 = vector.broadcast %cst_29 : f32 to vector<2x8x8xf32>
    %27 = arith.mulf %25, %26 : vector<2x8x8xf32>
    %cst_30 = arith.constant dense<0xFF800000> : vector<2x8xf32>
    %28 = vector.multi_reduction <maximumf>, %27, %cst_30 [2] : vector<2x8x8xf32> to vector<2x8xf32>
    %29 = vector.shape_cast %28 : vector<2x8xf32> to vector<2x8x1xf32>
    %30 = vector.broadcast %29 : vector<2x8x1xf32> to vector<2x8x8xf32>
    %31 = arith.subf %27, %30 : vector<2x8x8xf32>
    %32 = math.exp %31 : vector<2x8x8xf32>
    %cst_31 = arith.constant dense<0.000000e+00> : vector<2x8xf32>
    %33 = vector.multi_reduction <add>, %32, %cst_31 [2] : vector<2x8x8xf32> to vector<2x8xf32>
    %34 = vector.shape_cast %33 : vector<2x8xf32> to vector<2x8x1xf32>
    %35 = tpu.reciprocal %34 {approx = true} : vector<2x8x1xf32> -> vector<2x8x1xf32>
    %36 = vector.broadcast %35 : vector<2x8x1xf32> to vector<2x8x8xf32>
    %37 = arith.mulf %32, %36 : vector<2x8x8xf32>
    "tpu.trace_start"() <{level = 10 : i32, message = "bij,bjd->bid"}> : () -> ()
    %cst_32 = arith.constant dense<0.000000e+00> : vector<2x8x16xf32>
    %38 = tpu.matmul %37, %24, %cst_32 {dimension_numbers = #tpu.dot_dimension_numbers<[2], [1], [1], [2], [0, 0, 0, 1, 1, 2], [0], [0]>} : vector<2x8x8xf32>, vector<2x8x16xf32>, vector<2x8x16xf32> -> vector<2x8x16xf32>
    "tpu.trace_stop"() : () -> ()
    %39 = vector.shape_cast %15 : vector<16x16xf32> to vector<2x8x16xf32>
    %40 = vector.shape_cast %9 : vector<16x16xf32> to vector<2x8x16xf32>
    %41 = vector.shape_cast %12 : vector<16x16xf32> to vector<2x8x16xf32>
    "tpu.trace_start"() <{level = 10 : i32, message = "bid,bjd->bij"}> : () -> ()
    %cst_33 = arith.constant dense<0.000000e+00> : vector<2x8x8xf32>
    %42 = tpu.matmul %39, %40, %cst_33 {dimension_numbers = #tpu.dot_dimension_numbers<[2], [2], [1], [1], [0, 0, 0, 1, 1, 1], [0], [0]>} : vector<2x8x16xf32>, vector<2x8x16xf32>, vector<2x8x8xf32> -> vector<2x8x8xf32>
    "tpu.trace_stop"() : () -> ()
    %cst_34 = arith.constant 2.500000e-01 : f32
    %43 = vector.broadcast %cst_34 : f32 to vector<2x8x8xf32>
    %44 = arith.mulf %42, %43 : vector<2x8x8xf32>
    %cst_35 = arith.constant dense<0xFF800000> : vector<2x8xf32>
    %45 = vector.multi_reduction <maximumf>, %44, %cst_35 [2] : vector<2x8x8xf32> to vector<2x8xf32>
    %46 = vector.shape_cast %45 : vector<2x8xf32> to vector<2x8x1xf32>
    %47 = vector.broadcast %46 : vector<2x8x1xf32> to vector<2x8x8xf32>
    %48 = arith.subf %44, %47 : vector<2x8x8xf32>
    %49 = math.exp %48 : vector<2x8x8xf32>
    %cst_36 = arith.constant dense<0.000000e+00> : vector<2x8xf32>
    %50 = vector.multi_reduction <add>, %49, %cst_36 [2] : vector<2x8x8xf32> to vector<2x8xf32>
    %51 = vector.shape_cast %50 : vector<2x8xf32> to vector<2x8x1xf32>
    %52 = tpu.reciprocal %51 {approx = true} : vector<2x8x1xf32> -> vector<2x8x1xf32>
    %53 = vector.broadcast %52 : vector<2x8x1xf32> to vector<2x8x8xf32>
    %54 = arith.mulf %49, %53 : vector<2x8x8xf32>
    "tpu.trace_start"() <{level = 10 : i32, message = "bij,bjd->bid"}> : () -> ()
    %cst_37 = arith.constant dense<0.000000e+00> : vector<2x8x16xf32>
    %55 = tpu.matmul %54, %41, %cst_37 {dimension_numbers = #tpu.dot_dimension_numbers<[2], [1], [1], [2], [0, 0, 0, 1, 1, 2], [0], [0]>} : vector<2x8x8xf32>, vector<2x8x16xf32>, vector<2x8x16xf32> -> vector<2x8x16xf32>
    "tpu.trace_stop"() : () -> ()
    %56 = vector.shape_cast %38 : vector<2x8x16xf32> to vector<16x16xf32>
    %c0_38 = arith.constant 0 : index
    %c0_39 = arith.constant 0 : index
    %c0_40 = arith.constant 0 : index
    %57 = vector.load %arg8[%c0_38, %c0_39, %c0_40] : memref<4x16x32xf32, #tpu.memory_space<vmem>>, vector<1x16x32xf32>
    %58 = vector.shape_cast %57 : vector<1x16x32xf32> to vector<16x32xf32>
    %cst_41 = arith.constant dense<0.000000e+00> : vector<16x32xf32>
    %59 = tpu.matmul %56, %58, %cst_41 {dimension_numbers = #tpu.dot_dimension_numbers<[1], [0], [0], [1], [0, 0, 1, 1], [], []>} : vector<16x16xf32>, vector<16x32xf32>, vector<16x32xf32> -> vector<16x32xf32>
    %60 = arith.addf %2, %59 : vector<16x32xf32>
    %61 = vector.shape_cast %55 : vector<2x8x16xf32> to vector<16x16xf32>
    %c0_42 = arith.constant 0 : index
    %c0_43 = arith.constant 0 : index
    %c0_44 = arith.constant 0 : index
    %62 = vector.load %arg10[%c0_42, %c0_43, %c0_44] : memref<4x16x32xf32, #tpu.memory_space<vmem>>, vector<1x16x32xf32>
    %63 = vector.shape_cast %62 : vector<1x16x32xf32> to vector<16x32xf32>
    %cst_45 = arith.constant dense<0.000000e+00> : vector<16x32xf32>
    %64 = tpu.matmul %61, %63, %cst_45 {dimension_numbers = #tpu.dot_dimension_numbers<[1], [0], [0], [1], [0, 0, 1, 1], [], []>} : vector<16x16xf32>, vector<16x32xf32>, vector<16x32xf32> -> vector<16x32xf32>
    %65 = arith.addf %3, %64 : vector<16x32xf32>
    %c1 = arith.constant 1 : index
    %c0_46 = arith.constant 0 : index
    %c0_47 = arith.constant 0 : index
    %66 = vector.load %arg2[%c1, %c0_46, %c0_47] : memref<4x32x16xf32, #tpu.memory_space<vmem>>, vector<1x32x16xf32>
    %67 = vector.shape_cast %66 : vector<1x32x16xf32> to vector<32x16xf32>
    %cst_48 = arith.constant dense<0.000000e+00> : vector<16x16xf32>
    %68 = tpu.matmul %0, %67, %cst_48 {dimension_numbers = #tpu.dot_dimension_numbers<[1], [0], [0], [1], [0, 0, 1, 1], [], []>} : vector<16x32xf32>, vector<32x16xf32>, vector<16x16xf32> -> vector<16x16xf32>
    %c1_49 = arith.constant 1 : index
    %c0_50 = arith.constant 0 : index
    %c0_51 = arith.constant 0 : index
    %69 = vector.load %arg3[%c1_49, %c0_50, %c0_51] : memref<4x32x16xf32, #tpu.memory_space<vmem>>, vector<1x32x16xf32>
    %70 = vector.shape_cast %69 : vector<1x32x16xf32> to vector<32x16xf32>
    %cst_52 = arith.constant dense<0.000000e+00> : vector<16x16xf32>
    %71 = tpu.matmul %0, %70, %cst_52 {dimension_numbers = #tpu.dot_dimension_numbers<[1], [0], [0], [1], [0, 0, 1, 1], [], []>} : vector<16x32xf32>, vector<32x16xf32>, vector<16x16xf32> -> vector<16x16xf32>
    %c1_53 = arith.constant 1 : index
    %c0_54 = arith.constant 0 : index
    %c0_55 = arith.constant 0 : index
    %72 = vector.load %arg4[%c1_53, %c0_54, %c0_55] : memref<4x32x16xf32, #tpu.memory_space<vmem>>, vector<1x32x16xf32>
    %73 = vector.shape_cast %72 : vector<1x32x16xf32> to vector<32x16xf32>
    %cst_56 = arith.constant dense<0.000000e+00> : vector<16x16xf32>
    %74 = tpu.matmul %0, %73, %cst_56 {dimension_numbers = #tpu.dot_dimension_numbers<[1], [0], [0], [1], [0, 0, 1, 1], [], []>} : vector<16x32xf32>, vector<32x16xf32>, vector<16x16xf32> -> vector<16x16xf32>
    %c1_57 = arith.constant 1 : index
    %c0_58 = arith.constant 0 : index
    %c0_59 = arith.constant 0 : index
    %75 = vector.load %arg5[%c1_57, %c0_58, %c0_59] : memref<4x32x16xf32, #tpu.memory_space<vmem>>, vector<1x32x16xf32>
    %76 = vector.shape_cast %75 : vector<1x32x16xf32> to vector<32x16xf32>
    %cst_60 = arith.constant dense<0.000000e+00> : vector<16x16xf32>
    %77 = tpu.matmul %1, %76, %cst_60 {dimension_numbers = #tpu.dot_dimension_numbers<[1], [0], [0], [1], [0, 0, 1, 1], [], []>} : vector<16x32xf32>, vector<32x16xf32>, vector<16x16xf32> -> vector<16x16xf32>
    %c1_61 = arith.constant 1 : index
    %c0_62 = arith.constant 0 : index
    %c0_63 = arith.constant 0 : index
    %78 = vector.load %arg6[%c1_61, %c0_62, %c0_63] : memref<4x32x16xf32, #tpu.memory_space<vmem>>, vector<1x32x16xf32>
    %79 = vector.shape_cast %78 : vector<1x32x16xf32> to vector<32x16xf32>
    %cst_64 = arith.constant dense<0.000000e+00> : vector<16x16xf32>
    %80 = tpu.matmul %1, %79, %cst_64 {dimension_numbers = #tpu.dot_dimension_numbers<[1], [0], [0], [1], [0, 0, 1, 1], [], []>} : vector<16x32xf32>, vector<32x16xf32>, vector<16x16xf32> -> vector<16x16xf32>
    %c1_65 = arith.constant 1 : index
    %c0_66 = arith.constant 0 : index
    %c0_67 = arith.constant 0 : index
    %81 = vector.load %arg7[%c1_65, %c0_66, %c0_67] : memref<4x32x16xf32, #tpu.memory_space<vmem>>, vector<1x32x16xf32>
    %82 = vector.shape_cast %81 : vector<1x32x16xf32> to vector<32x16xf32>
    %cst_68 = arith.constant dense<0.000000e+00> : vector<16x16xf32>
    %83 = tpu.matmul %1, %82, %cst_68 {dimension_numbers = #tpu.dot_dimension_numbers<[1], [0], [0], [1], [0, 0, 1, 1], [], []>} : vector<16x32xf32>, vector<32x16xf32>, vector<16x16xf32> -> vector<16x16xf32>
    %84 = vector.shape_cast %68 : vector<16x16xf32> to vector<2x8x16xf32>
    %85 = vector.shape_cast %80 : vector<16x16xf32> to vector<2x8x16xf32>
    %86 = vector.shape_cast %83 : vector<16x16xf32> to vector<2x8x16xf32>
    "tpu.trace_start"() <{level = 10 : i32, message = "bid,bjd->bij"}> : () -> ()
    %cst_69 = arith.constant dense<0.000000e+00> : vector<2x8x8xf32>
    %87 = tpu.matmul %84, %85, %cst_69 {dimension_numbers = #tpu.dot_dimension_numbers<[2], [2], [1], [1], [0, 0, 0, 1, 1, 1], [0], [0]>} : vector<2x8x16xf32>, vector<2x8x16xf32>, vector<2x8x8xf32> -> vector<2x8x8xf32>
    "tpu.trace_stop"() : () -> ()
    %cst_70 = arith.constant 2.500000e-01 : f32
    %88 = vector.broadcast %cst_70 : f32 to vector<2x8x8xf32>
    %89 = arith.mulf %87, %88 : vector<2x8x8xf32>
    %cst_71 = arith.constant dense<0xFF800000> : vector<2x8xf32>
    %90 = vector.multi_reduction <maximumf>, %89, %cst_71 [2] : vector<2x8x8xf32> to vector<2x8xf32>
    %91 = vector.shape_cast %90 : vector<2x8xf32> to vector<2x8x1xf32>
    %92 = vector.broadcast %91 : vector<2x8x1xf32> to vector<2x8x8xf32>
    %93 = arith.subf %89, %92 : vector<2x8x8xf32>
    %94 = math.exp %93 : vector<2x8x8xf32>
    %cst_72 = arith.constant dense<0.000000e+00> : vector<2x8xf32>
    %95 = vector.multi_reduction <add>, %94, %cst_72 [2] : vector<2x8x8xf32> to vector<2x8xf32>
    %96 = vector.shape_cast %95 : vector<2x8xf32> to vector<2x8x1xf32>
    %97 = tpu.reciprocal %96 {approx = true} : vector<2x8x1xf32> -> vector<2x8x1xf32>
    %98 = vector.broadcast %97 : vector<2x8x1xf32> to vector<2x8x8xf32>
    %99 = arith.mulf %94, %98 : vector<2x8x8xf32>
    "tpu.trace_start"() <{level = 10 : i32, message = "bij,bjd->bid"}> : () -> ()
    %cst_73 = arith.constant dense<0.000000e+00> : vector<2x8x16xf32>
    %100 = tpu.matmul %99, %86, %cst_73 {dimension_numbers = #tpu.dot_dimension_numbers<[2], [1], [1], [2], [0, 0, 0, 1, 1, 2], [0], [0]>} : vector<2x8x8xf32>, vector<2x8x16xf32>, vector<2x8x16xf32> -> vector<2x8x16xf32>
    "tpu.trace_stop"() : () -> ()
    %101 = vector.shape_cast %77 : vector<16x16xf32> to vector<2x8x16xf32>
    %102 = vector.shape_cast %71 : vector<16x16xf32> to vector<2x8x16xf32>
    %103 = vector.shape_cast %74 : vector<16x16xf32> to vector<2x8x16xf32>
    "tpu.trace_start"() <{level = 10 : i32, message = "bid,bjd->bij"}> : () -> ()
    %cst_74 = arith.constant dense<0.000000e+00> : vector<2x8x8xf32>
    %104 = tpu.matmul %101, %102, %cst_74 {dimension_numbers = #tpu.dot_dimension_numbers<[2], [2], [1], [1], [0, 0, 0, 1, 1, 1], [0], [0]>} : vector<2x8x16xf32>, vector<2x8x16xf32>, vector<2x8x8xf32> -> vector<2x8x8xf32>
    "tpu.trace_stop"() : () -> ()
    %cst_75 = arith.constant 2.500000e-01 : f32
    %105 = vector.broadcast %cst_75 : f32 to vector<2x8x8xf32>
    %106 = arith.mulf %104, %105 : vector<2x8x8xf32>
    %cst_76 = arith.constant dense<0xFF800000> : vector<2x8xf32>
    %107 = vector.multi_reduction <maximumf>, %106, %cst_76 [2] : vector<2x8x8xf32> to vector<2x8xf32>
    %108 = vector.shape_cast %107 : vector<2x8xf32> to vector<2x8x1xf32>
    %109 = vector.broadcast %108 : vector<2x8x1xf32> to vector<2x8x8xf32>
    %110 = arith.subf %106, %109 : vector<2x8x8xf32>
    %111 = math.exp %110 : vector<2x8x8xf32>
    %cst_77 = arith.constant dense<0.000000e+00> : vector<2x8xf32>
    %112 = vector.multi_reduction <add>, %111, %cst_77 [2] : vector<2x8x8xf32> to vector<2x8xf32>
    %113 = vector.shape_cast %112 : vector<2x8xf32> to vector<2x8x1xf32>
    %114 = tpu.reciprocal %113 {approx = true} : vector<2x8x1xf32> -> vector<2x8x1xf32>
    %115 = vector.broadcast %114 : vector<2x8x1xf32> to vector<2x8x8xf32>
    %116 = arith.mulf %111, %115 : vector<2x8x8xf32>
    "tpu.trace_start"() <{level = 10 : i32, message = "bij,bjd->bid"}> : () -> ()
    %cst_78 = arith.constant dense<0.000000e+00> : vector<2x8x16xf32>
    %117 = tpu.matmul %116, %103, %cst_78 {dimension_numbers = #tpu.dot_dimension_numbers<[2], [1], [1], [2], [0, 0, 0, 1, 1, 2], [0], [0]>} : vector<2x8x8xf32>, vector<2x8x16xf32>, vector<2x8x16xf32> -> vector<2x8x16xf32>
    "tpu.trace_stop"() : () -> ()
    %118 = vector.shape_cast %100 : vector<2x8x16xf32> to vector<16x16xf32>
    %c1_79 = arith.constant 1 : index
    %c0_80 = arith.constant 0 : index
    %c0_81 = arith.constant 0 : index
    %119 = vector.load %arg8[%c1_79, %c0_80, %c0_81] : memref<4x16x32xf32, #tpu.memory_space<vmem>>, vector<1x16x32xf32>
    %120 = vector.shape_cast %119 : vector<1x16x32xf32> to vector<16x32xf32>
    %cst_82 = arith.constant dense<0.000000e+00> : vector<16x32xf32>
    %121 = tpu.matmul %118, %120, %cst_82 {dimension_numbers = #tpu.dot_dimension_numbers<[1], [0], [0], [1], [0, 0, 1, 1], [], []>} : vector<16x16xf32>, vector<16x32xf32>, vector<16x32xf32> -> vector<16x32xf32>
    %122 = arith.addf %60, %121 : vector<16x32xf32>
    %123 = vector.shape_cast %117 : vector<2x8x16xf32> to vector<16x16xf32>
    %c1_83 = arith.constant 1 : index
    %c0_84 = arith.constant 0 : index
    %c0_85 = arith.constant 0 : index
    %124 = vector.load %arg10[%c1_83, %c0_84, %c0_85] : memref<4x16x32xf32, #tpu.memory_space<vmem>>, vector<1x16x32xf32>
    %125 = vector.shape_cast %124 : vector<1x16x32xf32> to vector<16x32xf32>
    %cst_86 = arith.constant dense<0.000000e+00> : vector<16x32xf32>
    %126 = tpu.matmul %123, %125, %cst_86 {dimension_numbers = #tpu.dot_dimension_numbers<[1], [0], [0], [1], [0, 0, 1, 1], [], []>} : vector<16x16xf32>, vector<16x32xf32>, vector<16x32xf32> -> vector<16x32xf32>
    %127 = arith.addf %65, %126 : vector<16x32xf32>
    %c2 = arith.constant 2 : index
    %c0_87 = arith.constant 0 : index
    %c0_88 = arith.constant 0 : index
    %128 = vector.load %arg2[%c2, %c0_87, %c0_88] : memref<4x32x16xf32, #tpu.memory_space<vmem>>, vector<1x32x16xf32>
    %129 = vector.shape_cast %128 : vector<1x32x16xf32> to vector<32x16xf32>
    %cst_89 = arith.constant dense<0.000000e+00> : vector<16x16xf32>
    %130 = tpu.matmul %0, %129, %cst_89 {dimension_numbers = #tpu.dot_dimension_numbers<[1], [0], [0], [1], [0, 0, 1, 1], [], []>} : vector<16x32xf32>, vector<32x16xf32>, vector<16x16xf32> -> vector<16x16xf32>
    %c2_90 = arith.constant 2 : index
    %c0_91 = arith.constant 0 : index
    %c0_92 = arith.constant 0 : index
    %131 = vector.load %arg3[%c2_90, %c0_91, %c0_92] : memref<4x32x16xf32, #tpu.memory_space<vmem>>, vector<1x32x16xf32>
    %132 = vector.shape_cast %131 : vector<1x32x16xf32> to vector<32x16xf32>
    %cst_93 = arith.constant dense<0.000000e+00> : vector<16x16xf32>
    %133 = tpu.matmul %0, %132, %cst_93 {dimension_numbers = #tpu.dot_dimension_numbers<[1], [0], [0], [1], [0, 0, 1, 1], [], []>} : vector<16x32xf32>, vector<32x16xf32>, vector<16x16xf32> -> vector<16x16xf32>
    %c2_94 = arith.constant 2 : index
    %c0_95 = arith.constant 0 : index
    %c0_96 = arith.constant 0 : index
    %134 = vector.load %arg4[%c2_94, %c0_95, %c0_96] : memref<4x32x16xf32, #tpu.memory_space<vmem>>, vector<1x32x16xf32>
    %135 = vector.shape_cast %134 : vector<1x32x16xf32> to vector<32x16xf32>
    %cst_97 = arith.constant dense<0.000000e+00> : vector<16x16xf32>
    %136 = tpu.matmul %0, %135, %cst_97 {dimension_numbers = #tpu.dot_dimension_numbers<[1], [0], [0], [1], [0, 0, 1, 1], [], []>} : vector<16x32xf32>, vector<32x16xf32>, vector<16x16xf32> -> vector<16x16xf32>
    %c2_98 = arith.constant 2 : index
    %c0_99 = arith.constant 0 : index
    %c0_100 = arith.constant 0 : index
    %137 = vector.load %arg5[%c2_98, %c0_99, %c0_100] : memref<4x32x16xf32, #tpu.memory_space<vmem>>, vector<1x32x16xf32>
    %138 = vector.shape_cast %137 : vector<1x32x16xf32> to vector<32x16xf32>
    %cst_101 = arith.constant dense<0.000000e+00> : vector<16x16xf32>
    %139 = tpu.matmul %1, %138, %cst_101 {dimension_numbers = #tpu.dot_dimension_numbers<[1], [0], [0], [1], [0, 0, 1, 1], [], []>} : vector<16x32xf32>, vector<32x16xf32>, vector<16x16xf32> -> vector<16x16xf32>
    %c2_102 = arith.constant 2 : index
    %c0_103 = arith.constant 0 : index
    %c0_104 = arith.constant 0 : index
    %140 = vector.load %arg6[%c2_102, %c0_103, %c0_104] : memref<4x32x16xf32, #tpu.memory_space<vmem>>, vector<1x32x16xf32>
    %141 = vector.shape_cast %140 : vector<1x32x16xf32> to vector<32x16xf32>
    %cst_105 = arith.constant dense<0.000000e+00> : vector<16x16xf32>
    %142 = tpu.matmul %1, %141, %cst_105 {dimension_numbers = #tpu.dot_dimension_numbers<[1], [0], [0], [1], [0, 0, 1, 1], [], []>} : vector<16x32xf32>, vector<32x16xf32>, vector<16x16xf32> -> vector<16x16xf32>
    %c2_106 = arith.constant 2 : index
    %c0_107 = arith.constant 0 : index
    %c0_108 = arith.constant 0 : index
    %143 = vector.load %arg7[%c2_106, %c0_107, %c0_108] : memref<4x32x16xf32, #tpu.memory_space<vmem>>, vector<1x32x16xf32>
    %144 = vector.shape_cast %143 : vector<1x32x16xf32> to vector<32x16xf32>
    %cst_109 = arith.constant dense<0.000000e+00> : vector<16x16xf32>
    %145 = tpu.matmul %1, %144, %cst_109 {dimension_numbers = #tpu.dot_dimension_numbers<[1], [0], [0], [1], [0, 0, 1, 1], [], []>} : vector<16x32xf32>, vector<32x16xf32>, vector<16x16xf32> -> vector<16x16xf32>
    %146 = vector.shape_cast %130 : vector<16x16xf32> to vector<2x8x16xf32>
    %147 = vector.shape_cast %142 : vector<16x16xf32> to vector<2x8x16xf32>
    %148 = vector.shape_cast %145 : vector<16x16xf32> to vector<2x8x16xf32>
    "tpu.trace_start"() <{level = 10 : i32, message = "bid,bjd->bij"}> : () -> ()
    %cst_110 = arith.constant dense<0.000000e+00> : vector<2x8x8xf32>
    %149 = tpu.matmul %146, %147, %cst_110 {dimension_numbers = #tpu.dot_dimension_numbers<[2], [2], [1], [1], [0, 0, 0, 1, 1, 1], [0], [0]>} : vector<2x8x16xf32>, vector<2x8x16xf32>, vector<2x8x8xf32> -> vector<2x8x8xf32>
    "tpu.trace_stop"() : () -> ()
    %cst_111 = arith.constant 2.500000e-01 : f32
    %150 = vector.broadcast %cst_111 : f32 to vector<2x8x8xf32>
    %151 = arith.mulf %149, %150 : vector<2x8x8xf32>
    %cst_112 = arith.constant dense<0xFF800000> : vector<2x8xf32>
    %152 = vector.multi_reduction <maximumf>, %151, %cst_112 [2] : vector<2x8x8xf32> to vector<2x8xf32>
    %153 = vector.shape_cast %152 : vector<2x8xf32> to vector<2x8x1xf32>
    %154 = vector.broadcast %153 : vector<2x8x1xf32> to vector<2x8x8xf32>
    %155 = arith.subf %151, %154 : vector<2x8x8xf32>
    %156 = math.exp %155 : vector<2x8x8xf32>
    %cst_113 = arith.constant dense<0.000000e+00> : vector<2x8xf32>
    %157 = vector.multi_reduction <add>, %156, %cst_113 [2] : vector<2x8x8xf32> to vector<2x8xf32>
    %158 = vector.shape_cast %157 : vector<2x8xf32> to vector<2x8x1xf32>
    %159 = tpu.reciprocal %158 {approx = true} : vector<2x8x1xf32> -> vector<2x8x1xf32>
    %160 = vector.broadcast %159 : vector<2x8x1xf32> to vector<2x8x8xf32>
    %161 = arith.mulf %156, %160 : vector<2x8x8xf32>
    "tpu.trace_start"() <{level = 10 : i32, message = "bij,bjd->bid"}> : () -> ()
    %cst_114 = arith.constant dense<0.000000e+00> : vector<2x8x16xf32>
    %162 = tpu.matmul %161, %148, %cst_114 {dimension_numbers = #tpu.dot_dimension_numbers<[2], [1], [1], [2], [0, 0, 0, 1, 1, 2], [0], [0]>} : vector<2x8x8xf32>, vector<2x8x16xf32>, vector<2x8x16xf32> -> vector<2x8x16xf32>
    "tpu.trace_stop"() : () -> ()
    %163 = vector.shape_cast %139 : vector<16x16xf32> to vector<2x8x16xf32>
    %164 = vector.shape_cast %133 : vector<16x16xf32> to vector<2x8x16xf32>
    %165 = vector.shape_cast %136 : vector<16x16xf32> to vector<2x8x16xf32>
    "tpu.trace_start"() <{level = 10 : i32, message = "bid,bjd->bij"}> : () -> ()
    %cst_115 = arith.constant dense<0.000000e+00> : vector<2x8x8xf32>
    %166 = tpu.matmul %163, %164, %cst_115 {dimension_numbers = #tpu.dot_dimension_numbers<[2], [2], [1], [1], [0, 0, 0, 1, 1, 1], [0], [0]>} : vector<2x8x16xf32>, vector<2x8x16xf32>, vector<2x8x8xf32> -> vector<2x8x8xf32>
    "tpu.trace_stop"() : () -> ()
    %cst_116 = arith.constant 2.500000e-01 : f32
    %167 = vector.broadcast %cst_116 : f32 to vector<2x8x8xf32>
    %168 = arith.mulf %166, %167 : vector<2x8x8xf32>
    %cst_117 = arith.constant dense<0xFF800000> : vector<2x8xf32>
    %169 = vector.multi_reduction <maximumf>, %168, %cst_117 [2] : vector<2x8x8xf32> to vector<2x8xf32>
    %170 = vector.shape_cast %169 : vector<2x8xf32> to vector<2x8x1xf32>
    %171 = vector.broadcast %170 : vector<2x8x1xf32> to vector<2x8x8xf32>
    %172 = arith.subf %168, %171 : vector<2x8x8xf32>
    %173 = math.exp %172 : vector<2x8x8xf32>
    %cst_118 = arith.constant dense<0.000000e+00> : vector<2x8xf32>
    %174 = vector.multi_reduction <add>, %173, %cst_118 [2] : vector<2x8x8xf32> to vector<2x8xf32>
    %175 = vector.shape_cast %174 : vector<2x8xf32> to vector<2x8x1xf32>
    %176 = tpu.reciprocal %175 {approx = true} : vector<2x8x1xf32> -> vector<2x8x1xf32>
    %177 = vector.broadcast %176 : vector<2x8x1xf32> to vector<2x8x8xf32>
    %178 = arith.mulf %173, %177 : vector<2x8x8xf32>
    "tpu.trace_start"() <{level = 10 : i32, message = "bij,bjd->bid"}> : () -> ()
    %cst_119 = arith.constant dense<0.000000e+00> : vector<2x8x16xf32>
    %179 = tpu.matmul %178, %165, %cst_119 {dimension_numbers = #tpu.dot_dimension_numbers<[2], [1], [1], [2], [0, 0, 0, 1, 1, 2], [0], [0]>} : vector<2x8x8xf32>, vector<2x8x16xf32>, vector<2x8x16xf32> -> vector<2x8x16xf32>
    "tpu.trace_stop"() : () -> ()
    %180 = vector.shape_cast %162 : vector<2x8x16xf32> to vector<16x16xf32>
    %c2_120 = arith.constant 2 : index
    %c0_121 = arith.constant 0 : index
    %c0_122 = arith.constant 0 : index
    %181 = vector.load %arg8[%c2_120, %c0_121, %c0_122] : memref<4x16x32xf32, #tpu.memory_space<vmem>>, vector<1x16x32xf32>
    %182 = vector.shape_cast %181 : vector<1x16x32xf32> to vector<16x32xf32>
    %cst_123 = arith.constant dense<0.000000e+00> : vector<16x32xf32>
    %183 = tpu.matmul %180, %182, %cst_123 {dimension_numbers = #tpu.dot_dimension_numbers<[1], [0], [0], [1], [0, 0, 1, 1], [], []>} : vector<16x16xf32>, vector<16x32xf32>, vector<16x32xf32> -> vector<16x32xf32>
    %184 = arith.addf %122, %183 : vector<16x32xf32>
    %185 = vector.shape_cast %179 : vector<2x8x16xf32> to vector<16x16xf32>
    %c2_124 = arith.constant 2 : index
    %c0_125 = arith.constant 0 : index
    %c0_126 = arith.constant 0 : index
    %186 = vector.load %arg10[%c2_124, %c0_125, %c0_126] : memref<4x16x32xf32, #tpu.memory_space<vmem>>, vector<1x16x32xf32>
    %187 = vector.shape_cast %186 : vector<1x16x32xf32> to vector<16x32xf32>
    %cst_127 = arith.constant dense<0.000000e+00> : vector<16x32xf32>
    %188 = tpu.matmul %185, %187, %cst_127 {dimension_numbers = #tpu.dot_dimension_numbers<[1], [0], [0], [1], [0, 0, 1, 1], [], []>} : vector<16x16xf32>, vector<16x32xf32>, vector<16x32xf32> -> vector<16x32xf32>
    %189 = arith.addf %127, %188 : vector<16x32xf32>
    %c3 = arith.constant 3 : index
    %c0_128 = arith.constant 0 : index
    %c0_129 = arith.constant 0 : index
    %190 = vector.load %arg2[%c3, %c0_128, %c0_129] : memref<4x32x16xf32, #tpu.memory_space<vmem>>, vector<1x32x16xf32>
    %191 = vector.shape_cast %190 : vector<1x32x16xf32> to vector<32x16xf32>
    %cst_130 = arith.constant dense<0.000000e+00> : vector<16x16xf32>
    %192 = tpu.matmul %0, %191, %cst_130 {dimension_numbers = #tpu.dot_dimension_numbers<[1], [0], [0], [1], [0, 0, 1, 1], [], []>} : vector<16x32xf32>, vector<32x16xf32>, vector<16x16xf32> -> vector<16x16xf32>
    %c3_131 = arith.constant 3 : index
    %c0_132 = arith.constant 0 : index
    %c0_133 = arith.constant 0 : index
    %193 = vector.load %arg3[%c3_131, %c0_132, %c0_133] : memref<4x32x16xf32, #tpu.memory_space<vmem>>, vector<1x32x16xf32>
    %194 = vector.shape_cast %193 : vector<1x32x16xf32> to vector<32x16xf32>
    %cst_134 = arith.constant dense<0.000000e+00> : vector<16x16xf32>
    %195 = tpu.matmul %0, %194, %cst_134 {dimension_numbers = #tpu.dot_dimension_numbers<[1], [0], [0], [1], [0, 0, 1, 1], [], []>} : vector<16x32xf32>, vector<32x16xf32>, vector<16x16xf32> -> vector<16x16xf32>
    %c3_135 = arith.constant 3 : index
    %c0_136 = arith.constant 0 : index
    %c0_137 = arith.constant 0 : index
    %196 = vector.load %arg4[%c3_135, %c0_136, %c0_137] : memref<4x32x16xf32, #tpu.memory_space<vmem>>, vector<1x32x16xf32>
    %197 = vector.shape_cast %196 : vector<1x32x16xf32> to vector<32x16xf32>
    %cst_138 = arith.constant dense<0.000000e+00> : vector<16x16xf32>
    %198 = tpu.matmul %0, %197, %cst_138 {dimension_numbers = #tpu.dot_dimension_numbers<[1], [0], [0], [1], [0, 0, 1, 1], [], []>} : vector<16x32xf32>, vector<32x16xf32>, vector<16x16xf32> -> vector<16x16xf32>
    %c3_139 = arith.constant 3 : index
    %c0_140 = arith.constant 0 : index
    %c0_141 = arith.constant 0 : index
    %199 = vector.load %arg5[%c3_139, %c0_140, %c0_141] : memref<4x32x16xf32, #tpu.memory_space<vmem>>, vector<1x32x16xf32>
    %200 = vector.shape_cast %199 : vector<1x32x16xf32> to vector<32x16xf32>
    %cst_142 = arith.constant dense<0.000000e+00> : vector<16x16xf32>
    %201 = tpu.matmul %1, %200, %cst_142 {dimension_numbers = #tpu.dot_dimension_numbers<[1], [0], [0], [1], [0, 0, 1, 1], [], []>} : vector<16x32xf32>, vector<32x16xf32>, vector<16x16xf32> -> vector<16x16xf32>
    %c3_143 = arith.constant 3 : index
    %c0_144 = arith.constant 0 : index
    %c0_145 = arith.constant 0 : index
    %202 = vector.load %arg6[%c3_143, %c0_144, %c0_145] : memref<4x32x16xf32, #tpu.memory_space<vmem>>, vector<1x32x16xf32>
    %203 = vector.shape_cast %202 : vector<1x32x16xf32> to vector<32x16xf32>
    %cst_146 = arith.constant dense<0.000000e+00> : vector<16x16xf32>
    %204 = tpu.matmul %1, %203, %cst_146 {dimension_numbers = #tpu.dot_dimension_numbers<[1], [0], [0], [1], [0, 0, 1, 1], [], []>} : vector<16x32xf32>, vector<32x16xf32>, vector<16x16xf32> -> vector<16x16xf32>
    %c3_147 = arith.constant 3 : index
    %c0_148 = arith.constant 0 : index
    %c0_149 = arith.constant 0 : index
    %205 = vector.load %arg7[%c3_147, %c0_148, %c0_149] : memref<4x32x16xf32, #tpu.memory_space<vmem>>, vector<1x32x16xf32>
    %206 = vector.shape_cast %205 : vector<1x32x16xf32> to vector<32x16xf32>
    %cst_150 = arith.constant dense<0.000000e+00> : vector<16x16xf32>
    %207 = tpu.matmul %1, %206, %cst_150 {dimension_numbers = #tpu.dot_dimension_numbers<[1], [0], [0], [1], [0, 0, 1, 1], [], []>} : vector<16x32xf32>, vector<32x16xf32>, vector<16x16xf32> -> vector<16x16xf32>
    %208 = vector.shape_cast %192 : vector<16x16xf32> to vector<2x8x16xf32>
    %209 = vector.shape_cast %204 : vector<16x16xf32> to vector<2x8x16xf32>
    %210 = vector.shape_cast %207 : vector<16x16xf32> to vector<2x8x16xf32>
    "tpu.trace_start"() <{level = 10 : i32, message = "bid,bjd->bij"}> : () -> ()
    %cst_151 = arith.constant dense<0.000000e+00> : vector<2x8x8xf32>
    %211 = tpu.matmul %208, %209, %cst_151 {dimension_numbers = #tpu.dot_dimension_numbers<[2], [2], [1], [1], [0, 0, 0, 1, 1, 1], [0], [0]>} : vector<2x8x16xf32>, vector<2x8x16xf32>, vector<2x8x8xf32> -> vector<2x8x8xf32>
    "tpu.trace_stop"() : () -> ()
    %cst_152 = arith.constant 2.500000e-01 : f32
    %212 = vector.broadcast %cst_152 : f32 to vector<2x8x8xf32>
    %213 = arith.mulf %211, %212 : vector<2x8x8xf32>
    %cst_153 = arith.constant dense<0xFF800000> : vector<2x8xf32>
    %214 = vector.multi_reduction <maximumf>, %213, %cst_153 [2] : vector<2x8x8xf32> to vector<2x8xf32>
    %215 = vector.shape_cast %214 : vector<2x8xf32> to vector<2x8x1xf32>
    %216 = vector.broadcast %215 : vector<2x8x1xf32> to vector<2x8x8xf32>
    %217 = arith.subf %213, %216 : vector<2x8x8xf32>
    %218 = math.exp %217 : vector<2x8x8xf32>
    %cst_154 = arith.constant dense<0.000000e+00> : vector<2x8xf32>
    %219 = vector.multi_reduction <add>, %218, %cst_154 [2] : vector<2x8x8xf32> to vector<2x8xf32>
    %220 = vector.shape_cast %219 : vector<2x8xf32> to vector<2x8x1xf32>
    %221 = tpu.reciprocal %220 {approx = true} : vector<2x8x1xf32> -> vector<2x8x1xf32>
    %222 = vector.broadcast %221 : vector<2x8x1xf32> to vector<2x8x8xf32>
    %223 = arith.mulf %218, %222 : vector<2x8x8xf32>
    "tpu.trace_start"() <{level = 10 : i32, message = "bij,bjd->bid"}> : () -> ()
    %cst_155 = arith.constant dense<0.000000e+00> : vector<2x8x16xf32>
    %224 = tpu.matmul %223, %210, %cst_155 {dimension_numbers = #tpu.dot_dimension_numbers<[2], [1], [1], [2], [0, 0, 0, 1, 1, 2], [0], [0]>} : vector<2x8x8xf32>, vector<2x8x16xf32>, vector<2x8x16xf32> -> vector<2x8x16xf32>
    "tpu.trace_stop"() : () -> ()
    %225 = vector.shape_cast %201 : vector<16x16xf32> to vector<2x8x16xf32>
    %226 = vector.shape_cast %195 : vector<16x16xf32> to vector<2x8x16xf32>
    %227 = vector.shape_cast %198 : vector<16x16xf32> to vector<2x8x16xf32>
    "tpu.trace_start"() <{level = 10 : i32, message = "bid,bjd->bij"}> : () -> ()
    %cst_156 = arith.constant dense<0.000000e+00> : vector<2x8x8xf32>
    %228 = tpu.matmul %225, %226, %cst_156 {dimension_numbers = #tpu.dot_dimension_numbers<[2], [2], [1], [1], [0, 0, 0, 1, 1, 1], [0], [0]>} : vector<2x8x16xf32>, vector<2x8x16xf32>, vector<2x8x8xf32> -> vector<2x8x8xf32>
    "tpu.trace_stop"() : () -> ()
    %cst_157 = arith.constant 2.500000e-01 : f32
    %229 = vector.broadcast %cst_157 : f32 to vector<2x8x8xf32>
    %230 = arith.mulf %228, %229 : vector<2x8x8xf32>
    %cst_158 = arith.constant dense<0xFF800000> : vector<2x8xf32>
    %231 = vector.multi_reduction <maximumf>, %230, %cst_158 [2] : vector<2x8x8xf32> to vector<2x8xf32>
    %232 = vector.shape_cast %231 : vector<2x8xf32> to vector<2x8x1xf32>
    %233 = vector.broadcast %232 : vector<2x8x1xf32> to vector<2x8x8xf32>
    %234 = arith.subf %230, %233 : vector<2x8x8xf32>
    %235 = math.exp %234 : vector<2x8x8xf32>
    %cst_159 = arith.constant dense<0.000000e+00> : vector<2x8xf32>
    %236 = vector.multi_reduction <add>, %235, %cst_159 [2] : vector<2x8x8xf32> to vector<2x8xf32>
    %237 = vector.shape_cast %236 : vector<2x8xf32> to vector<2x8x1xf32>
    %238 = tpu.reciprocal %237 {approx = true} : vector<2x8x1xf32> -> vector<2x8x1xf32>
    %239 = vector.broadcast %238 : vector<2x8x1xf32> to vector<2x8x8xf32>
    %240 = arith.mulf %235, %239 : vector<2x8x8xf32>
    "tpu.trace_start"() <{level = 10 : i32, message = "bij,bjd->bid"}> : () -> ()
    %cst_160 = arith.constant dense<0.000000e+00> : vector<2x8x16xf32>
    %241 = tpu.matmul %240, %227, %cst_160 {dimension_numbers = #tpu.dot_dimension_numbers<[2], [1], [1], [2], [0, 0, 0, 1, 1, 2], [0], [0]>} : vector<2x8x8xf32>, vector<2x8x16xf32>, vector<2x8x16xf32> -> vector<2x8x16xf32>
    "tpu.trace_stop"() : () -> ()
    %242 = vector.shape_cast %224 : vector<2x8x16xf32> to vector<16x16xf32>
    %c3_161 = arith.constant 3 : index
    %c0_162 = arith.constant 0 : index
    %c0_163 = arith.constant 0 : index
    %243 = vector.load %arg8[%c3_161, %c0_162, %c0_163] : memref<4x16x32xf32, #tpu.memory_space<vmem>>, vector<1x16x32xf32>
    %244 = vector.shape_cast %243 : vector<1x16x32xf32> to vector<16x32xf32>
    %cst_164 = arith.constant dense<0.000000e+00> : vector<16x32xf32>
    %245 = tpu.matmul %242, %244, %cst_164 {dimension_numbers = #tpu.dot_dimension_numbers<[1], [0], [0], [1], [0, 0, 1, 1], [], []>} : vector<16x16xf32>, vector<16x32xf32>, vector<16x32xf32> -> vector<16x32xf32>
    %246 = arith.addf %184, %245 : vector<16x32xf32>
    %247 = vector.shape_cast %241 : vector<2x8x16xf32> to vector<16x16xf32>
    %c3_165 = arith.constant 3 : index
    %c0_166 = arith.constant 0 : index
    %c0_167 = arith.constant 0 : index
    %248 = vector.load %arg10[%c3_165, %c0_166, %c0_167] : memref<4x16x32xf32, #tpu.memory_space<vmem>>, vector<1x16x32xf32>
    %249 = vector.shape_cast %248 : vector<1x16x32xf32> to vector<16x32xf32>
    %cst_168 = arith.constant dense<0.000000e+00> : vector<16x32xf32>
    %250 = tpu.matmul %247, %249, %cst_168 {dimension_numbers = #tpu.dot_dimension_numbers<[1], [0], [0], [1], [0, 0, 1, 1], [], []>} : vector<16x16xf32>, vector<16x32xf32>, vector<16x32xf32> -> vector<16x32xf32>
    %251 = arith.addf %189, %250 : vector<16x32xf32>
    %c0_169 = arith.constant 0 : index
    %c0_170 = arith.constant 0 : index
    %252 = vector.load %arg9[%c0_169, %c0_170] : memref<1x32xf32, #tpu.memory_space<vmem>>, vector<1x32xf32>
    %253 = vector.broadcast %252 : vector<1x32xf32> to vector<16x32xf32>
    %254 = arith.addf %246, %253 : vector<16x32xf32>
    %c0_171 = arith.constant 0 : index
    %c0_172 = arith.constant 0 : index
    %255 = vector.load %arg12[%c0_171, %c0_172] : memref<16x32xf32, #tpu.memory_space<vmem>>, vector<16x32xf32>
    tpu.vector_store %arg12[%c0_171, %c0_172], %254 {strides = array<i32>} : memref<16x32xf32, #tpu.memory_space<vmem>>, vector<16x32xf32>,
    %c0_173 = arith.constant 0 : index
    %c0_174 = arith.constant 0 : index
    %256 = vector.load %arg11[%c0_173, %c0_174] : memref<1x32xf32, #tpu.memory_space<vmem>>, vector<1x32xf32>
    %257 = vector.broadcast %256 : vector<1x32xf32> to vector<16x32xf32>
    %258 = arith.addf %251, %257 : vector<16x32xf32>
    %c0_175 = arith.constant 0 : index
    %c0_176 = arith.constant 0 : index
    %259 = vector.load %arg13[%c0_175, %c0_176] : memref<16x32xf32, #tpu.memory_space<vmem>>, vector<16x32xf32>
    tpu.vector_store %arg13[%c0_175, %c0_176], %258 {strides = array<i32>} : memref<16x32xf32, #tpu.memory_space<vmem>>, vector<16x32xf32>,
    return
  }
}

</mosaic_0001>

<llo_original>
// kernel: cross_attention.1
$region0: #{cross_attention.1}
  #allocation0 [shape = 'u32[]', space=smem, size = 0x4, offset = 0x4, fixed_abs, tag = 'smem constant byte address 0x4 - core index']
  #allocation1 [shape = 'u32[144,128]{1,0:T(1,128)}', space=vmem, size = 0x12000, scoped, tag = 'internal scratch']
  %s0 = inlined_call_operand.vmem [shape: f32[16,32], index: 0, kind: input, shape index: {}]
  %s1 = inlined_call_operand.vmem [shape: f32[16,32], index: 1, kind: input, shape index: {}]
  %s2 = inlined_call_operand.vmem [shape: f32[4,32,16], index: 2, kind: input, shape index: {}]
  %s3 = inlined_call_operand.vmem [shape: f32[4,32,16], index: 3, kind: input, shape index: {}]
  %s4 = inlined_call_operand.vmem [shape: f32[4,32,16], index: 4, kind: input, shape index: {}]
  %s5 = inlined_call_operand.vmem [shape: f32[4,32,16], index: 5, kind: input, shape index: {}]
  %s6 = inlined_call_operand.vmem [shape: f32[4,32,16], index: 6, kind: input, shape index: {}]
  %s7 = inlined_call_operand.vmem [shape: f32[4,32,16], index: 7, kind: input, shape index: {}]
  %s8 = inlined_call_operand.vmem [shape: f32[4,16,32], index: 8, kind: input, shape index: {}]
  %s9 = inlined_call_operand.vmem [shape: f32[1,32], index: 9, kind: input, shape index: {}]
  %s10 = inlined_call_operand.vmem [shape: f32[4,16,32], index: 10, kind: input, shape index: {}]
  %s11 = inlined_call_operand.vmem [shape: f32[1,32], index: 11, kind: input, shape index: {}]
  %s12 = inlined_call_operand.hbm [shape: f32[16,32], index: 12, kind: output, shape index: {0}]
  %s13 = inlined_call_operand.hbm [shape: f32[16,32], index: 13, kind: output, shape index: {1}]
  %14 = xla_tuple %s12, %s13
  %s15 = sld [smem:[#allocation0]]
  $region66: #{cross_attention.1} parent=0
    _
  %s17 = ssub.s32 1, %s15
  %s18 = scalar_select 0, %s17, %s15
  $region1: #{cross_attention.1} parent=0
    #allocation2 [shape = 'u8[8192]{0}', space=vmem, size = 0x2000, scoped, tag = 'output window, operand 0, single buffered']
    #allocation3 [shape = 's32[1]{0}', space=sflag, size = 0x4, scoped, tag = 'scoped memory for cross_attention.1']
    #allocation4 [shape = 'u8[8192]{0}', space=vmem, size = 0x2000, scoped, tag = 'output window, operand 1, single buffered']
    #allocation5 [shape = 's32[1]{0}', space=sflag, size = 0x4, scoped, tag = 'scoped memory for cross_attention.1']
    %19 = vsyncpa [#allocation3], 0
    %20 = vsyncpa [#allocation5], 0
    // Predicated region
    $region2: #{cross_attention.1} parent=1 // pred_check
      _
    $region3: #{cross_attention.1} parent=1 // pred_check_branch
      %22 = sbr.rel (0) target = $region5
    $region4: #{cross_attention.1} parent=1 // pred_region
      _
    $region5: #{cross_attention.1} parent=1 // pred_fallthru
      _
    // Predicated region
    $region6: #{cross_attention.1} parent=1 // pred_check
      _
    $region7: #{cross_attention.1} parent=1 // pred_check_branch
      %24 = sbr.rel (0) target = $region9
    $region8: #{cross_attention.1} parent=1 // pred_region
      _
    $region9: #{cross_attention.1} parent=1 // pred_fallthru
      _
    // Predicated region
    $region10: #{cross_attention.1} parent=1 // pred_check
      _
    $region11: #{cross_attention.1} parent=1 // pred_check_branch
      %26 = sbr.rel (0) target = $region13
    $region12: #{cross_attention.1} parent=1 // pred_region
      _
    $region13: #{cross_attention.1} parent=1 // pred_fallthru
      _
    // Predicated region
    $region14: #{cross_attention.1} parent=1 // pred_check
      _
    $region15: #{cross_attention.1} parent=1 // pred_check_branch
      %28 = sbr.rel (0) target = $region17
    $region16: #{cross_attention.1} parent=1 // pred_region
      _
    $region17: #{cross_attention.1} parent=1 // pred_fallthru
      _
    // Predicated region
    $region18: #{cross_attention.1} parent=1 // pred_check
      _
    $region19: #{cross_attention.1} parent=1 // pred_check_branch
      %30 = sbr.rel (0) target = $region21
    $region20: #{cross_attention.1} parent=1 // pred_region
      _
    $region21: #{cross_attention.1} parent=1 // pred_fallthru
      _
    // Predicated region
    $region22: #{cross_attention.1} parent=1 // pred_check
      _
    $region23: #{cross_attention.1} parent=1 // pred_check_branch
      %32 = sbr.rel (0) target = $region25
    $region24: #{cross_attention.1} parent=1 // pred_region
      _
    $region25: #{cross_attention.1} parent=1 // pred_fallthru
      _
    // Predicated region
    $region26: #{cross_attention.1} parent=1 // pred_check
      _
    $region27: #{cross_attention.1} parent=1 // pred_check_branch
      %34 = sbr.rel (0) target = $region29
    $region28: #{cross_attention.1} parent=1 // pred_region
      _
    $region29: #{cross_attention.1} parent=1 // pred_fallthru
      _
    // Predicated region
    $region30: #{cross_attention.1} parent=1 // pred_check
      _
    $region31: #{cross_attention.1} parent=1 // pred_check_branch
      %36 = sbr.rel (0) target = $region33
    $region32: #{cross_attention.1} parent=1 // pred_region
      _
    $region33: #{cross_attention.1} parent=1 // pred_fallthru
      _
    // Predicated region
    $region34: #{cross_attention.1} parent=1 // pred_check
      _
    $region35: #{cross_attention.1} parent=1 // pred_check_branch
      %38 = sbr.rel (0) target = $region37
    $region36: #{cross_attention.1} parent=1 // pred_region
      _
    $region37: #{cross_attention.1} parent=1 // pred_fallthru
      _
    // Predicated region
    $region38: #{cross_attention.1} parent=1 // pred_check
      _
    $region39: #{cross_attention.1} parent=1 // pred_check_branch
      %40 = sbr.rel (0) target = $region41
    $region40: #{cross_attention.1} parent=1 // pred_region
      _
    $region41: #{cross_attention.1} parent=1 // pred_fallthru
      _
    // Predicated region
    $region42: #{cross_attention.1} parent=1 // pred_check
      _
    $region43: #{cross_attention.1} parent=1 // pred_check_branch
      %42 = sbr.rel (0) target = $region45
    $region44: #{cross_attention.1} parent=1 // pred_region
      _
    $region45: #{cross_attention.1} parent=1 // pred_fallthru
      _
    // Predicated region
    $region46: #{cross_attention.1} parent=1 // pred_check
      _
    $region47: #{cross_attention.1} parent=1 // pred_check_branch
      %44 = sbr.rel (0) target = $region49
    $region48: #{cross_attention.1} parent=1 // pred_region
      _
    $region49: #{cross_attention.1} parent=1 // pred_fallthru
      _
    %v45 = vld [vmem:[%s0] sm:$0xff]
    %v46 = vld [vmem:[%s0 + $0x8] sm:$0xff]
    %v47 = vld [vmem:[%s1] sm:$0xff]
    %v48 = vld [vmem:[%s1 + $0x8] sm:$0xff]
    %v49 = vld [vmem:[%s2] sm:$0xff]
    %v50 = vld [vmem:[%s2 + $0x8] sm:$0xff]
    %v51 = vld [vmem:[%s2 + $0x10] sm:$0xff]
    %v52 = vld [vmem:[%s2 + $0x18] sm:$0xff]
    %vm53 = vcmask 261120
    %v55 = vsel %vm53, %v45, 0
    %v58 = vsel %vm53, %v46, 0
    %60 = vmatprep.subr.mxu0 0.0
    %61 = vmatpush1.msra.mxu0 0.0
    %62 = vmatprep.subr.mxu0 0.0
    %63 = vmatpush1.msra.mxu0 0.0
    %64 = vmatprep.subr.mxu0 0.0
    %65 = vmatpush1.msra.mxu0 0.0
    %66 = vmatprep.subr.mxu0 0.0
    %67 = vmatpush1.msra.mxu0 0.0
    %68 = vmatprep.subr.mxu0 0.0
    %69 = vmatpush1.msra.mxu0 0.0
    %70 = vmatprep.subr.mxu0 0.0
    %71 = vmatpush1.msra.mxu0 0.0
    %72 = vmatprep.subr.mxu0 0.0
    %73 = vmatpush1.msra.mxu0 0.0
    %74 = vmatprep.subr.mxu0 0.0
    %75 = vmatpush1.msra.mxu0 0.0
    %76 = vmatprep.subr.mxu0 0.0
    %77 = vmatpush1.msra.mxu0 0.0
    %78 = vmatprep.subr.mxu0 0.0
    %79 = vmatpush1.msra.mxu0 0.0
    %80 = vmatprep.subr.mxu0 0.0
    %81 = vmatpush1.msra.mxu0 0.0
    %82 = vmatprep.subr.mxu0 0.0
    %83 = vmatpush1.msra.mxu0 0.0
    %84 = vmatprep.subr.mxu0 0.0
    %85 = vmatpush1.msra.mxu0 %v52
    %86 = vmatprep.subr.mxu0 0.0
    %87 = vmatpush1.msra.mxu0 %v51
    %88 = vmatprep.subr.mxu0 0.0
    %89 = vmatpush1.msra.mxu0 %v50
    %90 = vmatprep.subr.mxu0 0.0
    %91 = vmatpush1.msra.mxu0 %v49
    %92 = vmatprep.subr.mxu0 0.0
    %93 = vmatpush2.msra.mxu0 0.0
    %94 = vmatprep.subr.mxu0 0.0
    %95 = vmatpush2.msra.mxu0 0.0
    %96 = vmatprep.subr.mxu0 0.0
    %97 = vmatpush2.msra.mxu0 0.0
    %98 = vmatprep.subr.mxu0 0.0
    %99 = vmatpush2.msra.mxu0 0.0
    %100 = vmatprep.subr.mxu0 0.0
    %101 = vmatpush2.msra.mxu0 0.0
    %102 = vmatprep.subr.mxu0 0.0
    %103 = vmatpush2.msra.mxu0 0.0
    %104 = vmatprep.subr.mxu0 0.0
    %105 = vmatpush2.msra.mxu0 0.0
    %106 = vmatprep.subr.mxu0 0.0
    %107 = vmatpush2.msra.mxu0 0.0
    %108 = vmatprep.subr.mxu0 0.0
    %109 = vmatpush2.msra.mxu0 0.0
    %110 = vmatprep.subr.mxu0 0.0
    %111 = vmatpush2.msra.mxu0 0.0
    %112 = vmatprep.subr.mxu0 0.0
    %113 = vmatpush2.msra.mxu0 0.0
    %114 = vmatprep.subr.mxu0 0.0
    %115 = vmatpush2.msra.mxu0 0.0
    %116 = vmatprep.subr.mxu0 0.0
    %117 = vmatpush2.msra.mxu0 0.0
    %118 = vmatprep.subr.mxu0 0.0
    %119 = vmatpush2.msra.mxu0 0.0
    %120 = vmatprep.subr.mxu0 0.0
    %121 = vmatpush2.msra.mxu0 0.0
    %122 = vmatprep.subr.mxu0 0.0
    %123 = vmatpush2.msra.mxu0 0.0
    %124 = vmatprep.mubr.f32.mxu0 0.0
    %125 = vmatmul.mubr.f32.gmra.mxu0 %v55
    %v126 = vpop.f32.mrf.mxu0
    %v127 = vadd.f32 0.0, %v126
    %v128 = vpop.f32.mrf.mxu0
    %129 = vmatprep.mubr.f32.mxu0 0.0
    %130 = vmatmul.mubr.f32.gmra.mxu0 %v58
    %v131 = vpop.f32.mrf.mxu0
    %v132 = vadd.f32 0.0, %v131
    %v133 = vpop.f32.mrf.mxu0
    %134 = vdwg.mxu0
    %v135 = vld [vmem:[%s3] sm:$0xff]
    %v136 = vld [vmem:[%s3 + $0x8] sm:$0xff]
    %v137 = vld [vmem:[%s3 + $0x10] sm:$0xff]
    %v138 = vld [vmem:[%s3 + $0x18] sm:$0xff]
    %139 = vmatprep.subr.mxu0 0.0
    %140 = vmatpush1.msra.mxu0 0.0
    %141 = vmatprep.subr.mxu0 0.0
    %142 = vmatpush1.msra.mxu0 0.0
    %143 = vmatprep.subr.mxu0 0.0
    %144 = vmatpush1.msra.mxu0 0.0
    %145 = vmatprep.subr.mxu0 0.0
    %146 = vmatpush1.msra.mxu0 0.0
    %147 = vmatprep.subr.mxu0 0.0
    %148 = vmatpush1.msra.mxu0 0.0
    %149 = vmatprep.subr.mxu0 0.0
    %150 = vmatpush1.msra.mxu0 0.0
    %151 = vmatprep.subr.mxu0 0.0
    %152 = vmatpush1.msra.mxu0 0.0
    %153 = vmatprep.subr.mxu0 0.0
    %154 = vmatpush1.msra.mxu0 0.0
    %155 = vmatprep.subr.mxu0 0.0
    %156 = vmatpush1.msra.mxu0 0.0
    %157 = vmatprep.subr.mxu0 0.0
    %158 = vmatpush1.msra.mxu0 0.0
    %159 = vmatprep.subr.mxu0 0.0
    %160 = vmatpush1.msra.mxu0 0.0
    %161 = vmatprep.subr.mxu0 0.0
    %162 = vmatpush1.msra.mxu0 0.0
    %163 = vmatprep.subr.mxu0 0.0
    %164 = vmatpush1.msra.mxu0 %v138
    %165 = vmatprep.subr.mxu0 0.0
    %166 = vmatpush1.msra.mxu0 %v137
    %167 = vmatprep.subr.mxu0 0.0
    %168 = vmatpush1.msra.mxu0 %v136
    %169 = vmatprep.subr.mxu0 0.0
    %170 = vmatpush1.msra.mxu0 %v135
    %171 = vmatprep.subr.mxu0 0.0
    %172 = vmatpush2.msra.mxu0 0.0
    %173 = vmatprep.subr.mxu0 0.0
    %174 = vmatpush2.msra.mxu0 0.0
    %175 = vmatprep.subr.mxu0 0.0
    %176 = vmatpush2.msra.mxu0 0.0
    %177 = vmatprep.subr.mxu0 0.0
    %178 = vmatpush2.msra.mxu0 0.0
    %179 = vmatprep.subr.mxu0 0.0
    %180 = vmatpush2.msra.mxu0 0.0
    %181 = vmatprep.subr.mxu0 0.0
    %182 = vmatpush2.msra.mxu0 0.0
    %183 = vmatprep.subr.mxu0 0.0
    %184 = vmatpush2.msra.mxu0 0.0
    %185 = vmatprep.subr.mxu0 0.0
    %186 = vmatpush2.msra.mxu0 0.0
    %187 = vmatprep.subr.mxu0 0.0
    %188 = vmatpush2.msra.mxu0 0.0
    %189 = vmatprep.subr.mxu0 0.0
    %190 = vmatpush2.msra.mxu0 0.0
    %191 = vmatprep.subr.mxu0 0.0
    %192 = vmatpush2.msra.mxu0 0.0
    %193 = vmatprep.subr.mxu0 0.0
    %194 = vmatpush2.msra.mxu0 0.0
    %195 = vmatprep.subr.mxu0 0.0
    %196 = vmatpush2.msra.mxu0 0.0
    %197 = vmatprep.subr.mxu0 0.0
    %198 = vmatpush2.msra.mxu0 0.0
    %199 = vmatprep.subr.mxu0 0.0
    %200 = vmatpush2.msra.mxu0 0.0
    %201 = vmatprep.subr.mxu0 0.0
    %202 = vmatpush2.msra.mxu0 0.0
    %203 = vmatprep.mubr.f32.mxu0 0.0
    %204 = vmatmul.mubr.f32.gmra.mxu0 %v55
    %v205 = vpop.f32.mrf.mxu0
    %v206 = vadd.f32 0.0, %v205
    %v207 = vpop.f32.mrf.mxu0
    %208 = vmatprep.mubr.f32.mxu0 0.0
    %209 = vmatmul.mubr.f32.gmra.mxu0 %v58
    %v210 = vpop.f32.mrf.mxu0
    %v211 = vadd.f32 0.0, %v210
    %v212 = vpop.f32.mrf.mxu0
    %213 = vdwg.mxu0
    %v214 = vld [vmem:[%s4] sm:$0xff]
    %v215 = vld [vmem:[%s4 + $0x8] sm:$0xff]
    %v216 = vld [vmem:[%s4 + $0x10] sm:$0xff]
    %v217 = vld [vmem:[%s4 + $0x18] sm:$0xff]
    %218 = vmatprep.subr.mxu0 0.0
    %219 = vmatpush1.msra.mxu0 0.0
    %220 = vmatprep.subr.mxu0 0.0
    %221 = vmatpush1.msra.mxu0 0.0
    %222 = vmatprep.subr.mxu0 0.0
    %223 = vmatpush1.msra.mxu0 0.0
    %224 = vmatprep.subr.mxu0 0.0
    %225 = vmatpush1.msra.mxu0 0.0
    %226 = vmatprep.subr.mxu0 0.0
    %227 = vmatpush1.msra.mxu0 0.0
    %228 = vmatprep.subr.mxu0 0.0
    %229 = vmatpush1.msra.mxu0 0.0
    %230 = vmatprep.subr.mxu0 0.0
    %231 = vmatpush1.msra.mxu0 0.0
    %232 = vmatprep.subr.mxu0 0.0
    %233 = vmatpush1.msra.mxu0 0.0
    %234 = vmatprep.subr.mxu0 0.0
    %235 = vmatpush1.msra.mxu0 0.0
    %236 = vmatprep.subr.mxu0 0.0
    %237 = vmatpush1.msra.mxu0 0.0
    %238 = vmatprep.subr.mxu0 0.0
    %239 = vmatpush1.msra.mxu0 0.0
    %240 = vmatprep.subr.mxu0 0.0
    %241 = vmatpush1.msra.mxu0 0.0
    %242 = vmatprep.subr.mxu0 0.0
    %243 = vmatpush1.msra.mxu0 %v217
    %244 = vmatprep.subr.mxu0 0.0
    %245 = vmatpush1.msra.mxu0 %v216
    %246 = vmatprep.subr.mxu0 0.0
    %247 = vmatpush1.msra.mxu0 %v215
    %248 = vmatprep.subr.mxu0 0.0
    %249 = vmatpush1.msra.mxu0 %v214
    %250 = vmatprep.subr.mxu0 0.0
    %251 = vmatpush2.msra.mxu0 0.0
    %252 = vmatprep.subr.mxu0 0.0
    %253 = vmatpush2.msra.mxu0 0.0
    %254 = vmatprep.subr.mxu0 0.0
    %255 = vmatpush2.msra.mxu0 0.0
    %256 = vmatprep.subr.mxu0 0.0
    %257 = vmatpush2.msra.mxu0 0.0
    %258 = vmatprep.subr.mxu0 0.0
    %259 = vmatpush2.msra.mxu0 0.0
    %260 = vmatprep.subr.mxu0 0.0
    %261 = vmatpush2.msra.mxu0 0.0
    %262 = vmatprep.subr.mxu0 0.0
    %263 = vmatpush2.msra.mxu0 0.0
    %264 = vmatprep.subr.mxu0 0.0
    %265 = vmatpush2.msra.mxu0 0.0
    %266 = vmatprep.subr.mxu0 0.0
    %267 = vmatpush2.msra.mxu0 0.0
    %268 = vmatprep.subr.mxu0 0.0
    %269 = vmatpush2.msra.mxu0 0.0
    %270 = vmatprep.subr.mxu0 0.0
    %271 = vmatpush2.msra.mxu0 0.0
    %272 = vmatprep.subr.mxu0 0.0
    %273 = vmatpush2.msra.mxu0 0.0
    %274 = vmatprep.subr.mxu0 0.0
    %275 = vmatpush2.msra.mxu0 0.0
    %276 = vmatprep.subr.mxu0 0.0
    %277 = vmatpush2.msra.mxu0 0.0
    %278 = vmatprep.subr.mxu0 0.0
    %279 = vmatpush2.msra.mxu0 0.0
    %280 = vmatprep.subr.mxu0 0.0
    %281 = vmatpush2.msra.mxu0 0.0
    %282 = vmatprep.mubr.f32.mxu0 0.0
    %283 = vmatmul.mubr.f32.gmra.mxu0 %v55
    %v284 = vpop.f32.mrf.mxu0
    %v285 = vadd.f32 0.0, %v284
    %v286 = vpop.f32.mrf.mxu0
    %287 = vmatprep.mubr.f32.mxu0 0.0
    %288 = vmatmul.mubr.f32.gmra.mxu0 %v58
    %v289 = vpop.f32.mrf.mxu0
    %v290 = vadd.f32 0.0, %v289
    %v291 = vpop.f32.mrf.mxu0
    %292 = vdwg.mxu0
    %v293 = vld [vmem:[%s5] sm:$0xff]
    %v294 = vld [vmem:[%s5 + $0x8] sm:$0xff]
    %v295 = vld [vmem:[%s5 + $0x10] sm:$0xff]
    %v296 = vld [vmem:[%s5 + $0x18] sm:$0xff]
    %v298 = vsel %vm53, %v47, 0
    %v301 = vsel %vm53, %v48, 0
    %303 = vmatprep.subr.mxu0 0.0
    %304 = vmatpush1.msra.mxu0 0.0
    %305 = vmatprep.subr.mxu0 0.0
    %306 = vmatpush1.msra.mxu0 0.0
    %307 = vmatprep.subr.mxu0 0.0
    %308 = vmatpush1.msra.mxu0 0.0
    %309 = vmatprep.subr.mxu0 0.0
    %310 = vmatpush1.msra.mxu0 0.0
    %311 = vmatprep.subr.mxu0 0.0
    %312 = vmatpush1.msra.mxu0 0.0
    %313 = vmatprep.subr.mxu0 0.0
    %314 = vmatpush1.msra.mxu0 0.0
    %315 = vmatprep.subr.mxu0 0.0
    %316 = vmatpush1.msra.mxu0 0.0
    %317 = vmatprep.subr.mxu0 0.0
    %318 = vmatpush1.msra.mxu0 0.0
    %319 = vmatprep.subr.mxu0 0.0
    %320 = vmatpush1.msra.mxu0 0.0
    %321 = vmatprep.subr.mxu0 0.0
    %322 = vmatpush1.msra.mxu0 0.0
    %323 = vmatprep.subr.mxu0 0.0
    %324 = vmatpush1.msra.mxu0 0.0
    %325 = vmatprep.subr.mxu0 0.0
    %326 = vmatpush1.msra.mxu0 0.0
    %327 = vmatprep.subr.mxu0 0.0
    %328 = vmatpush1.msra.mxu0 %v296
    %329 = vmatprep.subr.mxu0 0.0
    %330 = vmatpush1.msra.mxu0 %v295
    %331 = vmatprep.subr.mxu0 0.0
    %332 = vmatpush1.msra.mxu0 %v294
    %333 = vmatprep.subr.mxu0 0.0
    %334 = vmatpush1.msra.mxu0 %v293
    %335 = vmatprep.subr.mxu0 0.0
    %336 = vmatpush2.msra.mxu0 0.0
    %337 = vmatprep.subr.mxu0 0.0
    %338 = vmatpush2.msra.mxu0 0.0
    %339 = vmatprep.subr.mxu0 0.0
    %340 = vmatpush2.msra.mxu0 0.0
    %341 = vmatprep.subr.mxu0 0.0
    %342 = vmatpush2.msra.mxu0 0.0
    %343 = vmatprep.subr.mxu0 0.0
    %344 = vmatpush2.msra.mxu0 0.0
    %345 = vmatprep.subr.mxu0 0.0
    %346 = vmatpush2.msra.mxu0 0.0
    %347 = vmatprep.subr.mxu0 0.0
    %348 = vmatpush2.msra.mxu0 0.0
    %349 = vmatprep.subr.mxu0 0.0
    %350 = vmatpush2.msra.mxu0 0.0
    %351 = vmatprep.subr.mxu0 0.0
    %352 = vmatpush2.msra.mxu0 0.0
    %353 = vmatprep.subr.mxu0 0.0
    %354 = vmatpush2.msra.mxu0 0.0
    %355 = vmatprep.subr.mxu0 0.0
    %356 = vmatpush2.msra.mxu0 0.0
    %357 = vmatprep.subr.mxu0 0.0
    %358 = vmatpush2.msra.mxu0 0.0
    %359 = vmatprep.subr.mxu0 0.0
    %360 = vmatpush2.msra.mxu0 0.0
    %361 = vmatprep.subr.mxu0 0.0
    %362 = vmatpush2.msra.mxu0 0.0
    %363 = vmatprep.subr.mxu0 0.0
    %364 = vmatpush2.msra.mxu0 0.0
    %365 = vmatprep.subr.mxu0 0.0
    %366 = vmatpush2.msra.mxu0 0.0
    %367 = vmatprep.mubr.f32.mxu0 0.0
    %368 = vmatmul.mubr.f32.gmra.mxu0 %v298
    %v369 = vpop.f32.mrf.mxu0
    %v370 = vadd.f32 0.0, %v369
    %v371 = vpop.f32.mrf.mxu0
    %372 = vmatprep.mubr.f32.mxu0 0.0
    %373 = vmatmul.mubr.f32.gmra.mxu0 %v301
    %v374 = vpop.f32.mrf.mxu0
    %v375 = vadd.f32 0.0, %v374
    %v376 = vpop.f32.mrf.mxu0
    %377 = vdwg.mxu0
    %v378 = vld [vmem:[%s6] sm:$0xff]
    %v379 = vld [vmem:[%s6 + $0x8] sm:$0xff]
    %v380 = vld [vmem:[%s6 + $0x10] sm:$0xff]
    %v381 = vld [vmem:[%s6 + $0x18] sm:$0xff]
    %382 = vmatprep.subr.mxu0 0.0
    %383 = vmatpush1.msra.mxu0 0.0
    %384 = vmatprep.subr.mxu0 0.0
    %385 = vmatpush1.msra.mxu0 0.0
    %386 = vmatprep.subr.mxu0 0.0
    %387 = vmatpush1.msra.mxu0 0.0
    %388 = vmatprep.subr.mxu0 0.0
    %389 = vmatpush1.msra.mxu0 0.0
    %390 = vmatprep.subr.mxu0 0.0
    %391 = vmatpush1.msra.mxu0 0.0
    %392 = vmatprep.subr.mxu0 0.0
    %393 = vmatpush1.msra.mxu0 0.0
    %394 = vmatprep.subr.mxu0 0.0
    %395 = vmatpush1.msra.mxu0 0.0
    %396 = vmatprep.subr.mxu0 0.0
    %397 = vmatpush1.msra.mxu0 0.0
    %398 = vmatprep.subr.mxu0 0.0
    %399 = vmatpush1.msra.mxu0 0.0
    %400 = vmatprep.subr.mxu0 0.0
    %401 = vmatpush1.msra.mxu0 0.0
    %402 = vmatprep.subr.mxu0 0.0
    %403 = vmatpush1.msra.mxu0 0.0
    %404 = vmatprep.subr.mxu0 0.0
    %405 = vmatpush1.msra.mxu0 0.0
    %406 = vmatprep.subr.mxu0 0.0
    %407 = vmatpush1.msra.mxu0 %v381
    %408 = vmatprep.subr.mxu0 0.0
    %409 = vmatpush1.msra.mxu0 %v380
    %410 = vmatprep.subr.mxu0 0.0
    %411 = vmatpush1.msra.mxu0 %v379
    %412 = vmatprep.subr.mxu0 0.0
    %413 = vmatpush1.msra.mxu0 %v378
    %414 = vmatprep.subr.mxu0 0.0
    %415 = vmatpush2.msra.mxu0 0.0
    %416 = vmatprep.subr.mxu0 0.0
    %417 = vmatpush2.msra.mxu0 0.0
    %418 = vmatprep.subr.mxu0 0.0
    %419 = vmatpush2.msra.mxu0 0.0
    %420 = vmatprep.subr.mxu0 0.0
    %421 = vmatpush2.msra.mxu0 0.0
    %422 = vmatprep.subr.mxu0 0.0
    %423 = vmatpush2.msra.mxu0 0.0
    %424 = vmatprep.subr.mxu0 0.0
    %425 = vmatpush2.msra.mxu0 0.0
    %426 = vmatprep.subr.mxu0 0.0
    %427 = vmatpush2.msra.mxu0 0.0
    %428 = vmatprep.subr.mxu0 0.0
    %429 = vmatpush2.msra.mxu0 0.0
    %430 = vmatprep.subr.mxu0 0.0
    %431 = vmatpush2.msra.mxu0 0.0
    %432 = vmatprep.subr.mxu0 0.0
    %433 = vmatpush2.msra.mxu0 0.0
    %434 = vmatprep.subr.mxu0 0.0
    %435 = vmatpush2.msra.mxu0 0.0
    %436 = vmatprep.subr.mxu0 0.0
    %437 = vmatpush2.msra.mxu0 0.0
    %438 = vmatprep.subr.mxu0 0.0
    %439 = vmatpush2.msra.mxu0 0.0
    %440 = vmatprep.subr.mxu0 0.0
    %441 = vmatpush2.msra.mxu0 0.0
    %442 = vmatprep.subr.mxu0 0.0
    %443 = vmatpush2.msra.mxu0 0.0
    %444 = vmatprep.subr.mxu0 0.0
    %445 = vmatpush2.msra.mxu0 0.0
    %446 = vmatprep.mubr.f32.mxu0 0.0
    %447 = vmatmul.mubr.f32.gmra.mxu0 %v298
    %v448 = vpop.f32.mrf.mxu0
    %v449 = vadd.f32 0.0, %v448
    %v450 = vpop.f32.mrf.mxu0
    %451 = vmatprep.mubr.f32.mxu0 0.0
    %452 = vmatmul.mubr.f32.gmra.mxu0 %v301
    %v453 = vpop.f32.mrf.mxu0
    %v454 = vadd.f32 0.0, %v453
    %v455 = vpop.f32.mrf.mxu0
    %456 = vdwg.mxu0
    %v457 = vld [vmem:[%s7] sm:$0xff]
    %v458 = vld [vmem:[%s7 + $0x8] sm:$0xff]
    %v459 = vld [vmem:[%s7 + $0x10] sm:$0xff]
    %v460 = vld [vmem:[%s7 + $0x18] sm:$0xff]
    %461 = vmatprep.subr.mxu0 0.0
    %462 = vmatpush1.msra.mxu0 0.0
    %463 = vmatprep.subr.mxu0 0.0
    %464 = vmatpush1.msra.mxu0 0.0
    %465 = vmatprep.subr.mxu0 0.0
    %466 = vmatpush1.msra.mxu0 0.0
    %467 = vmatprep.subr.mxu0 0.0
    %468 = vmatpush1.msra.mxu0 0.0
    %469 = vmatprep.subr.mxu0 0.0
    %470 = vmatpush1.msra.mxu0 0.0
    %471 = vmatprep.subr.mxu0 0.0
    %472 = vmatpush1.msra.mxu0 0.0
    %473 = vmatprep.subr.mxu0 0.0
    %474 = vmatpush1.msra.mxu0 0.0
    %475 = vmatprep.subr.mxu0 0.0
    %476 = vmatpush1.msra.mxu0 0.0
    %477 = vmatprep.subr.mxu0 0.0
    %478 = vmatpush1.msra.mxu0 0.0
    %479 = vmatprep.subr.mxu0 0.0
    %480 = vmatpush1.msra.mxu0 0.0
    %481 = vmatprep.subr.mxu0 0.0
    %482 = vmatpush1.msra.mxu0 0.0
    %483 = vmatprep.subr.mxu0 0.0
    %484 = vmatpush1.msra.mxu0 0.0
    %485 = vmatprep.subr.mxu0 0.0
    %486 = vmatpush1.msra.mxu0 %v460
    %487 = vmatprep.subr.mxu0 0.0
    %488 = vmatpush1.msra.mxu0 %v459
    %489 = vmatprep.subr.mxu0 0.0
    %490 = vmatpush1.msra.mxu0 %v458
    %491 = vmatprep.subr.mxu0 0.0
    %492 = vmatpush1.msra.mxu0 %v457
    %493 = vmatprep.subr.mxu0 0.0
    %494 = vmatpush2.msra.mxu0 0.0
    %495 = vmatprep.subr.mxu0 0.0
    %496 = vmatpush2.msra.mxu0 0.0
    %497 = vmatprep.subr.mxu0 0.0
    %498 = vmatpush2.msra.mxu0 0.0
    %499 = vmatprep.subr.mxu0 0.0
    %500 = vmatpush2.msra.mxu0 0.0
    %501 = vmatprep.subr.mxu0 0.0
    %502 = vmatpush2.msra.mxu0 0.0
    %503 = vmatprep.subr.mxu0 0.0
    %504 = vmatpush2.msra.mxu0 0.0
    %505 = vmatprep.subr.mxu0 0.0
    %506 = vmatpush2.msra.mxu0 0.0
    %507 = vmatprep.subr.mxu0 0.0
    %508 = vmatpush2.msra.mxu0 0.0
    %509 = vmatprep.subr.mxu0 0.0
    %510 = vmatpush2.msra.mxu0 0.0
    %511 = vmatprep.subr.mxu0 0.0
    %512 = vmatpush2.msra.mxu0 0.0
    %513 = vmatprep.subr.mxu0 0.0
    %514 = vmatpush2.msra.mxu0 0.0
    %515 = vmatprep.subr.mxu0 0.0
    %516 = vmatpush2.msra.mxu0 0.0
    %517 = vmatprep.subr.mxu0 0.0
    %518 = vmatpush2.msra.mxu0 0.0
    %519 = vmatprep.subr.mxu0 0.0
    %520 = vmatpush2.msra.mxu0 0.0
    %521 = vmatprep.subr.mxu0 0.0
    %522 = vmatpush2.msra.mxu0 0.0
    %523 = vmatprep.subr.mxu0 0.0
    %524 = vmatpush2.msra.mxu0 0.0
    %525 = vmatprep.mubr.f32.mxu0 0.0
    %526 = vmatmul.mubr.f32.gmra.mxu0 %v298
    %v527 = vpop.f32.mrf.mxu0
    %v528 = vadd.f32 0.0, %v527
    %v529 = vpop.f32.mrf.mxu0
    %530 = vmatprep.mubr.f32.mxu0 0.0
    %531 = vmatmul.mubr.f32.gmra.mxu0 %v301
    %v532 = vpop.f32.mrf.mxu0
    %v533 = vadd.f32 0.0, %v532
    %v534 = vpop.f32.mrf.mxu0
    %535 = vdwg.mxu0
    %vm536 = vcmask 130048
    %v538 = vsel %vm536, %v127, 0
    %v541 = vsel %vm536, %v449, 0
    %543 = vmatprep.subr.mxu0 0.0
    %544 = vmatpush1.xpose.msra.mxu0 0.0
    %545 = vmatprep.subr.mxu0 0.0
    %546 = vmatpush1.xpose.msra.mxu0 0.0
    %547 = vmatprep.subr.mxu0 0.0
    %548 = vmatpush1.xpose.msra.mxu0 0.0
    %549 = vmatprep.subr.mxu0 0.0
    %550 = vmatpush1.xpose.msra.mxu0 0.0
    %551 = vmatprep.subr.mxu0 0.0
    %552 = vmatpush1.xpose.msra.mxu0 0.0
    %553 = vmatprep.subr.mxu0 0.0
    %554 = vmatpush1.xpose.msra.mxu0 0.0
    %555 = vmatprep.subr.mxu0 0.0
    %556 = vmatpush1.xpose.msra.mxu0 0.0
    %557 = vmatprep.subr.mxu0 0.0
    %558 = vmatpush1.xpose.msra.mxu0 0.0
    %559 = vmatprep.subr.mxu0 0.0
    %560 = vmatpush1.xpose.msra.mxu0 0.0
    %561 = vmatprep.subr.mxu0 0.0
    %562 = vmatpush1.xpose.msra.mxu0 0.0
    %563 = vmatprep.subr.mxu0 0.0
    %564 = vmatpush1.xpose.msra.mxu0 0.0
    %565 = vmatprep.subr.mxu0 0.0
    %566 = vmatpush1.xpose.msra.mxu0 0.0
    %567 = vmatprep.subr.mxu0 0.0
    %568 = vmatpush1.xpose.msra.mxu0 0.0
    %569 = vmatprep.subr.mxu0 0.0
    %570 = vmatpush1.xpose.msra.mxu0 0.0
    %571 = vmatprep.subr.mxu0 0.0
    %572 = vmatpush1.xpose.msra.mxu0 0.0
    %573 = vmatprep.subr.mxu0 0.0
    %574 = vmatpush1.xpose.msra.mxu0 %v541
    %575 = vmatprep.subr.mxu0 0.0
    %576 = vmatpush2.xpose.msra.mxu0 0.0
    %577 = vmatprep.subr.mxu0 0.0
    %578 = vmatpush2.xpose.msra.mxu0 0.0
    %579 = vmatprep.subr.mxu0 0.0
    %580 = vmatpush2.xpose.msra.mxu0 0.0
    %581 = vmatprep.subr.mxu0 0.0
    %582 = vmatpush2.xpose.msra.mxu0 0.0
    %583 = vmatprep.subr.mxu0 0.0
    %584 = vmatpush2.xpose.msra.mxu0 0.0
    %585 = vmatprep.subr.mxu0 0.0
    %586 = vmatpush2.xpose.msra.mxu0 0.0
    %587 = vmatprep.subr.mxu0 0.0
    %588 = vmatpush2.xpose.msra.mxu0 0.0
    %589 = vmatprep.subr.mxu0 0.0
    %590 = vmatpush2.xpose.msra.mxu0 0.0
    %591 = vmatprep.subr.mxu0 0.0
    %592 = vmatpush2.xpose.msra.mxu0 0.0
    %593 = vmatprep.subr.mxu0 0.0
    %594 = vmatpush2.xpose.msra.mxu0 0.0
    %595 = vmatprep.subr.mxu0 0.0
    %596 = vmatpush2.xpose.msra.mxu0 0.0
    %597 = vmatprep.subr.mxu0 0.0
    %598 = vmatpush2.xpose.msra.mxu0 0.0
    %599 = vmatprep.subr.mxu0 0.0
    %600 = vmatpush2.xpose.msra.mxu0 0.0
    %601 = vmatprep.subr.mxu0 0.0
    %602 = vmatpush2.xpose.msra.mxu0 0.0
    %603 = vmatprep.subr.mxu0 0.0
    %604 = vmatpush2.xpose.msra.mxu0 0.0
    %605 = vmatprep.subr.mxu0 0.0
    %606 = vmatpush2.xpose.msra.mxu0 0.0
    %607 = vmatprep.mubr.f32.mxu0 0.0
    %608 = vmatmul.mubr.f32.gmra.mxu0 %v538
    %v609 = vpop.f32.mrf.mxu0
    %v610 = vadd.f32 0.0, %v609
    %v611 = vpop.f32.mrf.mxu0
    %612 = vdwg.mxu0
    %v614 = vsel %vm536, %v132, 0
    %v617 = vsel %vm536, %v454, 0
    %619 = vmatprep.subr.mxu0 0.0
    %620 = vmatpush1.xpose.msra.mxu0 0.0
    %621 = vmatprep.subr.mxu0 0.0
    %622 = vmatpush1.xpose.msra.mxu0 0.0
    %623 = vmatprep.subr.mxu0 0.0
    %624 = vmatpush1.xpose.msra.mxu0 0.0
    %625 = vmatprep.subr.mxu0 0.0
    %626 = vmatpush1.xpose.msra.mxu0 0.0
    %627 = vmatprep.subr.mxu0 0.0
    %628 = vmatpush1.xpose.msra.mxu0 0.0
    %629 = vmatprep.subr.mxu0 0.0
    %630 = vmatpush1.xpose.msra.mxu0 0.0
    %631 = vmatprep.subr.mxu0 0.0
    %632 = vmatpush1.xpose.msra.mxu0 0.0
    %633 = vmatprep.subr.mxu0 0.0
    %634 = vmatpush1.xpose.msra.mxu0 0.0
    %635 = vmatprep.subr.mxu0 0.0
    %636 = vmatpush1.xpose.msra.mxu0 0.0
    %637 = vmatprep.subr.mxu0 0.0
    %638 = vmatpush1.xpose.msra.mxu0 0.0
    %639 = vmatprep.subr.mxu0 0.0
    %640 = vmatpush1.xpose.msra.mxu0 0.0
    %641 = vmatprep.subr.mxu0 0.0
    %642 = vmatpush1.xpose.msra.mxu0 0.0
    %643 = vmatprep.subr.mxu0 0.0
    %644 = vmatpush1.xpose.msra.mxu0 0.0
    %645 = vmatprep.subr.mxu0 0.0
    %646 = vmatpush1.xpose.msra.mxu0 0.0
    %647 = vmatprep.subr.mxu0 0.0
    %648 = vmatpush1.xpose.msra.mxu0 0.0
    %649 = vmatprep.subr.mxu0 0.0
    %650 = vmatpush1.xpose.msra.mxu0 %v617
    %651 = vmatprep.subr.mxu0 0.0
    %652 = vmatpush2.xpose.msra.mxu0 0.0
    %653 = vmatprep.subr.mxu0 0.0
    %654 = vmatpush2.xpose.msra.mxu0 0.0
    %655 = vmatprep.subr.mxu0 0.0
    %656 = vmatpush2.xpose.msra.mxu0 0.0
    %657 = vmatprep.subr.mxu0 0.0
    %658 = vmatpush2.xpose.msra.mxu0 0.0
    %659 = vmatprep.subr.mxu0 0.0
    %660 = vmatpush2.xpose.msra.mxu0 0.0
    %661 = vmatprep.subr.mxu0 0.0
    %662 = vmatpush2.xpose.msra.mxu0 0.0
    %663 = vmatprep.subr.mxu0 0.0
    %664 = vmatpush2.xpose.msra.mxu0 0.0
    %665 = vmatprep.subr.mxu0 0.0
    %666 = vmatpush2.xpose.msra.mxu0 0.0
    %667 = vmatprep.subr.mxu0 0.0
    %668 = vmatpush2.xpose.msra.mxu0 0.0
    %669 = vmatprep.subr.mxu0 0.0
    %670 = vmatpush2.xpose.msra.mxu0 0.0
    %671 = vmatprep.subr.mxu0 0.0
    %672 = vmatpush2.xpose.msra.mxu0 0.0
    %673 = vmatprep.subr.mxu0 0.0
    %674 = vmatpush2.xpose.msra.mxu0 0.0
    %675 = vmatprep.subr.mxu0 0.0
    %676 = vmatpush2.xpose.msra.mxu0 0.0
    %677 = vmatprep.subr.mxu0 0.0
    %678 = vmatpush2.xpose.msra.mxu0 0.0
    %679 = vmatprep.subr.mxu0 0.0
    %680 = vmatpush2.xpose.msra.mxu0 0.0
    %681 = vmatprep.subr.mxu0 0.0
    %682 = vmatpush2.xpose.msra.mxu0 0.0
    %683 = vmatprep.mubr.f32.mxu0 0.0
    %684 = vmatmul.mubr.f32.gmra.mxu0 %v614
    %v685 = vpop.f32.mrf.mxu0
    %v686 = vadd.f32 0.0, %v685
    %v687 = vpop.f32.mrf.mxu0
    %688 = vdwg.mxu0
    %v689 = vmul.f32 %v610, 0.25
    %v690 = vmul.f32 %v686, 0.25
    %vm691 = vcmask 64512
    %v692 = vsel %vm691, %v689, -inf
    %693 = vmax.xlane.f32.xlu0 %v692
    %v694 = vpop.xlane.xlu0 %693
    %v695 = vsel %vm691, %v690, -inf
    %696 = vmax.xlane.f32.xlu0 %v695
    %v697 = vpop.xlane.xlu0 %696
    %v698 = vsub.f32 %v689, %v694
    %v699 = vsub.f32 %v690, %v697
    %v700 = vmul.f32 %v698, 1.442695
    %v701 = vpow.pop %v700
    %v702 = vmul.f32 %v699, 1.442695
    %v703 = vpow.pop %v702
    %v704 = vsel %vm691, %v701, 0.0
    %705 = vadd.xlane.f32.xlu0 %v704
    %v706 = vpop.xlane.xlu0 %705
    %v707 = vsel %vm691, %v703, 0.0
    %708 = vadd.xlane.f32.xlu0 %v707
    %v709 = vpop.xlane.xlu0 %708
    %v710 = vrcp.pop %v706
    %v711 = vrcp.pop %v709
    %v712 = vmul.f32 %v701, %v710
    %v713 = vmul.f32 %v703, %v711
    %v715 = vsel %vm691, %v712, 0
    %717 = vmatprep.subr.mxu0 0.0
    %718 = vmatpush1.msra.mxu0 0.0
    %719 = vmatprep.subr.mxu0 0.0
    %720 = vmatpush1.msra.mxu0 0.0
    %721 = vmatprep.subr.mxu0 0.0
    %722 = vmatpush1.msra.mxu0 0.0
    %723 = vmatprep.subr.mxu0 0.0
    %724 = vmatpush1.msra.mxu0 0.0
    %725 = vmatprep.subr.mxu0 0.0
    %726 = vmatpush1.msra.mxu0 0.0
    %727 = vmatprep.subr.mxu0 0.0
    %728 = vmatpush1.msra.mxu0 0.0
    %729 = vmatprep.subr.mxu0 0.0
    %730 = vmatpush1.msra.mxu0 0.0
    %731 = vmatprep.subr.mxu0 0.0
    %732 = vmatpush1.msra.mxu0 0.0
    %733 = vmatprep.subr.mxu0 0.0
    %734 = vmatpush1.msra.mxu0 0.0
    %735 = vmatprep.subr.mxu0 0.0
    %736 = vmatpush1.msra.mxu0 0.0
    %737 = vmatprep.subr.mxu0 0.0
    %738 = vmatpush1.msra.mxu0 0.0
    %739 = vmatprep.subr.mxu0 0.0
    %740 = vmatpush1.msra.mxu0 0.0
    %741 = vmatprep.subr.mxu0 0.0
    %742 = vmatpush1.msra.mxu0 0.0
    %743 = vmatprep.subr.mxu0 0.0
    %744 = vmatpush1.msra.mxu0 0.0
    %745 = vmatprep.subr.mxu0 0.0
    %746 = vmatpush1.msra.mxu0 0.0
    %747 = vmatprep.subr.mxu0 0.0
    %748 = vmatpush1.msra.mxu0 %v528
    %749 = vmatprep.subr.mxu0 0.0
    %750 = vmatpush2.msra.mxu0 0.0
    %751 = vmatprep.subr.mxu0 0.0
    %752 = vmatpush2.msra.mxu0 0.0
    %753 = vmatprep.subr.mxu0 0.0
    %754 = vmatpush2.msra.mxu0 0.0
    %755 = vmatprep.subr.mxu0 0.0
    %756 = vmatpush2.msra.mxu0 0.0
    %757 = vmatprep.subr.mxu0 0.0
    %758 = vmatpush2.msra.mxu0 0.0
    %759 = vmatprep.subr.mxu0 0.0
    %760 = vmatpush2.msra.mxu0 0.0
    %761 = vmatprep.subr.mxu0 0.0
    %762 = vmatpush2.msra.mxu0 0.0
    %763 = vmatprep.subr.mxu0 0.0
    %764 = vmatpush2.msra.mxu0 0.0
    %765 = vmatprep.subr.mxu0 0.0
    %766 = vmatpush2.msra.mxu0 0.0
    %767 = vmatprep.subr.mxu0 0.0
    %768 = vmatpush2.msra.mxu0 0.0
    %769 = vmatprep.subr.mxu0 0.0
    %770 = vmatpush2.msra.mxu0 0.0
    %771 = vmatprep.subr.mxu0 0.0
    %772 = vmatpush2.msra.mxu0 0.0
    %773 = vmatprep.subr.mxu0 0.0
    %774 = vmatpush2.msra.mxu0 0.0
    %775 = vmatprep.subr.mxu0 0.0
    %776 = vmatpush2.msra.mxu0 0.0
    %777 = vmatprep.subr.mxu0 0.0
    %778 = vmatpush2.msra.mxu0 0.0
    %779 = vmatprep.subr.mxu0 0.0
    %780 = vmatpush2.msra.mxu0 0.0
    %781 = vmatprep.mubr.f32.mxu0 0.0
    %782 = vmatmul.mubr.f32.gmra.mxu0 %v715
    %v783 = vpop.f32.mrf.mxu0
    %v784 = vadd.f32 0.0, %v783
    %v785 = vpop.f32.mrf.mxu0
    %786 = vdwg.mxu0
    %v788 = vsel %vm691, %v713, 0
    %790 = vmatprep.subr.mxu0 0.0
    %791 = vmatpush1.msra.mxu0 0.0
    %792 = vmatprep.subr.mxu0 0.0
    %793 = vmatpush1.msra.mxu0 0.0
    %794 = vmatprep.subr.mxu0 0.0
    %795 = vmatpush1.msra.mxu0 0.0
    %796 = vmatprep.subr.mxu0 0.0
    %797 = vmatpush1.msra.mxu0 0.0
    %798 = vmatprep.subr.mxu0 0.0
    %799 = vmatpush1.msra.mxu0 0.0
    %800 = vmatprep.subr.mxu0 0.0
    %801 = vmatpush1.msra.mxu0 0.0
    %802 = vmatprep.subr.mxu0 0.0
    %803 = vmatpush1.msra.mxu0 0.0
    %804 = vmatprep.subr.mxu0 0.0
    %805 = vmatpush1.msra.mxu0 0.0
    %806 = vmatprep.subr.mxu0 0.0
    %807 = vmatpush1.msra.mxu0 0.0
    %808 = vmatprep.subr.mxu0 0.0
    %809 = vmatpush1.msra.mxu0 0.0
    %810 = vmatprep.subr.mxu0 0.0
    %811 = vmatpush1.msra.mxu0 0.0
    %812 = vmatprep.subr.mxu0 0.0
    %813 = vmatpush1.msra.mxu0 0.0
    %814 = vmatprep.subr.mxu0 0.0
    %815 = vmatpush1.msra.mxu0 0.0
    %816 = vmatprep.subr.mxu0 0.0
    %817 = vmatpush1.msra.mxu0 0.0
    %818 = vmatprep.subr.mxu0 0.0
    %819 = vmatpush1.msra.mxu0 0.0
    %820 = vmatprep.subr.mxu0 0.0
    %821 = vmatpush1.msra.mxu0 %v533
    %822 = vmatprep.subr.mxu0 0.0
    %823 = vmatpush2.msra.mxu0 0.0
    %824 = vmatprep.subr.mxu0 0.0
    %825 = vmatpush2.msra.mxu0 0.0
    %826 = vmatprep.subr.mxu0 0.0
    %827 = vmatpush2.msra.mxu0 0.0
    %828 = vmatprep.subr.mxu0 0.0
    %829 = vmatpush2.msra.mxu0 0.0
    %830 = vmatprep.subr.mxu0 0.0
    %831 = vmatpush2.msra.mxu0 0.0
    %832 = vmatprep.subr.mxu0 0.0
    %833 = vmatpush2.msra.mxu0 0.0
    %834 = vmatprep.subr.mxu0 0.0
    %835 = vmatpush2.msra.mxu0 0.0
    %836 = vmatprep.subr.mxu0 0.0
    %837 = vmatpush2.msra.mxu0 0.0
    %838 = vmatprep.subr.mxu0 0.0
    %839 = vmatpush2.msra.mxu0 0.0
    %840 = vmatprep.subr.mxu0 0.0
    %841 = vmatpush2.msra.mxu0 0.0
    %842 = vmatprep.subr.mxu0 0.0
    %843 = vmatpush2.msra.mxu0 0.0
    %844 = vmatprep.subr.mxu0 0.0
    %845 = vmatpush2.msra.mxu0 0.0
    %846 = vmatprep.subr.mxu0 0.0
    %847 = vmatpush2.msra.mxu0 0.0
    %848 = vmatprep.subr.mxu0 0.0
    %849 = vmatpush2.msra.mxu0 0.0
    %850 = vmatprep.subr.mxu0 0.0
    %851 = vmatpush2.msra.mxu0 0.0
    %852 = vmatprep.subr.mxu0 0.0
    %853 = vmatpush2.msra.mxu0 0.0
    %854 = vmatprep.mubr.f32.mxu0 0.0
    %855 = vmatmul.mubr.f32.gmra.mxu0 %v788
    %v856 = vpop.f32.mrf.mxu0
    %v857 = vadd.f32 0.0, %v856
    %v858 = vpop.f32.mrf.mxu0
    %859 = vdwg.mxu0
    %v861 = vsel %vm536, %v370, 0
    %v864 = vsel %vm536, %v206, 0
    %866 = vmatprep.subr.mxu0 0.0
    %867 = vmatpush1.xpose.msra.mxu0 0.0
    %868 = vmatprep.subr.mxu0 0.0
    %869 = vmatpush1.xpose.msra.mxu0 0.0
    %870 = vmatprep.subr.mxu0 0.0
    %871 = vmatpush1.xpose.msra.mxu0 0.0
    %872 = vmatprep.subr.mxu0 0.0
    %873 = vmatpush1.xpose.msra.mxu0 0.0
    %874 = vmatprep.subr.mxu0 0.0
    %875 = vmatpush1.xpose.msra.mxu0 0.0
    %876 = vmatprep.subr.mxu0 0.0
    %877 = vmatpush1.xpose.msra.mxu0 0.0
    %878 = vmatprep.subr.mxu0 0.0
    %879 = vmatpush1.xpose.msra.mxu0 0.0
    %880 = vmatprep.subr.mxu0 0.0
    %881 = vmatpush1.xpose.msra.mxu0 0.0
    %882 = vmatprep.subr.mxu0 0.0
    %883 = vmatpush1.xpose.msra.mxu0 0.0
    %884 = vmatprep.subr.mxu0 0.0
    %885 = vmatpush1.xpose.msra.mxu0 0.0
    %886 = vmatprep.subr.mxu0 0.0
    %887 = vmatpush1.xpose.msra.mxu0 0.0
    %888 = vmatprep.subr.mxu0 0.0
    %889 = vmatpush1.xpose.msra.mxu0 0.0
    %890 = vmatprep.subr.mxu0 0.0
    %891 = vmatpush1.xpose.msra.mxu0 0.0
    %892 = vmatprep.subr.mxu0 0.0
    %893 = vmatpush1.xpose.msra.mxu0 0.0
    %894 = vmatprep.subr.mxu0 0.0
    %895 = vmatpush1.xpose.msra.mxu0 0.0
    %896 = vmatprep.subr.mxu0 0.0
    %897 = vmatpush1.xpose.msra.mxu0 %v864
    %898 = vmatprep.subr.mxu0 0.0
    %899 = vmatpush2.xpose.msra.mxu0 0.0
    %900 = vmatprep.subr.mxu0 0.0
    %901 = vmatpush2.xpose.msra.mxu0 0.0
    %902 = vmatprep.subr.mxu0 0.0
    %903 = vmatpush2.xpose.msra.mxu0 0.0
    %904 = vmatprep.subr.mxu0 0.0
    %905 = vmatpush2.xpose.msra.mxu0 0.0
    %906 = vmatprep.subr.mxu0 0.0
    %907 = vmatpush2.xpose.msra.mxu0 0.0
    %908 = vmatprep.subr.mxu0 0.0
    %909 = vmatpush2.xpose.msra.mxu0 0.0
    %910 = vmatprep.subr.mxu0 0.0
    %911 = vmatpush2.xpose.msra.mxu0 0.0
    %912 = vmatprep.subr.mxu0 0.0
    %913 = vmatpush2.xpose.msra.mxu0 0.0
    %914 = vmatprep.subr.mxu0 0.0
    %915 = vmatpush2.xpose.msra.mxu0 0.0
    %916 = vmatprep.subr.mxu0 0.0
    %917 = vmatpush2.xpose.msra.mxu0 0.0
    %918 = vmatprep.subr.mxu0 0.0
    %919 = vmatpush2.xpose.msra.mxu0 0.0
    %920 = vmatprep.subr.mxu0 0.0
    %921 = vmatpush2.xpose.msra.mxu0 0.0
    %922 = vmatprep.subr.mxu0 0.0
    %923 = vmatpush2.xpose.msra.mxu0 0.0
    %924 = vmatprep.subr.mxu0 0.0
    %925 = vmatpush2.xpose.msra.mxu0 0.0
    %926 = vmatprep.subr.mxu0 0.0
    %927 = vmatpush2.xpose.msra.mxu0 0.0
    %928 = vmatprep.subr.mxu0 0.0
    %929 = vmatpush2.xpose.msra.mxu0 0.0
    %930 = vmatprep.mubr.f32.mxu0 0.0
    %931 = vmatmul.mubr.f32.gmra.mxu0 %v861
    %v932 = vpop.f32.mrf.mxu0
    %v933 = vadd.f32 0.0, %v932
    %v934 = vpop.f32.mrf.mxu0
    %935 = vdwg.mxu0
    %v937 = vsel %vm536, %v375, 0
    %v940 = vsel %vm536, %v211, 0
    %942 = vmatprep.subr.mxu0 0.0
    %943 = vmatpush1.xpose.msra.mxu0 0.0
    %944 = vmatprep.subr.mxu0 0.0
    %945 = vmatpush1.xpose.msra.mxu0 0.0
    %946 = vmatprep.subr.mxu0 0.0
    %947 = vmatpush1.xpose.msra.mxu0 0.0
    %948 = vmatprep.subr.mxu0 0.0
    %949 = vmatpush1.xpose.msra.mxu0 0.0
    %950 = vmatprep.subr.mxu0 0.0
    %951 = vmatpush1.xpose.msra.mxu0 0.0
    %952 = vmatprep.subr.mxu0 0.0
    %953 = vmatpush1.xpose.msra.mxu0 0.0
    %954 = vmatprep.subr.mxu0 0.0
    %955 = vmatpush1.xpose.msra.mxu0 0.0
    %956 = vmatprep.subr.mxu0 0.0
    %957 = vmatpush1.xpose.msra.mxu0 0.0
    %958 = vmatprep.subr.mxu0 0.0
    %959 = vmatpush1.xpose.msra.mxu0 0.0
    %960 = vmatprep.subr.mxu0 0.0
    %961 = vmatpush1.xpose.msra.mxu0 0.0
    %962 = vmatprep.subr.mxu0 0.0
    %963 = vmatpush1.xpose.msra.mxu0 0.0
    %964 = vmatprep.subr.mxu0 0.0
    %965 = vmatpush1.xpose.msra.mxu0 0.0
    %966 = vmatprep.subr.mxu0 0.0
    %967 = vmatpush1.xpose.msra.mxu0 0.0
    %968 = vmatprep.subr.mxu0 0.0
    %969 = vmatpush1.xpose.msra.mxu0 0.0
    %970 = vmatprep.subr.mxu0 0.0
    %971 = vmatpush1.xpose.msra.mxu0 0.0
    %972 = vmatprep.subr.mxu0 0.0
    %973 = vmatpush1.xpose.msra.mxu0 %v940
    %974 = vmatprep.subr.mxu0 0.0
    %975 = vmatpush2.xpose.msra.mxu0 0.0
    %976 = vmatprep.subr.mxu0 0.0
    %977 = vmatpush2.xpose.msra.mxu0 0.0
    %978 = vmatprep.subr.mxu0 0.0
    %979 = vmatpush2.xpose.msra.mxu0 0.0
    %980 = vmatprep.subr.mxu0 0.0
    %981 = vmatpush2.xpose.msra.mxu0 0.0
    %982 = vmatprep.subr.mxu0 0.0
    %983 = vmatpush2.xpose.msra.mxu0 0.0
    %984 = vmatprep.subr.mxu0 0.0
    %985 = vmatpush2.xpose.msra.mxu0 0.0
    %986 = vmatprep.subr.mxu0 0.0
    %987 = vmatpush2.xpose.msra.mxu0 0.0
    %988 = vmatprep.subr.mxu0 0.0
    %989 = vmatpush2.xpose.msra.mxu0 0.0
    %990 = vmatprep.subr.mxu0 0.0
    %991 = vmatpush2.xpose.msra.mxu0 0.0
    %992 = vmatprep.subr.mxu0 0.0
    %993 = vmatpush2.xpose.msra.mxu0 0.0
    %994 = vmatprep.subr.mxu0 0.0
    %995 = vmatpush2.xpose.msra.mxu0 0.0
    %996 = vmatprep.subr.mxu0 0.0
    %997 = vmatpush2.xpose.msra.mxu0 0.0
    %998 = vmatprep.subr.mxu0 0.0
    %999 = vmatpush2.xpose.msra.mxu0 0.0
    %1000 = vmatprep.subr.mxu0 0.0
    %1001 = vmatpush2.xpose.msra.mxu0 0.0
    %1002 = vmatprep.subr.mxu0 0.0
    %1003 = vmatpush2.xpose.msra.mxu0 0.0
    %1004 = vmatprep.subr.mxu0 0.0
    %1005 = vmatpush2.xpose.msra.mxu0 0.0
    %1006 = vmatprep.mubr.f32.mxu0 0.0
    %1007 = vmatmul.mubr.f32.gmra.mxu0 %v937
    %v1008 = vpop.f32.mrf.mxu0
    %v1009 = vadd.f32 0.0, %v1008
    %v1010 = vpop.f32.mrf.mxu0
    %1011 = vdwg.mxu0
    %v1012 = vmul.f32 %v933, 0.25
    %v1013 = vmul.f32 %v1009, 0.25
    %v1014 = vsel %vm691, %v1012, -inf
    %1015 = vmax.xlane.f32.xlu0 %v1014
    %v1016 = vpop.xlane.xlu0 %1015
    %v1017 = vsel %vm691, %v1013, -inf
    %1018 = vmax.xlane.f32.xlu0 %v1017
    %v1019 = vpop.xlane.xlu0 %1018
    %v1020 = vsub.f32 %v1012, %v1016
    %v1021 = vsub.f32 %v1013, %v1019
    %v1022 = vmul.f32 %v1020, 1.442695
    %v1023 = vpow.pop %v1022
    %v1024 = vmul.f32 %v1021, 1.442695
    %v1025 = vpow.pop %v1024
    %v1026 = vsel %vm691, %v1023, 0.0
    %1027 = vadd.xlane.f32.xlu0 %v1026
    %v1028 = vpop.xlane.xlu0 %1027
    %v1029 = vsel %vm691, %v1025, 0.0
    %1030 = vadd.xlane.f32.xlu0 %v1029
    %v1031 = vpop.xlane.xlu0 %1030
    %v1032 = vrcp.pop %v1028
    %v1033 = vrcp.pop %v1031
    %v1034 = vmul.f32 %v1023, %v1032
    %v1035 = vmul.f32 %v1025, %v1033
    %v1037 = vsel %vm691, %v1034, 0
    %1039 = vmatprep.subr.mxu0 0.0
    %1040 = vmatpush1.msra.mxu0 0.0
    %1041 = vmatprep.subr.mxu0 0.0
    %1042 = vmatpush1.msra.mxu0 0.0
    %1043 = vmatprep.subr.mxu0 0.0
    %1044 = vmatpush1.msra.mxu0 0.0
    %1045 = vmatprep.subr.mxu0 0.0
    %1046 = vmatpush1.msra.mxu0 0.0
    %1047 = vmatprep.subr.mxu0 0.0
    %1048 = vmatpush1.msra.mxu0 0.0
    %1049 = vmatprep.subr.mxu0 0.0
    %1050 = vmatpush1.msra.mxu0 0.0
    %1051 = vmatprep.subr.mxu0 0.0
    %1052 = vmatpush1.msra.mxu0 0.0
    %1053 = vmatprep.subr.mxu0 0.0
    %1054 = vmatpush1.msra.mxu0 0.0
    %1055 = vmatprep.subr.mxu0 0.0
    %1056 = vmatpush1.msra.mxu0 0.0
    %1057 = vmatprep.subr.mxu0 0.0
    %1058 = vmatpush1.msra.mxu0 0.0
    %1059 = vmatprep.subr.mxu0 0.0
    %1060 = vmatpush1.msra.mxu0 0.0
    %1061 = vmatprep.subr.mxu0 0.0
    %1062 = vmatpush1.msra.mxu0 0.0
    %1063 = vmatprep.subr.mxu0 0.0
    %1064 = vmatpush1.msra.mxu0 0.0
    %1065 = vmatprep.subr.mxu0 0.0
    %1066 = vmatpush1.msra.mxu0 0.0
    %1067 = vmatprep.subr.mxu0 0.0
    %1068 = vmatpush1.msra.mxu0 0.0
    %1069 = vmatprep.subr.mxu0 0.0
    %1070 = vmatpush1.msra.mxu0 %v285
    %1071 = vmatprep.subr.mxu0 0.0
    %1072 = vmatpush2.msra.mxu0 0.0
    %1073 = vmatprep.subr.mxu0 0.0
    %1074 = vmatpush2.msra.mxu0 0.0
    %1075 = vmatprep.subr.mxu0 0.0
    %1076 = vmatpush2.msra.mxu0 0.0
    %1077 = vmatprep.subr.mxu0 0.0
    %1078 = vmatpush2.msra.mxu0 0.0
    %1079 = vmatprep.subr.mxu0 0.0
    %1080 = vmatpush2.msra.mxu0 0.0
    %1081 = vmatprep.subr.mxu0 0.0
    %1082 = vmatpush2.msra.mxu0 0.0
    %1083 = vmatprep.subr.mxu0 0.0
    %1084 = vmatpush2.msra.mxu0 0.0
    %1085 = vmatprep.subr.mxu0 0.0
    %1086 = vmatpush2.msra.mxu0 0.0
    %1087 = vmatprep.subr.mxu0 0.0
    %1088 = vmatpush2.msra.mxu0 0.0
    %1089 = vmatprep.subr.mxu0 0.0
    %1090 = vmatpush2.msra.mxu0 0.0
    %1091 = vmatprep.subr.mxu0 0.0
    %1092 = vmatpush2.msra.mxu0 0.0
    %1093 = vmatprep.subr.mxu0 0.0
    %1094 = vmatpush2.msra.mxu0 0.0
    %1095 = vmatprep.subr.mxu0 0.0
    %1096 = vmatpush2.msra.mxu0 0.0
    %1097 = vmatprep.subr.mxu0 0.0
    %1098 = vmatpush2.msra.mxu0 0.0
    %1099 = vmatprep.subr.mxu0 0.0
    %1100 = vmatpush2.msra.mxu0 0.0
    %1101 = vmatprep.subr.mxu0 0.0
    %1102 = vmatpush2.msra.mxu0 0.0
    %1103 = vmatprep.mubr.f32.mxu0 0.0
    %1104 = vmatmul.mubr.f32.gmra.mxu0 %v1037
    %v1105 = vpop.f32.mrf.mxu0
    %v1106 = vadd.f32 0.0, %v1105
    %v1107 = vpop.f32.mrf.mxu0
    %1108 = vdwg.mxu0
    %v1110 = vsel %vm691, %v1035, 0
    %1112 = vmatprep.subr.mxu0 0.0
    %1113 = vmatpush1.msra.mxu0 0.0
    %1114 = vmatprep.subr.mxu0 0.0
    %1115 = vmatpush1.msra.mxu0 0.0
    %1116 = vmatprep.subr.mxu0 0.0
    %1117 = vmatpush1.msra.mxu0 0.0
    %1118 = vmatprep.subr.mxu0 0.0
    %1119 = vmatpush1.msra.mxu0 0.0
    %1120 = vmatprep.subr.mxu0 0.0
    %1121 = vmatpush1.msra.mxu0 0.0
    %1122 = vmatprep.subr.mxu0 0.0
    %1123 = vmatpush1.msra.mxu0 0.0
    %1124 = vmatprep.subr.mxu0 0.0
    %1125 = vmatpush1.msra.mxu0 0.0
    %1126 = vmatprep.subr.mxu0 0.0
    %1127 = vmatpush1.msra.mxu0 0.0
    %1128 = vmatprep.subr.mxu0 0.0
    %1129 = vmatpush1.msra.mxu0 0.0
    %1130 = vmatprep.subr.mxu0 0.0
    %1131 = vmatpush1.msra.mxu0 0.0
    %1132 = vmatprep.subr.mxu0 0.0
    %1133 = vmatpush1.msra.mxu0 0.0
    %1134 = vmatprep.subr.mxu0 0.0
    %1135 = vmatpush1.msra.mxu0 0.0
    %1136 = vmatprep.subr.mxu0 0.0
    %1137 = vmatpush1.msra.mxu0 0.0
    %1138 = vmatprep.subr.mxu0 0.0
    %1139 = vmatpush1.msra.mxu0 0.0
    %1140 = vmatprep.subr.mxu0 0.0
    %1141 = vmatpush1.msra.mxu0 0.0
    %1142 = vmatprep.subr.mxu0 0.0
    %1143 = vmatpush1.msra.mxu0 %v290
    %1144 = vmatprep.subr.mxu0 0.0
    %1145 = vmatpush2.msra.mxu0 0.0
    %1146 = vmatprep.subr.mxu0 0.0
    %1147 = vmatpush2.msra.mxu0 0.0
    %1148 = vmatprep.subr.mxu0 0.0
    %1149 = vmatpush2.msra.mxu0 0.0
    %1150 = vmatprep.subr.mxu0 0.0
    %1151 = vmatpush2.msra.mxu0 0.0
    %1152 = vmatprep.subr.mxu0 0.0
    %1153 = vmatpush2.msra.mxu0 0.0
    %1154 = vmatprep.subr.mxu0 0.0
    %1155 = vmatpush2.msra.mxu0 0.0
    %1156 = vmatprep.subr.mxu0 0.0
    %1157 = vmatpush2.msra.mxu0 0.0
    %1158 = vmatprep.subr.mxu0 0.0
    %1159 = vmatpush2.msra.mxu0 0.0
    %1160 = vmatprep.subr.mxu0 0.0
    %1161 = vmatpush2.msra.mxu0 0.0
    %1162 = vmatprep.subr.mxu0 0.0
    %1163 = vmatpush2.msra.mxu0 0.0
    %1164 = vmatprep.subr.mxu0 0.0
    %1165 = vmatpush2.msra.mxu0 0.0
    %1166 = vmatprep.subr.mxu0 0.0
    %1167 = vmatpush2.msra.mxu0 0.0
    %1168 = vmatprep.subr.mxu0 0.0
    %1169 = vmatpush2.msra.mxu0 0.0
    %1170 = vmatprep.subr.mxu0 0.0
    %1171 = vmatpush2.msra.mxu0 0.0
    %1172 = vmatprep.subr.mxu0 0.0
    %1173 = vmatpush2.msra.mxu0 0.0
    %1174 = vmatprep.subr.mxu0 0.0
    %1175 = vmatpush2.msra.mxu0 0.0
    %1176 = vmatprep.mubr.f32.mxu0 0.0
    %1177 = vmatmul.mubr.f32.gmra.mxu0 %v1110
    %v1178 = vpop.f32.mrf.mxu0
    %v1179 = vadd.f32 0.0, %v1178
    %v1180 = vpop.f32.mrf.mxu0
    %1181 = vdwg.mxu0
    %v1182 = vld [vmem:[%s8] sm:$0xff]
    %v1183 = vld [vmem:[%s8 + $0x8] sm:$0xff]
    %v1184 = vld [vmem:[%s10] sm:$0xff]
    %v1185 = vld [vmem:[%s10 + $0x8] sm:$0xff]
    %s1186 = scalar_lea.vmem %s2, 32
    %v1187 = vld [vmem:[%s1186] sm:$0xff]
    %v1188 = vld [vmem:[%s1186 + $0x8] sm:$0xff]
    %v1189 = vld [vmem:[%s1186 + $0x10] sm:$0xff]
    %v1190 = vld [vmem:[%s1186 + $0x18] sm:$0xff]
    %1191 = vmatprep.subr.mxu0 0.0
    %1192 = vmatpush1.msra.mxu0 0.0
    %1193 = vmatprep.subr.mxu0 0.0
    %1194 = vmatpush1.msra.mxu0 0.0
    %1195 = vmatprep.subr.mxu0 0.0
    %1196 = vmatpush1.msra.mxu0 0.0
    %1197 = vmatprep.subr.mxu0 0.0
    %1198 = vmatpush1.msra.mxu0 0.0
    %1199 = vmatprep.subr.mxu0 0.0
    %1200 = vmatpush1.msra.mxu0 0.0
    %1201 = vmatprep.subr.mxu0 0.0
    %1202 = vmatpush1.msra.mxu0 0.0
    %1203 = vmatprep.subr.mxu0 0.0
    %1204 = vmatpush1.msra.mxu0 0.0
    %1205 = vmatprep.subr.mxu0 0.0
    %1206 = vmatpush1.msra.mxu0 0.0
    %1207 = vmatprep.subr.mxu0 0.0
    %1208 = vmatpush1.msra.mxu0 0.0
    %1209 = vmatprep.subr.mxu0 0.0
    %1210 = vmatpush1.msra.mxu0 0.0
    %1211 = vmatprep.subr.mxu0 0.0
    %1212 = vmatpush1.msra.mxu0 0.0
    %1213 = vmatprep.subr.mxu0 0.0
    %1214 = vmatpush1.msra.mxu0 0.0
    %1215 = vmatprep.subr.mxu0 0.0
    %1216 = vmatpush1.msra.mxu0 %v1190
    %1217 = vmatprep.subr.mxu0 0.0
    %1218 = vmatpush1.msra.mxu0 %v1189
    %1219 = vmatprep.subr.mxu0 0.0
    %1220 = vmatpush1.msra.mxu0 %v1188
    %1221 = vmatprep.subr.mxu0 0.0
    %1222 = vmatpush1.msra.mxu0 %v1187
    %1223 = vmatprep.subr.mxu0 0.0
    %1224 = vmatpush2.msra.mxu0 0.0
    %1225 = vmatprep.subr.mxu0 0.0
    %1226 = vmatpush2.msra.mxu0 0.0
    %1227 = vmatprep.subr.mxu0 0.0
    %1228 = vmatpush2.msra.mxu0 0.0
    %1229 = vmatprep.subr.mxu0 0.0
    %1230 = vmatpush2.msra.mxu0 0.0
    %1231 = vmatprep.subr.mxu0 0.0
    %1232 = vmatpush2.msra.mxu0 0.0
    %1233 = vmatprep.subr.mxu0 0.0
    %1234 = vmatpush2.msra.mxu0 0.0
    %1235 = vmatprep.subr.mxu0 0.0
    %1236 = vmatpush2.msra.mxu0 0.0
    %1237 = vmatprep.subr.mxu0 0.0
    %1238 = vmatpush2.msra.mxu0 0.0
    %1239 = vmatprep.subr.mxu0 0.0
    %1240 = vmatpush2.msra.mxu0 0.0
    %1241 = vmatprep.subr.mxu0 0.0
    %1242 = vmatpush2.msra.mxu0 0.0
    %1243 = vmatprep.subr.mxu0 0.0
    %1244 = vmatpush2.msra.mxu0 0.0
    %1245 = vmatprep.subr.mxu0 0.0
    %1246 = vmatpush2.msra.mxu0 0.0
    %1247 = vmatprep.subr.mxu0 0.0
    %1248 = vmatpush2.msra.mxu0 0.0
    %1249 = vmatprep.subr.mxu0 0.0
    %1250 = vmatpush2.msra.mxu0 0.0
    %1251 = vmatprep.subr.mxu0 0.0
    %1252 = vmatpush2.msra.mxu0 0.0
    %1253 = vmatprep.subr.mxu0 0.0
    %1254 = vmatpush2.msra.mxu0 0.0
    %1255 = vmatprep.mubr.f32.mxu0 0.0
    %1256 = vmatmul.mubr.f32.gmra.mxu0 %v55
    %v1257 = vpop.f32.mrf.mxu0
    %v1258 = vadd.f32 0.0, %v1257
    %v1259 = vpop.f32.mrf.mxu0
    %1260 = vmatprep.mubr.f32.mxu0 0.0
    %1261 = vmatmul.mubr.f32.gmra.mxu0 %v58
    %v1262 = vpop.f32.mrf.mxu0
    %v1263 = vadd.f32 0.0, %v1262
    %v1264 = vpop.f32.mrf.mxu0
    %1265 = vdwg.mxu0
    %s1266 = scalar_lea.vmem %s3, 32
    %v1267 = vld [vmem:[%s1266] sm:$0xff]
    %v1268 = vld [vmem:[%s1266 + $0x8] sm:$0xff]
    %v1269 = vld [vmem:[%s1266 + $0x10] sm:$0xff]
    %v1270 = vld [vmem:[%s1266 + $0x18] sm:$0xff]
    %1271 = vmatprep.subr.mxu0 0.0
    %1272 = vmatpush1.msra.mxu0 0.0
    %1273 = vmatprep.subr.mxu0 0.0
    %1274 = vmatpush1.msra.mxu0 0.0
    %1275 = vmatprep.subr.mxu0 0.0
    %1276 = vmatpush1.msra.mxu0 0.0
    %1277 = vmatprep.subr.mxu0 0.0
    %1278 = vmatpush1.msra.mxu0 0.0
    %1279 = vmatprep.subr.mxu0 0.0
    %1280 = vmatpush1.msra.mxu0 0.0
    %1281 = vmatprep.subr.mxu0 0.0
    %1282 = vmatpush1.msra.mxu0 0.0
    %1283 = vmatprep.subr.mxu0 0.0
    %1284 = vmatpush1.msra.mxu0 0.0
    %1285 = vmatprep.subr.mxu0 0.0
    %1286 = vmatpush1.msra.mxu0 0.0
    %1287 = vmatprep.subr.mxu0 0.0
    %1288 = vmatpush1.msra.mxu0 0.0
    %1289 = vmatprep.subr.mxu0 0.0
    %1290 = vmatpush1.msra.mxu0 0.0
    %1291 = vmatprep.subr.mxu0 0.0
    %1292 = vmatpush1.msra.mxu0 0.0
    %1293 = vmatprep.subr.mxu0 0.0
    %1294 = vmatpush1.msra.mxu0 0.0
    %1295 = vmatprep.subr.mxu0 0.0
    %1296 = vmatpush1.msra.mxu0 %v1270
    %1297 = vmatprep.subr.mxu0 0.0
    %1298 = vmatpush1.msra.mxu0 %v1269
    %1299 = vmatprep.subr.mxu0 0.0
    %1300 = vmatpush1.msra.mxu0 %v1268
    %1301 = vmatprep.subr.mxu0 0.0
    %1302 = vmatpush1.msra.mxu0 %v1267
    %1303 = vmatprep.subr.mxu0 0.0
    %1304 = vmatpush2.msra.mxu0 0.0
    %1305 = vmatprep.subr.mxu0 0.0
    %1306 = vmatpush2.msra.mxu0 0.0
    %1307 = vmatprep.subr.mxu0 0.0
    %1308 = vmatpush2.msra.mxu0 0.0
    %1309 = vmatprep.subr.mxu0 0.0
    %1310 = vmatpush2.msra.mxu0 0.0
    %1311 = vmatprep.subr.mxu0 0.0
    %1312 = vmatpush2.msra.mxu0 0.0
    %1313 = vmatprep.subr.mxu0 0.0
    %1314 = vmatpush2.msra.mxu0 0.0
    %1315 = vmatprep.subr.mxu0 0.0
    %1316 = vmatpush2.msra.mxu0 0.0
    %1317 = vmatprep.subr.mxu0 0.0
    %1318 = vmatpush2.msra.mxu0 0.0
    %1319 = vmatprep.subr.mxu0 0.0
    %1320 = vmatpush2.msra.mxu0 0.0
    %1321 = vmatprep.subr.mxu0 0.0
    %1322 = vmatpush2.msra.mxu0 0.0
    %1323 = vmatprep.subr.mxu0 0.0
    %1324 = vmatpush2.msra.mxu0 0.0
    %1325 = vmatprep.subr.mxu0 0.0
    %1326 = vmatpush2.msra.mxu0 0.0
    %1327 = vmatprep.subr.mxu0 0.0
    %1328 = vmatpush2.msra.mxu0 0.0
    %1329 = vmatprep.subr.mxu0 0.0
    %1330 = vmatpush2.msra.mxu0 0.0
    %1331 = vmatprep.subr.mxu0 0.0
    %1332 = vmatpush2.msra.mxu0 0.0
    %1333 = vmatprep.subr.mxu0 0.0
    %1334 = vmatpush2.msra.mxu0 0.0
    %1335 = vmatprep.mubr.f32.mxu0 0.0
    %1336 = vmatmul.mubr.f32.gmra.mxu0 %v55
    %v1337 = vpop.f32.mrf.mxu0
    %v1338 = vadd.f32 0.0, %v1337
    %v1339 = vpop.f32.mrf.mxu0
    %1340 = vmatprep.mubr.f32.mxu0 0.0
    %1341 = vmatmul.mubr.f32.gmra.mxu0 %v58
    %v1342 = vpop.f32.mrf.mxu0
    %v1343 = vadd.f32 0.0, %v1342
    %v1344 = vpop.f32.mrf.mxu0
    %1345 = vdwg.mxu0
    %s1346 = scalar_lea.vmem %s4, 32
    %v1347 = vld [vmem:[%s1346] sm:$0xff]
    %v1348 = vld [vmem:[%s1346 + $0x8] sm:$0xff]
    %v1349 = vld [vmem:[%s1346 + $0x10] sm:$0xff]
    %v1350 = vld [vmem:[%s1346 + $0x18] sm:$0xff]
    %1351 = vmatprep.subr.mxu0 0.0
    %1352 = vmatpush1.msra.mxu0 0.0
    %1353 = vmatprep.subr.mxu0 0.0
    %1354 = vmatpush1.msra.mxu0 0.0
    %1355 = vmatprep.subr.mxu0 0.0
    %1356 = vmatpush1.msra.mxu0 0.0
    %1357 = vmatprep.subr.mxu0 0.0
    %1358 = vmatpush1.msra.mxu0 0.0
    %1359 = vmatprep.subr.mxu0 0.0
    %1360 = vmatpush1.msra.mxu0 0.0
    %1361 = vmatprep.subr.mxu0 0.0
    %1362 = vmatpush1.msra.mxu0 0.0
    %1363 = vmatprep.subr.mxu0 0.0
    %1364 = vmatpush1.msra.mxu0 0.0
    %1365 = vmatprep.subr.mxu0 0.0
    %1366 = vmatpush1.msra.mxu0 0.0
    %1367 = vmatprep.subr.mxu0 0.0
    %1368 = vmatpush1.msra.mxu0 0.0
    %1369 = vmatprep.subr.mxu0 0.0
    %1370 = vmatpush1.msra.mxu0 0.0
    %1371 = vmatprep.subr.mxu0 0.0
    %1372 = vmatpush1.msra.mxu0 0.0
    %1373 = vmatprep.subr.mxu0 0.0
    %1374 = vmatpush1.msra.mxu0 0.0
    %1375 = vmatprep.subr.mxu0 0.0
    %1376 = vmatpush1.msra.mxu0 %v1350
    %1377 = vmatprep.subr.mxu0 0.0
    %1378 = vmatpush1.msra.mxu0 %v1349
    %1379 = vmatprep.subr.mxu0 0.0
    %1380 = vmatpush1.msra.mxu0 %v1348
    %1381 = vmatprep.subr.mxu0 0.0
    %1382 = vmatpush1.msra.mxu0 %v1347
    %1383 = vmatprep.subr.mxu0 0.0
    %1384 = vmatpush2.msra.mxu0 0.0
    %1385 = vmatprep.subr.mxu0 0.0
    %1386 = vmatpush2.msra.mxu0 0.0
    %1387 = vmatprep.subr.mxu0 0.0
    %1388 = vmatpush2.msra.mxu0 0.0
    %1389 = vmatprep.subr.mxu0 0.0
    %1390 = vmatpush2.msra.mxu0 0.0
    %1391 = vmatprep.subr.mxu0 0.0
    %1392 = vmatpush2.msra.mxu0 0.0
    %1393 = vmatprep.subr.mxu0 0.0
    %1394 = vmatpush2.msra.mxu0 0.0
    %1395 = vmatprep.subr.mxu0 0.0
    %1396 = vmatpush2.msra.mxu0 0.0
    %1397 = vmatprep.subr.mxu0 0.0
    %1398 = vmatpush2.msra.mxu0 0.0
    %1399 = vmatprep.subr.mxu0 0.0
    %1400 = vmatpush2.msra.mxu0 0.0
    %1401 = vmatprep.subr.mxu0 0.0
    %1402 = vmatpush2.msra.mxu0 0.0
    %1403 = vmatprep.subr.mxu0 0.0
    %1404 = vmatpush2.msra.mxu0 0.0
    %1405 = vmatprep.subr.mxu0 0.0
    %1406 = vmatpush2.msra.mxu0 0.0
    %1407 = vmatprep.subr.mxu0 0.0
    %1408 = vmatpush2.msra.mxu0 0.0
    %1409 = vmatprep.subr.mxu0 0.0
    %1410 = vmatpush2.msra.mxu0 0.0
    %1411 = vmatprep.subr.mxu0 0.0
    %1412 = vmatpush2.msra.mxu0 0.0
    %1413 = vmatprep.subr.mxu0 0.0
    %1414 = vmatpush2.msra.mxu0 0.0
    %1415 = vmatprep.mubr.f32.mxu0 0.0
    %1416 = vmatmul.mubr.f32.gmra.mxu0 %v55
    %v1417 = vpop.f32.mrf.mxu0
    %v1418 = vadd.f32 0.0, %v1417
    %v1419 = vpop.f32.mrf.mxu0
    %1420 = vmatprep.mubr.f32.mxu0 0.0
    %1421 = vmatmul.mubr.f32.gmra.mxu0 %v58
    %v1422 = vpop.f32.mrf.mxu0
    %v1423 = vadd.f32 0.0, %v1422
    %v1424 = vpop.f32.mrf.mxu0
    %1425 = vdwg.mxu0
    %s1426 = scalar_lea.vmem %s5, 32
    %v1427 = vld [vmem:[%s1426] sm:$0xff]
    %v1428 = vld [vmem:[%s1426 + $0x8] sm:$0xff]
    %v1429 = vld [vmem:[%s1426 + $0x10] sm:$0xff]
    %v1430 = vld [vmem:[%s1426 + $0x18] sm:$0xff]
    %1431 = vmatprep.subr.mxu0 0.0
    %1432 = vmatpush1.msra.mxu0 0.0
    %1433 = vmatprep.subr.mxu0 0.0
    %1434 = vmatpush1.msra.mxu0 0.0
    %1435 = vmatprep.subr.mxu0 0.0
    %1436 = vmatpush1.msra.mxu0 0.0
    %1437 = vmatprep.subr.mxu0 0.0
    %1438 = vmatpush1.msra.mxu0 0.0
    %1439 = vmatprep.subr.mxu0 0.0
    %1440 = vmatpush1.msra.mxu0 0.0
    %1441 = vmatprep.subr.mxu0 0.0
    %1442 = vmatpush1.msra.mxu0 0.0
    %1443 = vmatprep.subr.mxu0 0.0
    %1444 = vmatpush1.msra.mxu0 0.0
    %1445 = vmatprep.subr.mxu0 0.0
    %1446 = vmatpush1.msra.mxu0 0.0
    %1447 = vmatprep.subr.mxu0 0.0
    %1448 = vmatpush1.msra.mxu0 0.0
    %1449 = vmatprep.subr.mxu0 0.0
    %1450 = vmatpush1.msra.mxu0 0.0
    %1451 = vmatprep.subr.mxu0 0.0
    %1452 = vmatpush1.msra.mxu0 0.0
    %1453 = vmatprep.subr.mxu0 0.0
    %1454 = vmatpush1.msra.mxu0 0.0
    %1455 = vmatprep.subr.mxu0 0.0
    %1456 = vmatpush1.msra.mxu0 %v1430
    %1457 = vmatprep.subr.mxu0 0.0
    %1458 = vmatpush1.msra.mxu0 %v1429
    %1459 = vmatprep.subr.mxu0 0.0
    %1460 = vmatpush1.msra.mxu0 %v1428
    %1461 = vmatprep.subr.mxu0 0.0
    %1462 = vmatpush1.msra.mxu0 %v1427
    %1463 = vmatprep.subr.mxu0 0.0
    %1464 = vmatpush2.msra.mxu0 0.0
    %1465 = vmatprep.subr.mxu0 0.0
    %1466 = vmatpush2.msra.mxu0 0.0
    %1467 = vmatprep.subr.mxu0 0.0
    %1468 = vmatpush2.msra.mxu0 0.0
    %1469 = vmatprep.subr.mxu0 0.0
    %1470 = vmatpush2.msra.mxu0 0.0
    %1471 = vmatprep.subr.mxu0 0.0
    %1472 = vmatpush2.msra.mxu0 0.0
    %1473 = vmatprep.subr.mxu0 0.0
    %1474 = vmatpush2.msra.mxu0 0.0
    %1475 = vmatprep.subr.mxu0 0.0
    %1476 = vmatpush2.msra.mxu0 0.0
    %1477 = vmatprep.subr.mxu0 0.0
    %1478 = vmatpush2.msra.mxu0 0.0
    %1479 = vmatprep.subr.mxu0 0.0
    %1480 = vmatpush2.msra.mxu0 0.0
    %1481 = vmatprep.subr.mxu0 0.0
    %1482 = vmatpush2.msra.mxu0 0.0
    %1483 = vmatprep.subr.mxu0 0.0
    %1484 = vmatpush2.msra.mxu0 0.0
    %1485 = vmatprep.subr.mxu0 0.0
    %1486 = vmatpush2.msra.mxu0 0.0
    %1487 = vmatprep.subr.mxu0 0.0
    %1488 = vmatpush2.msra.mxu0 0.0
    %1489 = vmatprep.subr.mxu0 0.0
    %1490 = vmatpush2.msra.mxu0 0.0
    %1491 = vmatprep.subr.mxu0 0.0
    %1492 = vmatpush2.msra.mxu0 0.0
    %1493 = vmatprep.subr.mxu0 0.0
    %1494 = vmatpush2.msra.mxu0 0.0
    %1495 = vmatprep.mubr.f32.mxu0 0.0
    %1496 = vmatmul.mubr.f32.gmra.mxu0 %v298
    %v1497 = vpop.f32.mrf.mxu0
    %v1498 = vadd.f32 0.0, %v1497
    %v1499 = vpop.f32.mrf.mxu0
    %1500 = vmatprep.mubr.f32.mxu0 0.0
    %1501 = vmatmul.mubr.f32.gmra.mxu0 %v301
    %v1502 = vpop.f32.mrf.mxu0
    %v1503 = vadd.f32 0.0, %v1502
    %v1504 = vpop.f32.mrf.mxu0
    %1505 = vdwg.mxu0
    %s1506 = scalar_lea.vmem %s6, 32
    %v1507 = vld [vmem:[%s1506] sm:$0xff]
    %v1508 = vld [vmem:[%s1506 + $0x8] sm:$0xff]
    %v1509 = vld [vmem:[%s1506 + $0x10] sm:$0xff]
    %v1510 = vld [vmem:[%s1506 + $0x18] sm:$0xff]
    %1511 = vmatprep.subr.mxu0 0.0
    %1512 = vmatpush1.msra.mxu0 0.0
    %1513 = vmatprep.subr.mxu0 0.0
    %1514 = vmatpush1.msra.mxu0 0.0
    %1515 = vmatprep.subr.mxu0 0.0
    %1516 = vmatpush1.msra.mxu0 0.0
    %1517 = vmatprep.subr.mxu0 0.0
    %1518 = vmatpush1.msra.mxu0 0.0
    %1519 = vmatprep.subr.mxu0 0.0
    %1520 = vmatpush1.msra.mxu0 0.0
    %1521 = vmatprep.subr.mxu0 0.0
    %1522 = vmatpush1.msra.mxu0 0.0
    %1523 = vmatprep.subr.mxu0 0.0
    %1524 = vmatpush1.msra.mxu0 0.0
    %1525 = vmatprep.subr.mxu0 0.0
    %1526 = vmatpush1.msra.mxu0 0.0
    %1527 = vmatprep.subr.mxu0 0.0
    %1528 = vmatpush1.msra.mxu0 0.0
    %1529 = vmatprep.subr.mxu0 0.0
    %1530 = vmatpush1.msra.mxu0 0.0
    %1531 = vmatprep.subr.mxu0 0.0
    %1532 = vmatpush1.msra.mxu0 0.0
    %1533 = vmatprep.subr.mxu0 0.0
    %1534 = vmatpush1.msra.mxu0 0.0
    %1535 = vmatprep.subr.mxu0 0.0
    %1536 = vmatpush1.msra.mxu0 %v1510
    %1537 = vmatprep.subr.mxu0 0.0
    %1538 = vmatpush1.msra.mxu0 %v1509
    %1539 = vmatprep.subr.mxu0 0.0
    %1540 = vmatpush1.msra.mxu0 %v1508
    %1541 = vmatprep.subr.mxu0 0.0
    %1542 = vmatpush1.msra.mxu0 %v1507
    %1543 = vmatprep.subr.mxu0 0.0
    %1544 = vmatpush2.msra.mxu0 0.0
    %1545 = vmatprep.subr.mxu0 0.0
    %1546 = vmatpush2.msra.mxu0 0.0
    %1547 = vmatprep.subr.mxu0 0.0
    %1548 = vmatpush2.msra.mxu0 0.0
    %1549 = vmatprep.subr.mxu0 0.0
    %1550 = vmatpush2.msra.mxu0 0.0
    %1551 = vmatprep.subr.mxu0 0.0
    %1552 = vmatpush2.msra.mxu0 0.0
    %1553 = vmatprep.subr.mxu0 0.0
    %1554 = vmatpush2.msra.mxu0 0.0
    %1555 = vmatprep.subr.mxu0 0.0
    %1556 = vmatpush2.msra.mxu0 0.0
    %1557 = vmatprep.subr.mxu0 0.0
    %1558 = vmatpush2.msra.mxu0 0.0
    %1559 = vmatprep.subr.mxu0 0.0
    %1560 = vmatpush2.msra.mxu0 0.0
    %1561 = vmatprep.subr.mxu0 0.0
    %1562 = vmatpush2.msra.mxu0 0.0
    %1563 = vmatprep.subr.mxu0 0.0
    %1564 = vmatpush2.msra.mxu0 0.0
    %1565 = vmatprep.subr.mxu0 0.0
    %1566 = vmatpush2.msra.mxu0 0.0
    %1567 = vmatprep.subr.mxu0 0.0
    %1568 = vmatpush2.msra.mxu0 0.0
    %1569 = vmatprep.subr.mxu0 0.0
    %1570 = vmatpush2.msra.mxu0 0.0
    %1571 = vmatprep.subr.mxu0 0.0
    %1572 = vmatpush2.msra.mxu0 0.0
    %1573 = vmatprep.subr.mxu0 0.0
    %1574 = vmatpush2.msra.mxu0 0.0
    %1575 = vmatprep.mubr.f32.mxu0 0.0
    %1576 = vmatmul.mubr.f32.gmra.mxu0 %v298
    %v1577 = vpop.f32.mrf.mxu0
    %v1578 = vadd.f32 0.0, %v1577
    %v1579 = vpop.f32.mrf.mxu0
    %1580 = vmatprep.mubr.f32.mxu0 0.0
    %1581 = vmatmul.mubr.f32.gmra.mxu0 %v301
    %v1582 = vpop.f32.mrf.mxu0
    %v1583 = vadd.f32 0.0, %v1582
    %v1584 = vpop.f32.mrf.mxu0
    %1585 = vdwg.mxu0
    %s1586 = scalar_lea.vmem %s7, 32
    %v1587 = vld [vmem:[%s1586] sm:$0xff]
    %v1588 = vld [vmem:[%s1586 + $0x8] sm:$0xff]
    %v1589 = vld [vmem:[%s1586 + $0x10] sm:$0xff]
    %v1590 = vld [vmem:[%s1586 + $0x18] sm:$0xff]
    %1591 = vmatprep.subr.mxu0 0.0
    %1592 = vmatpush1.msra.mxu0 0.0
    %1593 = vmatprep.subr.mxu0 0.0
    %1594 = vmatpush1.msra.mxu0 0.0
    %1595 = vmatprep.subr.mxu0 0.0
    %1596 = vmatpush1.msra.mxu0 0.0
    %1597 = vmatprep.subr.mxu0 0.0
    %1598 = vmatpush1.msra.mxu0 0.0
    %1599 = vmatprep.subr.mxu0 0.0
    %1600 = vmatpush1.msra.mxu0 0.0
    %1601 = vmatprep.subr.mxu0 0.0
    %1602 = vmatpush1.msra.mxu0 0.0
    %1603 = vmatprep.subr.mxu0 0.0
    %1604 = vmatpush1.msra.mxu0 0.0
    %1605 = vmatprep.subr.mxu0 0.0
    %1606 = vmatpush1.msra.mxu0 0.0
    %1607 = vmatprep.subr.mxu0 0.0
    %1608 = vmatpush1.msra.mxu0 0.0
    %1609 = vmatprep.subr.mxu0 0.0
    %1610 = vmatpush1.msra.mxu0 0.0
    %1611 = vmatprep.subr.mxu0 0.0
    %1612 = vmatpush1.msra.mxu0 0.0
    %1613 = vmatprep.subr.mxu0 0.0
    %1614 = vmatpush1.msra.mxu0 0.0
    %1615 = vmatprep.subr.mxu0 0.0
    %1616 = vmatpush1.msra.mxu0 %v1590
    %1617 = vmatprep.subr.mxu0 0.0
    %1618 = vmatpush1.msra.mxu0 %v1589
    %1619 = vmatprep.subr.mxu0 0.0
    %1620 = vmatpush1.msra.mxu0 %v1588
    %1621 = vmatprep.subr.mxu0 0.0
    %1622 = vmatpush1.msra.mxu0 %v1587
    %1623 = vmatprep.subr.mxu0 0.0
    %1624 = vmatpush2.msra.mxu0 0.0
    %1625 = vmatprep.subr.mxu0 0.0
    %1626 = vmatpush2.msra.mxu0 0.0
    %1627 = vmatprep.subr.mxu0 0.0
    %1628 = vmatpush2.msra.mxu0 0.0
    %1629 = vmatprep.subr.mxu0 0.0
    %1630 = vmatpush2.msra.mxu0 0.0
    %1631 = vmatprep.subr.mxu0 0.0
    %1632 = vmatpush2.msra.mxu0 0.0
    %1633 = vmatprep.subr.mxu0 0.0
    %1634 = vmatpush2.msra.mxu0 0.0
    %1635 = vmatprep.subr.mxu0 0.0
    %1636 = vmatpush2.msra.mxu0 0.0
    %1637 = vmatprep.subr.mxu0 0.0
    %1638 = vmatpush2.msra.mxu0 0.0
    %1639 = vmatprep.subr.mxu0 0.0
    %1640 = vmatpush2.msra.mxu0 0.0
    %1641 = vmatprep.subr.mxu0 0.0
    %1642 = vmatpush2.msra.mxu0 0.0
    %1643 = vmatprep.subr.mxu0 0.0
    %1644 = vmatpush2.msra.mxu0 0.0
    %1645 = vmatprep.subr.mxu0 0.0
    %1646 = vmatpush2.msra.mxu0 0.0
    %1647 = vmatprep.subr.mxu0 0.0
    %1648 = vmatpush2.msra.mxu0 0.0
    %1649 = vmatprep.subr.mxu0 0.0
    %1650 = vmatpush2.msra.mxu0 0.0
    %1651 = vmatprep.subr.mxu0 0.0
    %1652 = vmatpush2.msra.mxu0 0.0
    %1653 = vmatprep.subr.mxu0 0.0
    %1654 = vmatpush2.msra.mxu0 0.0
    %1655 = vmatprep.mubr.f32.mxu0 0.0
    %1656 = vmatmul.mubr.f32.gmra.mxu0 %v298
    %v1657 = vpop.f32.mrf.mxu0
    %v1658 = vadd.f32 0.0, %v1657
    %v1659 = vpop.f32.mrf.mxu0
    %1660 = vmatprep.mubr.f32.mxu0 0.0
    %1661 = vmatmul.mubr.f32.gmra.mxu0 %v301
    %v1662 = vpop.f32.mrf.mxu0
    %v1663 = vadd.f32 0.0, %v1662
    %v1664 = vpop.f32.mrf.mxu0
    %1665 = vdwg.mxu0
    %v1667 = vsel %vm536, %v1258, 0
    %v1670 = vsel %vm536, %v1578, 0
    %1672 = vmatprep.subr.mxu0 0.0
    %1673 = vmatpush1.xpose.msra.mxu0 0.0
    %1674 = vmatprep.subr.mxu0 0.0
    %1675 = vmatpush1.xpose.msra.mxu0 0.0
    %1676 = vmatprep.subr.mxu0 0.0
    %1677 = vmatpush1.xpose.msra.mxu0 0.0
    %1678 = vmatprep.subr.mxu0 0.0
    %1679 = vmatpush1.xpose.msra.mxu0 0.0
    %1680 = vmatprep.subr.mxu0 0.0
    %1681 = vmatpush1.xpose.msra.mxu0 0.0
    %1682 = vmatprep.subr.mxu0 0.0
    %1683 = vmatpush1.xpose.msra.mxu0 0.0
    %1684 = vmatprep.subr.mxu0 0.0
    %1685 = vmatpush1.xpose.msra.mxu0 0.0
    %1686 = vmatprep.subr.mxu0 0.0
    %1687 = vmatpush1.xpose.msra.mxu0 0.0
    %1688 = vmatprep.subr.mxu0 0.0
    %1689 = vmatpush1.xpose.msra.mxu0 0.0
    %1690 = vmatprep.subr.mxu0 0.0
    %1691 = vmatpush1.xpose.msra.mxu0 0.0
    %1692 = vmatprep.subr.mxu0 0.0
    %1693 = vmatpush1.xpose.msra.mxu0 0.0
    %1694 = vmatprep.subr.mxu0 0.0
    %1695 = vmatpush1.xpose.msra.mxu0 0.0
    %1696 = vmatprep.subr.mxu0 0.0
    %1697 = vmatpush1.xpose.msra.mxu0 0.0
    %1698 = vmatprep.subr.mxu0 0.0
    %1699 = vmatpush1.xpose.msra.mxu0 0.0
    %1700 = vmatprep.subr.mxu0 0.0
    %1701 = vmatpush1.xpose.msra.mxu0 0.0
    %1702 = vmatprep.subr.mxu0 0.0
    %1703 = vmatpush1.xpose.msra.mxu0 %v1670
    %1704 = vmatprep.subr.mxu0 0.0
    %1705 = vmatpush2.xpose.msra.mxu0 0.0
    %1706 = vmatprep.subr.mxu0 0.0
    %1707 = vmatpush2.xpose.msra.mxu0 0.0
    %1708 = vmatprep.subr.mxu0 0.0
    %1709 = vmatpush2.xpose.msra.mxu0 0.0
    %1710 = vmatprep.subr.mxu0 0.0
    %1711 = vmatpush2.xpose.msra.mxu0 0.0
    %1712 = vmatprep.subr.mxu0 0.0
    %1713 = vmatpush2.xpose.msra.mxu0 0.0
    %1714 = vmatprep.subr.mxu0 0.0
    %1715 = vmatpush2.xpose.msra.mxu0 0.0
    %1716 = vmatprep.subr.mxu0 0.0
    %1717 = vmatpush2.xpose.msra.mxu0 0.0
    %1718 = vmatprep.subr.mxu0 0.0
    %1719 = vmatpush2.xpose.msra.mxu0 0.0
    %1720 = vmatprep.subr.mxu0 0.0
    %1721 = vmatpush2.xpose.msra.mxu0 0.0
    %1722 = vmatprep.subr.mxu0 0.0
    %1723 = vmatpush2.xpose.msra.mxu0 0.0
    %1724 = vmatprep.subr.mxu0 0.0
    %1725 = vmatpush2.xpose.msra.mxu0 0.0
    %1726 = vmatprep.subr.mxu0 0.0
    %1727 = vmatpush2.xpose.msra.mxu0 0.0
    %1728 = vmatprep.subr.mxu0 0.0
    %1729 = vmatpush2.xpose.msra.mxu0 0.0
    %1730 = vmatprep.subr.mxu0 0.0
    %1731 = vmatpush2.xpose.msra.mxu0 0.0
    %1732 = vmatprep.subr.mxu0 0.0
    %1733 = vmatpush2.xpose.msra.mxu0 0.0
    %1734 = vmatprep.subr.mxu0 0.0
    %1735 = vmatpush2.xpose.msra.mxu0 0.0
    %1736 = vmatprep.mubr.f32.mxu0 0.0
    %1737 = vmatmul.mubr.f32.gmra.mxu0 %v1667
    %v1738 = vpop.f32.mrf.mxu0
    %v1739 = vadd.f32 0.0, %v1738
    %v1740 = vpop.f32.mrf.mxu0
    %1741 = vdwg.mxu0
    %v1743 = vsel %vm536, %v1263, 0
    %v1746 = vsel %vm536, %v1583, 0
    %1748 = vmatprep.subr.mxu0 0.0
    %1749 = vmatpush1.xpose.msra.mxu0 0.0
    %1750 = vmatprep.subr.mxu0 0.0
    %1751 = vmatpush1.xpose.msra.mxu0 0.0
    %1752 = vmatprep.subr.mxu0 0.0
    %1753 = vmatpush1.xpose.msra.mxu0 0.0
    %1754 = vmatprep.subr.mxu0 0.0
    %1755 = vmatpush1.xpose.msra.mxu0 0.0
    %1756 = vmatprep.subr.mxu0 0.0
    %1757 = vmatpush1.xpose.msra.mxu0 0.0
    %1758 = vmatprep.subr.mxu0 0.0
    %1759 = vmatpush1.xpose.msra.mxu0 0.0
    %1760 = vmatprep.subr.mxu0 0.0
    %1761 = vmatpush1.xpose.msra.mxu0 0.0
    %1762 = vmatprep.subr.mxu0 0.0
    %1763 = vmatpush1.xpose.msra.mxu0 0.0
    %1764 = vmatprep.subr.mxu0 0.0
    %1765 = vmatpush1.xpose.msra.mxu0 0.0
    %1766 = vmatprep.subr.mxu0 0.0
    %1767 = vmatpush1.xpose.msra.mxu0 0.0
    %1768 = vmatprep.subr.mxu0 0.0
    %1769 = vmatpush1.xpose.msra.mxu0 0.0
    %1770 = vmatprep.subr.mxu0 0.0
    %1771 = vmatpush1.xpose.msra.mxu0 0.0
    %1772 = vmatprep.subr.mxu0 0.0
    %1773 = vmatpush1.xpose.msra.mxu0 0.0
    %1774 = vmatprep.subr.mxu0 0.0
    %1775 = vmatpush1.xpose.msra.mxu0 0.0
    %1776 = vmatprep.subr.mxu0 0.0
    %1777 = vmatpush1.xpose.msra.mxu0 0.0
    %1778 = vmatprep.subr.mxu0 0.0
    %1779 = vmatpush1.xpose.msra.mxu0 %v1746
    %1780 = vmatprep.subr.mxu0 0.0
    %1781 = vmatpush2.xpose.msra.mxu0 0.0
    %1782 = vmatprep.subr.mxu0 0.0
    %1783 = vmatpush2.xpose.msra.mxu0 0.0
    %1784 = vmatprep.subr.mxu0 0.0
    %1785 = vmatpush2.xpose.msra.mxu0 0.0
    %1786 = vmatprep.subr.mxu0 0.0
    %1787 = vmatpush2.xpose.msra.mxu0 0.0
    %1788 = vmatprep.subr.mxu0 0.0
    %1789 = vmatpush2.xpose.msra.mxu0 0.0
    %1790 = vmatprep.subr.mxu0 0.0
    %1791 = vmatpush2.xpose.msra.mxu0 0.0
    %1792 = vmatprep.subr.mxu0 0.0
    %1793 = vmatpush2.xpose.msra.mxu0 0.0
    %1794 = vmatprep.subr.mxu0 0.0
    %1795 = vmatpush2.xpose.msra.mxu0 0.0
    %1796 = vmatprep.subr.mxu0 0.0
    %1797 = vmatpush2.xpose.msra.mxu0 0.0
    %1798 = vmatprep.subr.mxu0 0.0
    %1799 = vmatpush2.xpose.msra.mxu0 0.0
    %1800 = vmatprep.subr.mxu0 0.0
    %1801 = vmatpush2.xpose.msra.mxu0 0.0
    %1802 = vmatprep.subr.mxu0 0.0
    %1803 = vmatpush2.xpose.msra.mxu0 0.0
    %1804 = vmatprep.subr.mxu0 0.0
    %1805 = vmatpush2.xpose.msra.mxu0 0.0
    %1806 = vmatprep.subr.mxu0 0.0
    %1807 = vmatpush2.xpose.msra.mxu0 0.0
    %1808 = vmatprep.subr.mxu0 0.0
    %1809 = vmatpush2.xpose.msra.mxu0 0.0
    %1810 = vmatprep.subr.mxu0 0.0
    %1811 = vmatpush2.xpose.msra.mxu0 0.0
    %1812 = vmatprep.mubr.f32.mxu0 0.0
    %1813 = vmatmul.mubr.f32.gmra.mxu0 %v1743
    %v1814 = vpop.f32.mrf.mxu0
    %v1815 = vadd.f32 0.0, %v1814
    %v1816 = vpop.f32.mrf.mxu0
    %1817 = vdwg.mxu0
    %v1818 = vmul.f32 %v1739, 0.25
    %v1819 = vmul.f32 %v1815, 0.25
    %v1820 = vsel %vm691, %v1818, -inf
    %1821 = vmax.xlane.f32.xlu0 %v1820
    %v1822 = vpop.xlane.xlu0 %1821
    %v1823 = vsel %vm691, %v1819, -inf
    %1824 = vmax.xlane.f32.xlu0 %v1823
    %v1825 = vpop.xlane.xlu0 %1824
    %v1826 = vsub.f32 %v1818, %v1822
    %v1827 = vsub.f32 %v1819, %v1825
    %v1828 = vmul.f32 %v1826, 1.442695
    %v1829 = vpow.pop %v1828
    %v1830 = vmul.f32 %v1827, 1.442695
    %v1831 = vpow.pop %v1830
    %v1832 = vsel %vm691, %v1829, 0.0
    %1833 = vadd.xlane.f32.xlu0 %v1832
    %v1834 = vpop.xlane.xlu0 %1833
    %v1835 = vsel %vm691, %v1831, 0.0
    %1836 = vadd.xlane.f32.xlu0 %v1835
    %v1837 = vpop.xlane.xlu0 %1836
    %v1838 = vrcp.pop %v1834
    %v1839 = vrcp.pop %v1837
    %v1840 = vmul.f32 %v1829, %v1838
    %v1841 = vmul.f32 %v1831, %v1839
    %v1843 = vsel %vm691, %v1840, 0
    %1845 = vmatprep.subr.mxu0 0.0
    %1846 = vmatpush1.msra.mxu0 0.0
    %1847 = vmatprep.subr.mxu0 0.0
    %1848 = vmatpush1.msra.mxu0 0.0
    %1849 = vmatprep.subr.mxu0 0.0
    %1850 = vmatpush1.msra.mxu0 0.0
    %1851 = vmatprep.subr.mxu0 0.0
    %1852 = vmatpush1.msra.mxu0 0.0
    %1853 = vmatprep.subr.mxu0 0.0
    %1854 = vmatpush1.msra.mxu0 0.0
    %1855 = vmatprep.subr.mxu0 0.0
    %1856 = vmatpush1.msra.mxu0 0.0
    %1857 = vmatprep.subr.mxu0 0.0
    %1858 = vmatpush1.msra.mxu0 0.0
    %1859 = vmatprep.subr.mxu0 0.0
    %1860 = vmatpush1.msra.mxu0 0.0
    %1861 = vmatprep.subr.mxu0 0.0
    %1862 = vmatpush1.msra.mxu0 0.0
    %1863 = vmatprep.subr.mxu0 0.0
    %1864 = vmatpush1.msra.mxu0 0.0
    %1865 = vmatprep.subr.mxu0 0.0
    %1866 = vmatpush1.msra.mxu0 0.0
    %1867 = vmatprep.subr.mxu0 0.0
    %1868 = vmatpush1.msra.mxu0 0.0
    %1869 = vmatprep.subr.mxu0 0.0
    %1870 = vmatpush1.msra.mxu0 0.0
    %1871 = vmatprep.subr.mxu0 0.0
    %1872 = vmatpush1.msra.mxu0 0.0
    %1873 = vmatprep.subr.mxu0 0.0
    %1874 = vmatpush1.msra.mxu0 0.0
    %1875 = vmatprep.subr.mxu0 0.0
    %1876 = vmatpush1.msra.mxu0 %v1658
    %1877 = vmatprep.subr.mxu0 0.0
    %1878 = vmatpush2.msra.mxu0 0.0
    %1879 = vmatprep.subr.mxu0 0.0
    %1880 = vmatpush2.msra.mxu0 0.0
    %1881 = vmatprep.subr.mxu0 0.0
    %1882 = vmatpush2.msra.mxu0 0.0
    %1883 = vmatprep.subr.mxu0 0.0
    %1884 = vmatpush2.msra.mxu0 0.0
    %1885 = vmatprep.subr.mxu0 0.0
    %1886 = vmatpush2.msra.mxu0 0.0
    %1887 = vmatprep.subr.mxu0 0.0
    %1888 = vmatpush2.msra.mxu0 0.0
    %1889 = vmatprep.subr.mxu0 0.0
    %1890 = vmatpush2.msra.mxu0 0.0
    %1891 = vmatprep.subr.mxu0 0.0
    %1892 = vmatpush2.msra.mxu0 0.0
    %1893 = vmatprep.subr.mxu0 0.0
    %1894 = vmatpush2.msra.mxu0 0.0
    %1895 = vmatprep.subr.mxu0 0.0
    %1896 = vmatpush2.msra.mxu0 0.0
    %1897 = vmatprep.subr.mxu0 0.0
    %1898 = vmatpush2.msra.mxu0 0.0
    %1899 = vmatprep.subr.mxu0 0.0
    %1900 = vmatpush2.msra.mxu0 0.0
    %1901 = vmatprep.subr.mxu0 0.0
    %1902 = vmatpush2.msra.mxu0 0.0
    %1903 = vmatprep.subr.mxu0 0.0
    %1904 = vmatpush2.msra.mxu0 0.0
    %1905 = vmatprep.subr.mxu0 0.0
    %1906 = vmatpush2.msra.mxu0 0.0
    %1907 = vmatprep.subr.mxu0 0.0
    %1908 = vmatpush2.msra.mxu0 0.0
    %1909 = vmatprep.mubr.f32.mxu0 0.0
    %1910 = vmatmul.mubr.f32.gmra.mxu0 %v1843
    %v1911 = vpop.f32.mrf.mxu0
    %v1912 = vadd.f32 0.0, %v1911
    %v1913 = vpop.f32.mrf.mxu0
    %1914 = vdwg.mxu0
    %v1916 = vsel %vm691, %v1841, 0
    %1918 = vmatprep.subr.mxu0 0.0
    %1919 = vmatpush1.msra.mxu0 0.0
    %1920 = vmatprep.subr.mxu0 0.0
    %1921 = vmatpush1.msra.mxu0 0.0
    %1922 = vmatprep.subr.mxu0 0.0
    %1923 = vmatpush1.msra.mxu0 0.0
    %1924 = vmatprep.subr.mxu0 0.0
    %1925 = vmatpush1.msra.mxu0 0.0
    %1926 = vmatprep.subr.mxu0 0.0
    %1927 = vmatpush1.msra.mxu0 0.0
    %1928 = vmatprep.subr.mxu0 0.0
    %1929 = vmatpush1.msra.mxu0 0.0
    %1930 = vmatprep.subr.mxu0 0.0
    %1931 = vmatpush1.msra.mxu0 0.0
    %1932 = vmatprep.subr.mxu0 0.0
    %1933 = vmatpush1.msra.mxu0 0.0
    %1934 = vmatprep.subr.mxu0 0.0
    %1935 = vmatpush1.msra.mxu0 0.0
    %1936 = vmatprep.subr.mxu0 0.0
    %1937 = vmatpush1.msra.mxu0 0.0
    %1938 = vmatprep.subr.mxu0 0.0
    %1939 = vmatpush1.msra.mxu0 0.0
    %1940 = vmatprep.subr.mxu0 0.0
    %1941 = vmatpush1.msra.mxu0 0.0
    %1942 = vmatprep.subr.mxu0 0.0
    %1943 = vmatpush1.msra.mxu0 0.0
    %1944 = vmatprep.subr.mxu0 0.0
    %1945 = vmatpush1.msra.mxu0 0.0
    %1946 = vmatprep.subr.mxu0 0.0
    %1947 = vmatpush1.msra.mxu0 0.0
    %1948 = vmatprep.subr.mxu0 0.0
    %1949 = vmatpush1.msra.mxu0 %v1663
    %1950 = vmatprep.subr.mxu0 0.0
    %1951 = vmatpush2.msra.mxu0 0.0
    %1952 = vmatprep.subr.mxu0 0.0
    %1953 = vmatpush2.msra.mxu0 0.0
    %1954 = vmatprep.subr.mxu0 0.0
    %1955 = vmatpush2.msra.mxu0 0.0
    %1956 = vmatprep.subr.mxu0 0.0
    %1957 = vmatpush2.msra.mxu0 0.0
    %1958 = vmatprep.subr.mxu0 0.0
    %1959 = vmatpush2.msra.mxu0 0.0
    %1960 = vmatprep.subr.mxu0 0.0
    %1961 = vmatpush2.msra.mxu0 0.0
    %1962 = vmatprep.subr.mxu0 0.0
    %1963 = vmatpush2.msra.mxu0 0.0
    %1964 = vmatprep.subr.mxu0 0.0
    %1965 = vmatpush2.msra.mxu0 0.0
    %1966 = vmatprep.subr.mxu0 0.0
    %1967 = vmatpush2.msra.mxu0 0.0
    %1968 = vmatprep.subr.mxu0 0.0
    %1969 = vmatpush2.msra.mxu0 0.0
    %1970 = vmatprep.subr.mxu0 0.0
    %1971 = vmatpush2.msra.mxu0 0.0
    %1972 = vmatprep.subr.mxu0 0.0
    %1973 = vmatpush2.msra.mxu0 0.0
    %1974 = vmatprep.subr.mxu0 0.0
    %1975 = vmatpush2.msra.mxu0 0.0
    %1976 = vmatprep.subr.mxu0 0.0
    %1977 = vmatpush2.msra.mxu0 0.0
    %1978 = vmatprep.subr.mxu0 0.0
    %1979 = vmatpush2.msra.mxu0 0.0
    %1980 = vmatprep.subr.mxu0 0.0
    %1981 = vmatpush2.msra.mxu0 0.0
    %1982 = vmatprep.mubr.f32.mxu0 0.0
    %1983 = vmatmul.mubr.f32.gmra.mxu0 %v1916
    %v1984 = vpop.f32.mrf.mxu0
    %v1985 = vadd.f32 0.0, %v1984
    %v1986 = vpop.f32.mrf.mxu0
    %1987 = vdwg.mxu0
    %v1989 = vsel %vm536, %v1498, 0
    %v1992 = vsel %vm536, %v1338, 0
    %1994 = vmatprep.subr.mxu0 0.0
    %1995 = vmatpush1.xpose.msra.mxu0 0.0
    %1996 = vmatprep.subr.mxu0 0.0
    %1997 = vmatpush1.xpose.msra.mxu0 0.0
    %1998 = vmatprep.subr.mxu0 0.0
    %1999 = vmatpush1.xpose.msra.mxu0 0.0
    %2000 = vmatprep.subr.mxu0 0.0
    %2001 = vmatpush1.xpose.msra.mxu0 0.0
    %2002 = vmatprep.subr.mxu0 0.0
    %2003 = vmatpush1.xpose.msra.mxu0 0.0
    %2004 = vmatprep.subr.mxu0 0.0
    %2005 = vmatpush1.xpose.msra.mxu0 0.0
    %2006 = vmatprep.subr.mxu0 0.0
    %2007 = vmatpush1.xpose.msra.mxu0 0.0
    %2008 = vmatprep.subr.mxu0 0.0
    %2009 = vmatpush1.xpose.msra.mxu0 0.0
    %2010 = vmatprep.subr.mxu0 0.0
    %2011 = vmatpush1.xpose.msra.mxu0 0.0
    %2012 = vmatprep.subr.mxu0 0.0
    %2013 = vmatpush1.xpose.msra.mxu0 0.0
    %2014 = vmatprep.subr.mxu0 0.0
    %2015 = vmatpush1.xpose.msra.mxu0 0.0
    %2016 = vmatprep.subr.mxu0 0.0
    %2017 = vmatpush1.xpose.msra.mxu0 0.0
    %2018 = vmatprep.subr.mxu0 0.0
    %2019 = vmatpush1.xpose.msra.mxu0 0.0
    %2020 = vmatprep.subr.mxu0 0.0
    %2021 = vmatpush1.xpose.msra.mxu0 0.0
    %2022 = vmatprep.subr.mxu0 0.0
    %2023 = vmatpush1.xpose.msra.mxu0 0.0
    %2024 = vmatprep.subr.mxu0 0.0
    %2025 = vmatpush1.xpose.msra.mxu0 %v1992
    %2026 = vmatprep.subr.mxu0 0.0
    %2027 = vmatpush2.xpose.msra.mxu0 0.0
    %2028 = vmatprep.subr.mxu0 0.0
    %2029 = vmatpush2.xpose.msra.mxu0 0.0
    %2030 = vmatprep.subr.mxu0 0.0
    %2031 = vmatpush2.xpose.msra.mxu0 0.0
    %2032 = vmatprep.subr.mxu0 0.0
    %2033 = vmatpush2.xpose.msra.mxu0 0.0
    %2034 = vmatprep.subr.mxu0 0.0
    %2035 = vmatpush2.xpose.msra.mxu0 0.0
    %2036 = vmatprep.subr.mxu0 0.0
    %2037 = vmatpush2.xpose.msra.mxu0 0.0
    %2038 = vmatprep.subr.mxu0 0.0
    %2039 = vmatpush2.xpose.msra.mxu0 0.0
    %2040 = vmatprep.subr.mxu0 0.0
    %2041 = vmatpush2.xpose.msra.mxu0 0.0
    %2042 = vmatprep.subr.mxu0 0.0
    %2043 = vmatpush2.xpose.msra.mxu0 0.0
    %2044 = vmatprep.subr.mxu0 0.0
    %2045 = vmatpush2.xpose.msra.mxu0 0.0
    %2046 = vmatprep.subr.mxu0 0.0
    %2047 = vmatpush2.xpose.msra.mxu0 0.0
    %2048 = vmatprep.subr.mxu0 0.0
    %2049 = vmatpush2.xpose.msra.mxu0 0.0
    %2050 = vmatprep.subr.mxu0 0.0
    %2051 = vmatpush2.xpose.msra.mxu0 0.0
    %2052 = vmatprep.subr.mxu0 0.0
    %2053 = vmatpush2.xpose.msra.mxu0 0.0
    %2054 = vmatprep.subr.mxu0 0.0
    %2055 = vmatpush2.xpose.msra.mxu0 0.0
    %2056 = vmatprep.subr.mxu0 0.0
    %2057 = vmatpush2.xpose.msra.mxu0 0.0
    %2058 = vmatprep.mubr.f32.mxu0 0.0
    %2059 = vmatmul.mubr.f32.gmra.mxu0 %v1989
    %v2060 = vpop.f32.mrf.mxu0
    %v2061 = vadd.f32 0.0, %v2060
    %v2062 = vpop.f32.mrf.mxu0
    %2063 = vdwg.mxu0
    %v2065 = vsel %vm536, %v1503, 0
    %v2068 = vsel %vm536, %v1343, 0
    %2070 = vmatprep.subr.mxu0 0.0
    %2071 = vmatpush1.xpose.msra.mxu0 0.0
    %2072 = vmatprep.subr.mxu0 0.0
    %2073 = vmatpush1.xpose.msra.mxu0 0.0
    %2074 = vmatprep.subr.mxu0 0.0
    %2075 = vmatpush1.xpose.msra.mxu0 0.0
    %2076 = vmatprep.subr.mxu0 0.0
    %2077 = vmatpush1.xpose.msra.mxu0 0.0
    %2078 = vmatprep.subr.mxu0 0.0
    %2079 = vmatpush1.xpose.msra.mxu0 0.0
    %2080 = vmatprep.subr.mxu0 0.0
    %2081 = vmatpush1.xpose.msra.mxu0 0.0
    %2082 = vmatprep.subr.mxu0 0.0
    %2083 = vmatpush1.xpose.msra.mxu0 0.0
    %2084 = vmatprep.subr.mxu0 0.0
    %2085 = vmatpush1.xpose.msra.mxu0 0.0
    %2086 = vmatprep.subr.mxu0 0.0
    %2087 = vmatpush1.xpose.msra.mxu0 0.0
    %2088 = vmatprep.subr.mxu0 0.0
    %2089 = vmatpush1.xpose.msra.mxu0 0.0
    %2090 = vmatprep.subr.mxu0 0.0
    %2091 = vmatpush1.xpose.msra.mxu0 0.0
    %2092 = vmatprep.subr.mxu0 0.0
    %2093 = vmatpush1.xpose.msra.mxu0 0.0
    %2094 = vmatprep.subr.mxu0 0.0
    %2095 = vmatpush1.xpose.msra.mxu0 0.0
    %2096 = vmatprep.subr.mxu0 0.0
    %2097 = vmatpush1.xpose.msra.mxu0 0.0
    %2098 = vmatprep.subr.mxu0 0.0
    %2099 = vmatpush1.xpose.msra.mxu0 0.0
    %2100 = vmatprep.subr.mxu0 0.0
    %2101 = vmatpush1.xpose.msra.mxu0 %v2068
    %2102 = vmatprep.subr.mxu0 0.0
    %2103 = vmatpush2.xpose.msra.mxu0 0.0
    %2104 = vmatprep.subr.mxu0 0.0
    %2105 = vmatpush2.xpose.msra.mxu0 0.0
    %2106 = vmatprep.subr.mxu0 0.0
    %2107 = vmatpush2.xpose.msra.mxu0 0.0
    %2108 = vmatprep.subr.mxu0 0.0
    %2109 = vmatpush2.xpose.msra.mxu0 0.0
    %2110 = vmatprep.subr.mxu0 0.0
    %2111 = vmatpush2.xpose.msra.mxu0 0.0
    %2112 = vmatprep.subr.mxu0 0.0
    %2113 = vmatpush2.xpose.msra.mxu0 0.0
    %2114 = vmatprep.subr.mxu0 0.0
    %2115 = vmatpush2.xpose.msra.mxu0 0.0
    %2116 = vmatprep.subr.mxu0 0.0
    %2117 = vmatpush2.xpose.msra.mxu0 0.0
    %2118 = vmatprep.subr.mxu0 0.0
    %2119 = vmatpush2.xpose.msra.mxu0 0.0
    %2120 = vmatprep.subr.mxu0 0.0
    %2121 = vmatpush2.xpose.msra.mxu0 0.0
    %2122 = vmatprep.subr.mxu0 0.0
    %2123 = vmatpush2.xpose.msra.mxu0 0.0
    %2124 = vmatprep.subr.mxu0 0.0
    %2125 = vmatpush2.xpose.msra.mxu0 0.0
    %2126 = vmatprep.subr.mxu0 0.0
    %2127 = vmatpush2.xpose.msra.mxu0 0.0
    %2128 = vmatprep.subr.mxu0 0.0
    %2129 = vmatpush2.xpose.msra.mxu0 0.0
    %2130 = vmatprep.subr.mxu0 0.0
    %2131 = vmatpush2.xpose.msra.mxu0 0.0
    %2132 = vmatprep.subr.mxu0 0.0
    %2133 = vmatpush2.xpose.msra.mxu0 0.0
    %2134 = vmatprep.mubr.f32.mxu0 0.0
    %2135 = vmatmul.mubr.f32.gmra.mxu0 %v2065
    %v2136 = vpop.f32.mrf.mxu0
    %v2137 = vadd.f32 0.0, %v2136
    %v2138 = vpop.f32.mrf.mxu0
    %2139 = vdwg.mxu0
    %v2140 = vmul.f32 %v2061, 0.25
    %v2141 = vmul.f32 %v2137, 0.25
    %v2142 = vsel %vm691, %v2140, -inf
    %2143 = vmax.xlane.f32.xlu0 %v2142
    %v2144 = vpop.xlane.xlu0 %2143
    %v2145 = vsel %vm691, %v2141, -inf
    %2146 = vmax.xlane.f32.xlu0 %v2145
    %v2147 = vpop.xlane.xlu0 %2146
    %v2148 = vsub.f32 %v2140, %v2144
    %v2149 = vsub.f32 %v2141, %v2147
    %v2150 = vmul.f32 %v2148, 1.442695
    %v2151 = vpow.pop %v2150
    %v2152 = vmul.f32 %v2149, 1.442695
    %v2153 = vpow.pop %v2152
    %v2154 = vsel %vm691, %v2151, 0.0
    %2155 = vadd.xlane.f32.xlu0 %v2154
    %v2156 = vpop.xlane.xlu0 %2155
    %v2157 = vsel %vm691, %v2153, 0.0
    %2158 = vadd.xlane.f32.xlu0 %v2157
    %v2159 = vpop.xlane.xlu0 %2158
    %v2160 = vrcp.pop %v2156
    %v2161 = vrcp.pop %v2159
    %v2162 = vmul.f32 %v2151, %v2160
    %v2163 = vmul.f32 %v2153, %v2161
    %v2165 = vsel %vm691, %v2162, 0
    %2167 = vmatprep.subr.mxu0 0.0
    %2168 = vmatpush1.msra.mxu0 0.0
    %2169 = vmatprep.subr.mxu0 0.0
    %2170 = vmatpush1.msra.mxu0 0.0
    %2171 = vmatprep.subr.mxu0 0.0
    %2172 = vmatpush1.msra.mxu0 0.0
    %2173 = vmatprep.subr.mxu0 0.0
    %2174 = vmatpush1.msra.mxu0 0.0
    %2175 = vmatprep.subr.mxu0 0.0
    %2176 = vmatpush1.msra.mxu0 0.0
    %2177 = vmatprep.subr.mxu0 0.0
    %2178 = vmatpush1.msra.mxu0 0.0
    %2179 = vmatprep.subr.mxu0 0.0
    %2180 = vmatpush1.msra.mxu0 0.0
    %2181 = vmatprep.subr.mxu0 0.0
    %2182 = vmatpush1.msra.mxu0 0.0
    %2183 = vmatprep.subr.mxu0 0.0
    %2184 = vmatpush1.msra.mxu0 0.0
    %2185 = vmatprep.subr.mxu0 0.0
    %2186 = vmatpush1.msra.mxu0 0.0
    %2187 = vmatprep.subr.mxu0 0.0
    %2188 = vmatpush1.msra.mxu0 0.0
    %2189 = vmatprep.subr.mxu0 0.0
    %2190 = vmatpush1.msra.mxu0 0.0
    %2191 = vmatprep.subr.mxu0 0.0
    %2192 = vmatpush1.msra.mxu0 0.0
    %2193 = vmatprep.subr.mxu0 0.0
    %2194 = vmatpush1.msra.mxu0 0.0
    %2195 = vmatprep.subr.mxu0 0.0
    %2196 = vmatpush1.msra.mxu0 0.0
    %2197 = vmatprep.subr.mxu0 0.0
    %2198 = vmatpush1.msra.mxu0 %v1418
    %2199 = vmatprep.subr.mxu0 0.0
    %2200 = vmatpush2.msra.mxu0 0.0
    %2201 = vmatprep.subr.mxu0 0.0
    %2202 = vmatpush2.msra.mxu0 0.0
    %2203 = vmatprep.subr.mxu0 0.0
    %2204 = vmatpush2.msra.mxu0 0.0
    %2205 = vmatprep.subr.mxu0 0.0
    %2206 = vmatpush2.msra.mxu0 0.0
    %2207 = vmatprep.subr.mxu0 0.0
    %2208 = vmatpush2.msra.mxu0 0.0
    %2209 = vmatprep.subr.mxu0 0.0
    %2210 = vmatpush2.msra.mxu0 0.0
    %2211 = vmatprep.subr.mxu0 0.0
    %2212 = vmatpush2.msra.mxu0 0.0
    %2213 = vmatprep.subr.mxu0 0.0
    %2214 = vmatpush2.msra.mxu0 0.0
    %2215 = vmatprep.subr.mxu0 0.0
    %2216 = vmatpush2.msra.mxu0 0.0
    %2217 = vmatprep.subr.mxu0 0.0
    %2218 = vmatpush2.msra.mxu0 0.0
    %2219 = vmatprep.subr.mxu0 0.0
    %2220 = vmatpush2.msra.mxu0 0.0
    %2221 = vmatprep.subr.mxu0 0.0
    %2222 = vmatpush2.msra.mxu0 0.0
    %2223 = vmatprep.subr.mxu0 0.0
    %2224 = vmatpush2.msra.mxu0 0.0
    %2225 = vmatprep.subr.mxu0 0.0
    %2226 = vmatpush2.msra.mxu0 0.0
    %2227 = vmatprep.subr.mxu0 0.0
    %2228 = vmatpush2.msra.mxu0 0.0
    %2229 = vmatprep.subr.mxu0 0.0
    %2230 = vmatpush2.msra.mxu0 0.0
    %2231 = vmatprep.mubr.f32.mxu0 0.0
    %2232 = vmatmul.mubr.f32.gmra.mxu0 %v2165
    %v2233 = vpop.f32.mrf.mxu0
    %v2234 = vadd.f32 0.0, %v2233
    %v2235 = vpop.f32.mrf.mxu0
    %2236 = vdwg.mxu0
    %v2238 = vsel %vm691, %v2163, 0
    %2240 = vmatprep.subr.mxu0 0.0
    %2241 = vmatpush1.msra.mxu0 0.0
    %2242 = vmatprep.subr.mxu0 0.0
    %2243 = vmatpush1.msra.mxu0 0.0
    %2244 = vmatprep.subr.mxu0 0.0
    %2245 = vmatpush1.msra.mxu0 0.0
    %2246 = vmatprep.subr.mxu0 0.0
    %2247 = vmatpush1.msra.mxu0 0.0
    %2248 = vmatprep.subr.mxu0 0.0
    %2249 = vmatpush1.msra.mxu0 0.0
    %2250 = vmatprep.subr.mxu0 0.0
    %2251 = vmatpush1.msra.mxu0 0.0
    %2252 = vmatprep.subr.mxu0 0.0
    %2253 = vmatpush1.msra.mxu0 0.0
    %2254 = vmatprep.subr.mxu0 0.0
    %2255 = vmatpush1.msra.mxu0 0.0
    %2256 = vmatprep.subr.mxu0 0.0
    %2257 = vmatpush1.msra.mxu0 0.0
    %2258 = vmatprep.subr.mxu0 0.0
    %2259 = vmatpush1.msra.mxu0 0.0
    %2260 = vmatprep.subr.mxu0 0.0
    %2261 = vmatpush1.msra.mxu0 0.0
    %2262 = vmatprep.subr.mxu0 0.0
    %2263 = vmatpush1.msra.mxu0 0.0
    %2264 = vmatprep.subr.mxu0 0.0
    %2265 = vmatpush1.msra.mxu0 0.0
    %2266 = vmatprep.subr.mxu0 0.0
    %2267 = vmatpush1.msra.mxu0 0.0
    %2268 = vmatprep.subr.mxu0 0.0
    %2269 = vmatpush1.msra.mxu0 0.0
    %2270 = vmatprep.subr.mxu0 0.0
    %2271 = vmatpush1.msra.mxu0 %v1423
    %2272 = vmatprep.subr.mxu0 0.0
    %2273 = vmatpush2.msra.mxu0 0.0
    %2274 = vmatprep.subr.mxu0 0.0
    %2275 = vmatpush2.msra.mxu0 0.0
    %2276 = vmatprep.subr.mxu0 0.0
    %2277 = vmatpush2.msra.mxu0 0.0
    %2278 = vmatprep.subr.mxu0 0.0
    %2279 = vmatpush2.msra.mxu0 0.0
    %2280 = vmatprep.subr.mxu0 0.0
    %2281 = vmatpush2.msra.mxu0 0.0
    %2282 = vmatprep.subr.mxu0 0.0
    %2283 = vmatpush2.msra.mxu0 0.0
    %2284 = vmatprep.subr.mxu0 0.0
    %2285 = vmatpush2.msra.mxu0 0.0
    %2286 = vmatprep.subr.mxu0 0.0
    %2287 = vmatpush2.msra.mxu0 0.0
    %2288 = vmatprep.subr.mxu0 0.0
    %2289 = vmatpush2.msra.mxu0 0.0
    %2290 = vmatprep.subr.mxu0 0.0
    %2291 = vmatpush2.msra.mxu0 0.0
    %2292 = vmatprep.subr.mxu0 0.0
    %2293 = vmatpush2.msra.mxu0 0.0
    %2294 = vmatprep.subr.mxu0 0.0
    %2295 = vmatpush2.msra.mxu0 0.0
    %2296 = vmatprep.subr.mxu0 0.0
    %2297 = vmatpush2.msra.mxu0 0.0
    %2298 = vmatprep.subr.mxu0 0.0
    %2299 = vmatpush2.msra.mxu0 0.0
    %2300 = vmatprep.subr.mxu0 0.0
    %2301 = vmatpush2.msra.mxu0 0.0
    %2302 = vmatprep.subr.mxu0 0.0
    %2303 = vmatpush2.msra.mxu0 0.0
    %2304 = vmatprep.mubr.f32.mxu0 0.0
    %2305 = vmatmul.mubr.f32.gmra.mxu0 %v2238
    %v2306 = vpop.f32.mrf.mxu0
    %v2307 = vadd.f32 0.0, %v2306
    %v2308 = vpop.f32.mrf.mxu0
    %2309 = vdwg.mxu0
    %s2310 = scalar_lea.vmem %s8, 16
    %v2311 = vld [vmem:[%s2310] sm:$0xff]
    %v2312 = vld [vmem:[%s2310 + $0x8] sm:$0xff]
    %v2314 = vsel %vm536, %v1912, 0
    %v2317 = vsel %vm536, %v1985, 0
    %2319 = vmatprep.subr.mxu0 0.0
    %2320 = vmatpush1.msra.mxu0 0.0
    %2321 = vmatprep.subr.mxu0 0.0
    %2322 = vmatpush1.msra.mxu0 0.0
    %2323 = vmatprep.subr.mxu0 0.0
    %2324 = vmatpush1.msra.mxu0 0.0
    %2325 = vmatprep.subr.mxu0 0.0
    %2326 = vmatpush1.msra.mxu0 0.0
    %2327 = vmatprep.subr.mxu0 0.0
    %2328 = vmatpush1.msra.mxu0 0.0
    %2329 = vmatprep.subr.mxu0 0.0
    %2330 = vmatpush1.msra.mxu0 0.0
    %2331 = vmatprep.subr.mxu0 0.0
    %2332 = vmatpush1.msra.mxu0 0.0
    %2333 = vmatprep.subr.mxu0 0.0
    %2334 = vmatpush1.msra.mxu0 0.0
    %2335 = vmatprep.subr.mxu0 0.0
    %2336 = vmatpush1.msra.mxu0 0.0
    %2337 = vmatprep.subr.mxu0 0.0
    %2338 = vmatpush1.msra.mxu0 0.0
    %2339 = vmatprep.subr.mxu0 0.0
    %2340 = vmatpush1.msra.mxu0 0.0
    %2341 = vmatprep.subr.mxu0 0.0
    %2342 = vmatpush1.msra.mxu0 0.0
    %2343 = vmatprep.subr.mxu0 0.0
    %2344 = vmatpush1.msra.mxu0 0.0
    %2345 = vmatprep.subr.mxu0 0.0
    %2346 = vmatpush1.msra.mxu0 0.0
    %2347 = vmatprep.subr.mxu0 0.0
    %2348 = vmatpush1.msra.mxu0 %v2312
    %2349 = vmatprep.subr.mxu0 0.0
    %2350 = vmatpush1.msra.mxu0 %v2311
    %2351 = vmatprep.subr.mxu0 0.0
    %2352 = vmatpush2.msra.mxu0 0.0
    %2353 = vmatprep.subr.mxu0 0.0
    %2354 = vmatpush2.msra.mxu0 0.0
    %2355 = vmatprep.subr.mxu0 0.0
    %2356 = vmatpush2.msra.mxu0 0.0
    %2357 = vmatprep.subr.mxu0 0.0
    %2358 = vmatpush2.msra.mxu0 0.0
    %2359 = vmatprep.subr.mxu0 0.0
    %2360 = vmatpush2.msra.mxu0 0.0
    %2361 = vmatprep.subr.mxu0 0.0
    %2362 = vmatpush2.msra.mxu0 0.0
    %2363 = vmatprep.subr.mxu0 0.0
    %2364 = vmatpush2.msra.mxu0 0.0
    %2365 = vmatprep.subr.mxu0 0.0
    %2366 = vmatpush2.msra.mxu0 0.0
    %2367 = vmatprep.subr.mxu0 0.0
    %2368 = vmatpush2.msra.mxu0 0.0
    %2369 = vmatprep.subr.mxu0 0.0
    %2370 = vmatpush2.msra.mxu0 0.0
    %2371 = vmatprep.subr.mxu0 0.0
    %2372 = vmatpush2.msra.mxu0 0.0
    %2373 = vmatprep.subr.mxu0 0.0
    %2374 = vmatpush2.msra.mxu0 0.0
    %2375 = vmatprep.subr.mxu0 0.0
    %2376 = vmatpush2.msra.mxu0 0.0
    %2377 = vmatprep.subr.mxu0 0.0
    %2378 = vmatpush2.msra.mxu0 0.0
    %2379 = vmatprep.subr.mxu0 0.0
    %2380 = vmatpush2.msra.mxu0 0.0
    %2381 = vmatprep.subr.mxu0 0.0
    %2382 = vmatpush2.msra.mxu0 0.0
    %2383 = vmatprep.mubr.f32.mxu0 0.0
    %2384 = vmatmul.mubr.f32.gmra.mxu0 %v2314
    %v2385 = vpop.f32.mrf.mxu0
    %v2386 = vadd.f32 0.0, %v2385
    %v2387 = vpop.f32.mrf.mxu0
    %2388 = vmatprep.mubr.f32.mxu0 0.0
    %2389 = vmatmul.mubr.f32.gmra.mxu0 %v2317
    %v2390 = vpop.f32.mrf.mxu0
    %v2391 = vadd.f32 0.0, %v2390
    %v2392 = vpop.f32.mrf.mxu0
    %2393 = vdwg.mxu0
    %v2395 = vsel %vm536, %v784, 0
    %v2398 = vsel %vm536, %v857, 0
    %2400 = vmatprep.subr.mxu0 0.0
    %2401 = vmatpush1.msra.mxu0 0.0
    %2402 = vmatprep.subr.mxu0 0.0
    %2403 = vmatpush1.msra.mxu0 0.0
    %2404 = vmatprep.subr.mxu0 0.0
    %2405 = vmatpush1.msra.mxu0 0.0
    %2406 = vmatprep.subr.mxu0 0.0
    %2407 = vmatpush1.msra.mxu0 0.0
    %2408 = vmatprep.subr.mxu0 0.0
    %2409 = vmatpush1.msra.mxu0 0.0
    %2410 = vmatprep.subr.mxu0 0.0
    %2411 = vmatpush1.msra.mxu0 0.0
    %2412 = vmatprep.subr.mxu0 0.0
    %2413 = vmatpush1.msra.mxu0 0.0
    %2414 = vmatprep.subr.mxu0 0.0
    %2415 = vmatpush1.msra.mxu0 0.0
    %2416 = vmatprep.subr.mxu0 0.0
    %2417 = vmatpush1.msra.mxu0 0.0
    %2418 = vmatprep.subr.mxu0 0.0
    %2419 = vmatpush1.msra.mxu0 0.0
    %2420 = vmatprep.subr.mxu0 0.0
    %2421 = vmatpush1.msra.mxu0 0.0
    %2422 = vmatprep.subr.mxu0 0.0
    %2423 = vmatpush1.msra.mxu0 0.0
    %2424 = vmatprep.subr.mxu0 0.0
    %2425 = vmatpush1.msra.mxu0 0.0
    %2426 = vmatprep.subr.mxu0 0.0
    %2427 = vmatpush1.msra.mxu0 0.0
    %2428 = vmatprep.subr.mxu0 0.0
    %2429 = vmatpush1.msra.mxu0 %v1183
    %2430 = vmatprep.subr.mxu0 0.0
    %2431 = vmatpush1.msra.mxu0 %v1182
    %2432 = vmatprep.subr.mxu0 0.0
    %2433 = vmatpush2.msra.mxu0 0.0
    %2434 = vmatprep.subr.mxu0 0.0
    %2435 = vmatpush2.msra.mxu0 0.0
    %2436 = vmatprep.subr.mxu0 0.0
    %2437 = vmatpush2.msra.mxu0 0.0
    %2438 = vmatprep.subr.mxu0 0.0
    %2439 = vmatpush2.msra.mxu0 0.0
    %2440 = vmatprep.subr.mxu0 0.0
    %2441 = vmatpush2.msra.mxu0 0.0
    %2442 = vmatprep.subr.mxu0 0.0
    %2443 = vmatpush2.msra.mxu0 0.0
    %2444 = vmatprep.subr.mxu0 0.0
    %2445 = vmatpush2.msra.mxu0 0.0
    %2446 = vmatprep.subr.mxu0 0.0
    %2447 = vmatpush2.msra.mxu0 0.0
    %2448 = vmatprep.subr.mxu0 0.0
    %2449 = vmatpush2.msra.mxu0 0.0
    %2450 = vmatprep.subr.mxu0 0.0
    %2451 = vmatpush2.msra.mxu0 0.0
    %2452 = vmatprep.subr.mxu0 0.0
    %2453 = vmatpush2.msra.mxu0 0.0
    %2454 = vmatprep.subr.mxu0 0.0
    %2455 = vmatpush2.msra.mxu0 0.0
    %2456 = vmatprep.subr.mxu0 0.0
    %2457 = vmatpush2.msra.mxu0 0.0
    %2458 = vmatprep.subr.mxu0 0.0
    %2459 = vmatpush2.msra.mxu0 0.0
    %2460 = vmatprep.subr.mxu0 0.0
    %2461 = vmatpush2.msra.mxu0 0.0
    %2462 = vmatprep.subr.mxu0 0.0
    %2463 = vmatpush2.msra.mxu0 0.0
    %2464 = vmatprep.mubr.f32.mxu0 0.0
    %2465 = vmatmul.mubr.f32.gmra.mxu0 %v2395
    %v2466 = vpop.f32.mrf.mxu0
    %v2467 = vadd.f32 %v2386, %v2466
    %v2468 = vpop.f32.mrf.mxu0
    %2469 = vmatprep.mubr.f32.mxu0 0.0
    %2470 = vmatmul.mubr.f32.gmra.mxu0 %v2398
    %v2471 = vpop.f32.mrf.mxu0
    %v2472 = vadd.f32 %v2391, %v2471
    %v2473 = vpop.f32.mrf.mxu0
    %2474 = vdwg.mxu0
    %s2475 = scalar_lea.vmem %s10, 16
    %v2476 = vld [vmem:[%s2475] sm:$0xff]
    %v2477 = vld [vmem:[%s2475 + $0x8] sm:$0xff]
    %v2479 = vsel %vm536, %v2234, 0
    %v2482 = vsel %vm536, %v2307, 0
    %2484 = vmatprep.subr.mxu0 0.0
    %2485 = vmatpush1.msra.mxu0 0.0
    %2486 = vmatprep.subr.mxu0 0.0
    %2487 = vmatpush1.msra.mxu0 0.0
    %2488 = vmatprep.subr.mxu0 0.0
    %2489 = vmatpush1.msra.mxu0 0.0
    %2490 = vmatprep.subr.mxu0 0.0
    %2491 = vmatpush1.msra.mxu0 0.0
    %2492 = vmatprep.subr.mxu0 0.0
    %2493 = vmatpush1.msra.mxu0 0.0
    %2494 = vmatprep.subr.mxu0 0.0
    %2495 = vmatpush1.msra.mxu0 0.0
    %2496 = vmatprep.subr.mxu0 0.0
    %2497 = vmatpush1.msra.mxu0 0.0
    %2498 = vmatprep.subr.mxu0 0.0
    %2499 = vmatpush1.msra.mxu0 0.0
    %2500 = vmatprep.subr.mxu0 0.0
    %2501 = vmatpush1.msra.mxu0 0.0
    %2502 = vmatprep.subr.mxu0 0.0
    %2503 = vmatpush1.msra.mxu0 0.0
    %2504 = vmatprep.subr.mxu0 0.0
    %2505 = vmatpush1.msra.mxu0 0.0
    %2506 = vmatprep.subr.mxu0 0.0
    %2507 = vmatpush1.msra.mxu0 0.0
    %2508 = vmatprep.subr.mxu0 0.0
    %2509 = vmatpush1.msra.mxu0 0.0
    %2510 = vmatprep.subr.mxu0 0.0
    %2511 = vmatpush1.msra.mxu0 0.0
    %2512 = vmatprep.subr.mxu0 0.0
    %2513 = vmatpush1.msra.mxu0 %v2477
    %2514 = vmatprep.subr.mxu0 0.0
    %2515 = vmatpush1.msra.mxu0 %v2476
    %2516 = vmatprep.subr.mxu0 0.0
    %2517 = vmatpush2.msra.mxu0 0.0
    %2518 = vmatprep.subr.mxu0 0.0
    %2519 = vmatpush2.msra.mxu0 0.0
    %2520 = vmatprep.subr.mxu0 0.0
    %2521 = vmatpush2.msra.mxu0 0.0
    %2522 = vmatprep.subr.mxu0 0.0
    %2523 = vmatpush2.msra.mxu0 0.0
    %2524 = vmatprep.subr.mxu0 0.0
    %2525 = vmatpush2.msra.mxu0 0.0
    %2526 = vmatprep.subr.mxu0 0.0
    %2527 = vmatpush2.msra.mxu0 0.0
    %2528 = vmatprep.subr.mxu0 0.0
    %2529 = vmatpush2.msra.mxu0 0.0
    %2530 = vmatprep.subr.mxu0 0.0
    %2531 = vmatpush2.msra.mxu0 0.0
    %2532 = vmatprep.subr.mxu0 0.0
    %2533 = vmatpush2.msra.mxu0 0.0
    %2534 = vmatprep.subr.mxu0 0.0
    %2535 = vmatpush2.msra.mxu0 0.0
    %2536 = vmatprep.subr.mxu0 0.0
    %2537 = vmatpush2.msra.mxu0 0.0
    %2538 = vmatprep.subr.mxu0 0.0
    %2539 = vmatpush2.msra.mxu0 0.0
    %2540 = vmatprep.subr.mxu0 0.0
    %2541 = vmatpush2.msra.mxu0 0.0
    %2542 = vmatprep.subr.mxu0 0.0
    %2543 = vmatpush2.msra.mxu0 0.0
    %2544 = vmatprep.subr.mxu0 0.0
    %2545 = vmatpush2.msra.mxu0 0.0
    %2546 = vmatprep.subr.mxu0 0.0
    %2547 = vmatpush2.msra.mxu0 0.0
    %2548 = vmatprep.mubr.f32.mxu0 0.0
    %2549 = vmatmul.mubr.f32.gmra.mxu0 %v2479
    %v2550 = vpop.f32.mrf.mxu0
    %v2551 = vadd.f32 0.0, %v2550
    %v2552 = vpop.f32.mrf.mxu0
    %2553 = vmatprep.mubr.f32.mxu0 0.0
    %2554 = vmatmul.mubr.f32.gmra.mxu0 %v2482
    %v2555 = vpop.f32.mrf.mxu0
    %v2556 = vadd.f32 0.0, %v2555
    %v2557 = vpop.f32.mrf.mxu0
    %2558 = vdwg.mxu0
    %v2560 = vsel %vm536, %v1106, 0
    %v2563 = vsel %vm536, %v1179, 0
    %2565 = vmatprep.subr.mxu0 0.0
    %2566 = vmatpush1.msra.mxu0 0.0
    %2567 = vmatprep.subr.mxu0 0.0
    %2568 = vmatpush1.msra.mxu0 0.0
    %2569 = vmatprep.subr.mxu0 0.0
    %2570 = vmatpush1.msra.mxu0 0.0
    %2571 = vmatprep.subr.mxu0 0.0
    %2572 = vmatpush1.msra.mxu0 0.0
    %2573 = vmatprep.subr.mxu0 0.0
    %2574 = vmatpush1.msra.mxu0 0.0
    %2575 = vmatprep.subr.mxu0 0.0
    %2576 = vmatpush1.msra.mxu0 0.0
    %2577 = vmatprep.subr.mxu0 0.0
    %2578 = vmatpush1.msra.mxu0 0.0
    %2579 = vmatprep.subr.mxu0 0.0
    %2580 = vmatpush1.msra.mxu0 0.0
    %2581 = vmatprep.subr.mxu0 0.0
    %2582 = vmatpush1.msra.mxu0 0.0
    %2583 = vmatprep.subr.mxu0 0.0
    %2584 = vmatpush1.msra.mxu0 0.0
    %2585 = vmatprep.subr.mxu0 0.0
    %2586 = vmatpush1.msra.mxu0 0.0
    %2587 = vmatprep.subr.mxu0 0.0
    %2588 = vmatpush1.msra.mxu0 0.0
    %2589 = vmatprep.subr.mxu0 0.0
    %2590 = vmatpush1.msra.mxu0 0.0
    %2591 = vmatprep.subr.mxu0 0.0
    %2592 = vmatpush1.msra.mxu0 0.0
    %2593 = vmatprep.subr.mxu0 0.0
    %2594 = vmatpush1.msra.mxu0 %v1185
    %2595 = vmatprep.subr.mxu0 0.0
    %2596 = vmatpush1.msra.mxu0 %v1184
    %2597 = vmatprep.subr.mxu0 0.0
    %2598 = vmatpush2.msra.mxu0 0.0
    %2599 = vmatprep.subr.mxu0 0.0
    %2600 = vmatpush2.msra.mxu0 0.0
    %2601 = vmatprep.subr.mxu0 0.0
    %2602 = vmatpush2.msra.mxu0 0.0
    %2603 = vmatprep.subr.mxu0 0.0
    %2604 = vmatpush2.msra.mxu0 0.0
    %2605 = vmatprep.subr.mxu0 0.0
    %2606 = vmatpush2.msra.mxu0 0.0
    %2607 = vmatprep.subr.mxu0 0.0
    %2608 = vmatpush2.msra.mxu0 0.0
    %2609 = vmatprep.subr.mxu0 0.0
    %2610 = vmatpush2.msra.mxu0 0.0
    %2611 = vmatprep.subr.mxu0 0.0
    %2612 = vmatpush2.msra.mxu0 0.0
    %2613 = vmatprep.subr.mxu0 0.0
    %2614 = vmatpush2.msra.mxu0 0.0
    %2615 = vmatprep.subr.mxu0 0.0
    %2616 = vmatpush2.msra.mxu0 0.0
    %2617 = vmatprep.subr.mxu0 0.0
    %2618 = vmatpush2.msra.mxu0 0.0
    %2619 = vmatprep.subr.mxu0 0.0
    %2620 = vmatpush2.msra.mxu0 0.0
    %2621 = vmatprep.subr.mxu0 0.0
    %2622 = vmatpush2.msra.mxu0 0.0
    %2623 = vmatprep.subr.mxu0 0.0
    %2624 = vmatpush2.msra.mxu0 0.0
    %2625 = vmatprep.subr.mxu0 0.0
    %2626 = vmatpush2.msra.mxu0 0.0
    %2627 = vmatprep.subr.mxu0 0.0
    %2628 = vmatpush2.msra.mxu0 0.0
    %2629 = vmatprep.mubr.f32.mxu0 0.0
    %2630 = vmatmul.mubr.f32.gmra.mxu0 %v2560
    %v2631 = vpop.f32.mrf.mxu0
    %v2632 = vadd.f32 %v2551, %v2631
    %v2633 = vpop.f32.mrf.mxu0
    %2634 = vmatprep.mubr.f32.mxu0 0.0
    %2635 = vmatmul.mubr.f32.gmra.mxu0 %v2563
    %v2636 = vpop.f32.mrf.mxu0
    %v2637 = vadd.f32 %v2556, %v2636
    %v2638 = vpop.f32.mrf.mxu0
    %2639 = vdwg.mxu0
    %s2640 = scalar_lea.vmem %s2, 64
    %v2641 = vld [vmem:[%s2640] sm:$0xff]
    %v2642 = vld [vmem:[%s2640 + $0x8] sm:$0xff]
    %v2643 = vld [vmem:[%s2640 + $0x10] sm:$0xff]
    %v2644 = vld [vmem:[%s2640 + $0x18] sm:$0xff]
    %2645 = vmatprep.subr.mxu0 0.0
    %2646 = vmatpush1.msra.mxu0 0.0
    %2647 = vmatprep.subr.mxu0 0.0
    %2648 = vmatpush1.msra.mxu0 0.0
    %2649 = vmatprep.subr.mxu0 0.0
    %2650 = vmatpush1.msra.mxu0 0.0
    %2651 = vmatprep.subr.mxu0 0.0
    %2652 = vmatpush1.msra.mxu0 0.0
    %2653 = vmatprep.subr.mxu0 0.0
    %2654 = vmatpush1.msra.mxu0 0.0
    %2655 = vmatprep.subr.mxu0 0.0
    %2656 = vmatpush1.msra.mxu0 0.0
    %2657 = vmatprep.subr.mxu0 0.0
    %2658 = vmatpush1.msra.mxu0 0.0
    %2659 = vmatprep.subr.mxu0 0.0
    %2660 = vmatpush1.msra.mxu0 0.0
    %2661 = vmatprep.subr.mxu0 0.0
    %2662 = vmatpush1.msra.mxu0 0.0
    %2663 = vmatprep.subr.mxu0 0.0
    %2664 = vmatpush1.msra.mxu0 0.0
    %2665 = vmatprep.subr.mxu0 0.0
    %2666 = vmatpush1.msra.mxu0 0.0
    %2667 = vmatprep.subr.mxu0 0.0
    %2668 = vmatpush1.msra.mxu0 0.0
    %2669 = vmatprep.subr.mxu0 0.0
    %2670 = vmatpush1.msra.mxu0 %v2644
    %2671 = vmatprep.subr.mxu0 0.0
    %2672 = vmatpush1.msra.mxu0 %v2643
    %2673 = vmatprep.subr.mxu0 0.0
    %2674 = vmatpush1.msra.mxu0 %v2642
    %2675 = vmatprep.subr.mxu0 0.0
    %2676 = vmatpush1.msra.mxu0 %v2641
    %2677 = vmatprep.subr.mxu0 0.0
    %2678 = vmatpush2.msra.mxu0 0.0
    %2679 = vmatprep.subr.mxu0 0.0
    %2680 = vmatpush2.msra.mxu0 0.0
    %2681 = vmatprep.subr.mxu0 0.0
    %2682 = vmatpush2.msra.mxu0 0.0
    %2683 = vmatprep.subr.mxu0 0.0
    %2684 = vmatpush2.msra.mxu0 0.0
    %2685 = vmatprep.subr.mxu0 0.0
    %2686 = vmatpush2.msra.mxu0 0.0
    %2687 = vmatprep.subr.mxu0 0.0
    %2688 = vmatpush2.msra.mxu0 0.0
    %2689 = vmatprep.subr.mxu0 0.0
    %2690 = vmatpush2.msra.mxu0 0.0
    %2691 = vmatprep.subr.mxu0 0.0
    %2692 = vmatpush2.msra.mxu0 0.0
    %2693 = vmatprep.subr.mxu0 0.0
    %2694 = vmatpush2.msra.mxu0 0.0
    %2695 = vmatprep.subr.mxu0 0.0
    %2696 = vmatpush2.msra.mxu0 0.0
    %2697 = vmatprep.subr.mxu0 0.0
    %2698 = vmatpush2.msra.mxu0 0.0
    %2699 = vmatprep.subr.mxu0 0.0
    %2700 = vmatpush2.msra.mxu0 0.0
    %2701 = vmatprep.subr.mxu0 0.0
    %2702 = vmatpush2.msra.mxu0 0.0
    %2703 = vmatprep.subr.mxu0 0.0
    %2704 = vmatpush2.msra.mxu0 0.0
    %2705 = vmatprep.subr.mxu0 0.0
    %2706 = vmatpush2.msra.mxu0 0.0
    %2707 = vmatprep.subr.mxu0 0.0
    %2708 = vmatpush2.msra.mxu0 0.0
    %2709 = vmatprep.mubr.f32.mxu0 0.0
    %2710 = vmatmul.mubr.f32.gmra.mxu0 %v55
    %v2711 = vpop.f32.mrf.mxu0
    %v2712 = vadd.f32 0.0, %v2711
    %v2713 = vpop.f32.mrf.mxu0
    %2714 = vmatprep.mubr.f32.mxu0 0.0
    %2715 = vmatmul.mubr.f32.gmra.mxu0 %v58
    %v2716 = vpop.f32.mrf.mxu0
    %v2717 = vadd.f32 0.0, %v2716
    %v2718 = vpop.f32.mrf.mxu0
    %2719 = vdwg.mxu0
    %s2720 = scalar_lea.vmem %s3, 64
    %v2721 = vld [vmem:[%s2720] sm:$0xff]
    %v2722 = vld [vmem:[%s2720 + $0x8] sm:$0xff]
    %v2723 = vld [vmem:[%s2720 + $0x10] sm:$0xff]
    %v2724 = vld [vmem:[%s2720 + $0x18] sm:$0xff]
    %2725 = vmatprep.subr.mxu0 0.0
    %2726 = vmatpush1.msra.mxu0 0.0
    %2727 = vmatprep.subr.mxu0 0.0
    %2728 = vmatpush1.msra.mxu0 0.0
    %2729 = vmatprep.subr.mxu0 0.0
    %2730 = vmatpush1.msra.mxu0 0.0
    %2731 = vmatprep.subr.mxu0 0.0
    %2732 = vmatpush1.msra.mxu0 0.0
    %2733 = vmatprep.subr.mxu0 0.0
    %2734 = vmatpush1.msra.mxu0 0.0
    %2735 = vmatprep.subr.mxu0 0.0
    %2736 = vmatpush1.msra.mxu0 0.0
    %2737 = vmatprep.subr.mxu0 0.0
    %2738 = vmatpush1.msra.mxu0 0.0
    %2739 = vmatprep.subr.mxu0 0.0
    %2740 = vmatpush1.msra.mxu0 0.0
    %2741 = vmatprep.subr.mxu0 0.0
    %2742 = vmatpush1.msra.mxu0 0.0
    %2743 = vmatprep.subr.mxu0 0.0
    %2744 = vmatpush1.msra.mxu0 0.0
    %2745 = vmatprep.subr.mxu0 0.0
    %2746 = vmatpush1.msra.mxu0 0.0
    %2747 = vmatprep.subr.mxu0 0.0
    %2748 = vmatpush1.msra.mxu0 0.0
    %2749 = vmatprep.subr.mxu0 0.0
    %2750 = vmatpush1.msra.mxu0 %v2724
    %2751 = vmatprep.subr.mxu0 0.0
    %2752 = vmatpush1.msra.mxu0 %v2723
    %2753 = vmatprep.subr.mxu0 0.0
    %2754 = vmatpush1.msra.mxu0 %v2722
    %2755 = vmatprep.subr.mxu0 0.0
    %2756 = vmatpush1.msra.mxu0 %v2721
    %2757 = vmatprep.subr.mxu0 0.0
    %2758 = vmatpush2.msra.mxu0 0.0
    %2759 = vmatprep.subr.mxu0 0.0
    %2760 = vmatpush2.msra.mxu0 0.0
    %2761 = vmatprep.subr.mxu0 0.0
    %2762 = vmatpush2.msra.mxu0 0.0
    %2763 = vmatprep.subr.mxu0 0.0
    %2764 = vmatpush2.msra.mxu0 0.0
    %2765 = vmatprep.subr.mxu0 0.0
    %2766 = vmatpush2.msra.mxu0 0.0
    %2767 = vmatprep.subr.mxu0 0.0
    %2768 = vmatpush2.msra.mxu0 0.0
    %2769 = vmatprep.subr.mxu0 0.0
    %2770 = vmatpush2.msra.mxu0 0.0
    %2771 = vmatprep.subr.mxu0 0.0
    %2772 = vmatpush2.msra.mxu0 0.0
    %2773 = vmatprep.subr.mxu0 0.0
    %2774 = vmatpush2.msra.mxu0 0.0
    %2775 = vmatprep.subr.mxu0 0.0
    %2776 = vmatpush2.msra.mxu0 0.0
    %2777 = vmatprep.subr.mxu0 0.0
    %2778 = vmatpush2.msra.mxu0 0.0
    %2779 = vmatprep.subr.mxu0 0.0
    %2780 = vmatpush2.msra.mxu0 0.0
    %2781 = vmatprep.subr.mxu0 0.0
    %2782 = vmatpush2.msra.mxu0 0.0
    %2783 = vmatprep.subr.mxu0 0.0
    %2784 = vmatpush2.msra.mxu0 0.0
    %2785 = vmatprep.subr.mxu0 0.0
    %2786 = vmatpush2.msra.mxu0 0.0
    %2787 = vmatprep.subr.mxu0 0.0
    %2788 = vmatpush2.msra.mxu0 0.0
    %2789 = vmatprep.mubr.f32.mxu0 0.0
    %2790 = vmatmul.mubr.f32.gmra.mxu0 %v55
    %v2791 = vpop.f32.mrf.mxu0
    %v2792 = vadd.f32 0.0, %v2791
    %v2793 = vpop.f32.mrf.mxu0
    %2794 = vmatprep.mubr.f32.mxu0 0.0
    %2795 = vmatmul.mubr.f32.gmra.mxu0 %v58
    %v2796 = vpop.f32.mrf.mxu0
    %v2797 = vadd.f32 0.0, %v2796
    %v2798 = vpop.f32.mrf.mxu0
    %2799 = vdwg.mxu0
    %s2800 = scalar_lea.vmem %s4, 64
    %v2801 = vld [vmem:[%s2800] sm:$0xff]
    %v2802 = vld [vmem:[%s2800 + $0x8] sm:$0xff]
    %v2803 = vld [vmem:[%s2800 + $0x10] sm:$0xff]
    %v2804 = vld [vmem:[%s2800 + $0x18] sm:$0xff]
    %2805 = vmatprep.subr.mxu0 0.0
    %2806 = vmatpush1.msra.mxu0 0.0
    %2807 = vmatprep.subr.mxu0 0.0
    %2808 = vmatpush1.msra.mxu0 0.0
    %2809 = vmatprep.subr.mxu0 0.0
    %2810 = vmatpush1.msra.mxu0 0.0
    %2811 = vmatprep.subr.mxu0 0.0
    %2812 = vmatpush1.msra.mxu0 0.0
    %2813 = vmatprep.subr.mxu0 0.0
    %2814 = vmatpush1.msra.mxu0 0.0
    %2815 = vmatprep.subr.mxu0 0.0
    %2816 = vmatpush1.msra.mxu0 0.0
    %2817 = vmatprep.subr.mxu0 0.0
    %2818 = vmatpush1.msra.mxu0 0.0
    %2819 = vmatprep.subr.mxu0 0.0
    %2820 = vmatpush1.msra.mxu0 0.0
    %2821 = vmatprep.subr.mxu0 0.0
    %2822 = vmatpush1.msra.mxu0 0.0
    %2823 = vmatprep.subr.mxu0 0.0
    %2824 = vmatpush1.msra.mxu0 0.0
    %2825 = vmatprep.subr.mxu0 0.0
    %2826 = vmatpush1.msra.mxu0 0.0
    %2827 = vmatprep.subr.mxu0 0.0
    %2828 = vmatpush1.msra.mxu0 0.0
    %2829 = vmatprep.subr.mxu0 0.0
    %2830 = vmatpush1.msra.mxu0 %v2804
    %2831 = vmatprep.subr.mxu0 0.0
    %2832 = vmatpush1.msra.mxu0 %v2803
    %2833 = vmatprep.subr.mxu0 0.0
    %2834 = vmatpush1.msra.mxu0 %v2802
    %2835 = vmatprep.subr.mxu0 0.0
    %2836 = vmatpush1.msra.mxu0 %v2801
    %2837 = vmatprep.subr.mxu0 0.0
    %2838 = vmatpush2.msra.mxu0 0.0
    %2839 = vmatprep.subr.mxu0 0.0
    %2840 = vmatpush2.msra.mxu0 0.0
    %2841 = vmatprep.subr.mxu0 0.0
    %2842 = vmatpush2.msra.mxu0 0.0
    %2843 = vmatprep.subr.mxu0 0.0
    %2844 = vmatpush2.msra.mxu0 0.0
    %2845 = vmatprep.subr.mxu0 0.0
    %2846 = vmatpush2.msra.mxu0 0.0
    %2847 = vmatprep.subr.mxu0 0.0
    %2848 = vmatpush2.msra.mxu0 0.0
    %2849 = vmatprep.subr.mxu0 0.0
    %2850 = vmatpush2.msra.mxu0 0.0
    %2851 = vmatprep.subr.mxu0 0.0
    %2852 = vmatpush2.msra.mxu0 0.0
    %2853 = vmatprep.subr.mxu0 0.0
    %2854 = vmatpush2.msra.mxu0 0.0
    %2855 = vmatprep.subr.mxu0 0.0
    %2856 = vmatpush2.msra.mxu0 0.0
    %2857 = vmatprep.subr.mxu0 0.0
    %2858 = vmatpush2.msra.mxu0 0.0
    %2859 = vmatprep.subr.mxu0 0.0
    %2860 = vmatpush2.msra.mxu0 0.0
    %2861 = vmatprep.subr.mxu0 0.0
    %2862 = vmatpush2.msra.mxu0 0.0
    %2863 = vmatprep.subr.mxu0 0.0
    %2864 = vmatpush2.msra.mxu0 0.0
    %2865 = vmatprep.subr.mxu0 0.0
    %2866 = vmatpush2.msra.mxu0 0.0
    %2867 = vmatprep.subr.mxu0 0.0
    %2868 = vmatpush2.msra.mxu0 0.0
    %2869 = vmatprep.mubr.f32.mxu0 0.0
    %2870 = vmatmul.mubr.f32.gmra.mxu0 %v55
    %v2871 = vpop.f32.mrf.mxu0
    %v2872 = vadd.f32 0.0, %v2871
    %v2873 = vpop.f32.mrf.mxu0
    %2874 = vmatprep.mubr.f32.mxu0 0.0
    %2875 = vmatmul.mubr.f32.gmra.mxu0 %v58
    %v2876 = vpop.f32.mrf.mxu0
    %v2877 = vadd.f32 0.0, %v2876
    %v2878 = vpop.f32.mrf.mxu0
    %2879 = vdwg.mxu0
    %s2880 = scalar_lea.vmem %s5, 64
    %v2881 = vld [vmem:[%s2880] sm:$0xff]
    %v2882 = vld [vmem:[%s2880 + $0x8] sm:$0xff]
    %v2883 = vld [vmem:[%s2880 + $0x10] sm:$0xff]
    %v2884 = vld [vmem:[%s2880 + $0x18] sm:$0xff]
    %2885 = vmatprep.subr.mxu0 0.0
    %2886 = vmatpush1.msra.mxu0 0.0
    %2887 = vmatprep.subr.mxu0 0.0
    %2888 = vmatpush1.msra.mxu0 0.0
    %2889 = vmatprep.subr.mxu0 0.0
    %2890 = vmatpush1.msra.mxu0 0.0
    %2891 = vmatprep.subr.mxu0 0.0
    %2892 = vmatpush1.msra.mxu0 0.0
    %2893 = vmatprep.subr.mxu0 0.0
    %2894 = vmatpush1.msra.mxu0 0.0
    %2895 = vmatprep.subr.mxu0 0.0
    %2896 = vmatpush1.msra.mxu0 0.0
    %2897 = vmatprep.subr.mxu0 0.0
    %2898 = vmatpush1.msra.mxu0 0.0
    %2899 = vmatprep.subr.mxu0 0.0
    %2900 = vmatpush1.msra.mxu0 0.0
    %2901 = vmatprep.subr.mxu0 0.0
    %2902 = vmatpush1.msra.mxu0 0.0
    %2903 = vmatprep.subr.mxu0 0.0
    %2904 = vmatpush1.msra.mxu0 0.0
    %2905 = vmatprep.subr.mxu0 0.0
    %2906 = vmatpush1.msra.mxu0 0.0
    %2907 = vmatprep.subr.mxu0 0.0
    %2908 = vmatpush1.msra.mxu0 0.0
    %2909 = vmatprep.subr.mxu0 0.0
    %2910 = vmatpush1.msra.mxu0 %v2884
    %2911 = vmatprep.subr.mxu0 0.0
    %2912 = vmatpush1.msra.mxu0 %v2883
    %2913 = vmatprep.subr.mxu0 0.0
    %2914 = vmatpush1.msra.mxu0 %v2882
    %2915 = vmatprep.subr.mxu0 0.0
    %2916 = vmatpush1.msra.mxu0 %v2881
    %2917 = vmatprep.subr.mxu0 0.0
    %2918 = vmatpush2.msra.mxu0 0.0
    %2919 = vmatprep.subr.mxu0 0.0
    %2920 = vmatpush2.msra.mxu0 0.0
    %2921 = vmatprep.subr.mxu0 0.0
    %2922 = vmatpush2.msra.mxu0 0.0
    %2923 = vmatprep.subr.mxu0 0.0
    %2924 = vmatpush2.msra.mxu0 0.0
    %2925 = vmatprep.subr.mxu0 0.0
    %2926 = vmatpush2.msra.mxu0 0.0
    %2927 = vmatprep.subr.mxu0 0.0
    %2928 = vmatpush2.msra.mxu0 0.0
    %2929 = vmatprep.subr.mxu0 0.0
    %2930 = vmatpush2.msra.mxu0 0.0
    %2931 = vmatprep.subr.mxu0 0.0
    %2932 = vmatpush2.msra.mxu0 0.0
    %2933 = vmatprep.subr.mxu0 0.0
    %2934 = vmatpush2.msra.mxu0 0.0
    %2935 = vmatprep.subr.mxu0 0.0
    %2936 = vmatpush2.msra.mxu0 0.0
    %2937 = vmatprep.subr.mxu0 0.0
    %2938 = vmatpush2.msra.mxu0 0.0
    %2939 = vmatprep.subr.mxu0 0.0
    %2940 = vmatpush2.msra.mxu0 0.0
    %2941 = vmatprep.subr.mxu0 0.0
    %2942 = vmatpush2.msra.mxu0 0.0
    %2943 = vmatprep.subr.mxu0 0.0
    %2944 = vmatpush2.msra.mxu0 0.0
    %2945 = vmatprep.subr.mxu0 0.0
    %2946 = vmatpush2.msra.mxu0 0.0
    %2947 = vmatprep.subr.mxu0 0.0
    %2948 = vmatpush2.msra.mxu0 0.0
    %2949 = vmatprep.mubr.f32.mxu0 0.0
    %2950 = vmatmul.mubr.f32.gmra.mxu0 %v298
    %v2951 = vpop.f32.mrf.mxu0
    %v2952 = vadd.f32 0.0, %v2951
    %v2953 = vpop.f32.mrf.mxu0
    %2954 = vmatprep.mubr.f32.mxu0 0.0
    %2955 = vmatmul.mubr.f32.gmra.mxu0 %v301
    %v2956 = vpop.f32.mrf.mxu0
    %v2957 = vadd.f32 0.0, %v2956
    %v2958 = vpop.f32.mrf.mxu0
    %2959 = vdwg.mxu0
    %s2960 = scalar_lea.vmem %s6, 64
    %v2961 = vld [vmem:[%s2960] sm:$0xff]
    %v2962 = vld [vmem:[%s2960 + $0x8] sm:$0xff]
    %v2963 = vld [vmem:[%s2960 + $0x10] sm:$0xff]
    %v2964 = vld [vmem:[%s2960 + $0x18] sm:$0xff]
    %2965 = vmatprep.subr.mxu0 0.0
    %2966 = vmatpush1.msra.mxu0 0.0
    %2967 = vmatprep.subr.mxu0 0.0
    %2968 = vmatpush1.msra.mxu0 0.0
    %2969 = vmatprep.subr.mxu0 0.0
    %2970 = vmatpush1.msra.mxu0 0.0
    %2971 = vmatprep.subr.mxu0 0.0
    %2972 = vmatpush1.msra.mxu0 0.0
    %2973 = vmatprep.subr.mxu0 0.0
    %2974 = vmatpush1.msra.mxu0 0.0
    %2975 = vmatprep.subr.mxu0 0.0
    %2976 = vmatpush1.msra.mxu0 0.0
    %2977 = vmatprep.subr.mxu0 0.0
    %2978 = vmatpush1.msra.mxu0 0.0
    %2979 = vmatprep.subr.mxu0 0.0
    %2980 = vmatpush1.msra.mxu0 0.0
    %2981 = vmatprep.subr.mxu0 0.0
    %2982 = vmatpush1.msra.mxu0 0.0
    %2983 = vmatprep.subr.mxu0 0.0
    %2984 = vmatpush1.msra.mxu0 0.0
    %2985 = vmatprep.subr.mxu0 0.0
    %2986 = vmatpush1.msra.mxu0 0.0
    %2987 = vmatprep.subr.mxu0 0.0
    %2988 = vmatpush1.msra.mxu0 0.0
    %2989 = vmatprep.subr.mxu0 0.0
    %2990 = vmatpush1.msra.mxu0 %v2964
    %2991 = vmatprep.subr.mxu0 0.0
    %2992 = vmatpush1.msra.mxu0 %v2963
    %2993 = vmatprep.subr.mxu0 0.0
    %2994 = vmatpush1.msra.mxu0 %v2962
    %2995 = vmatprep.subr.mxu0 0.0
    %2996 = vmatpush1.msra.mxu0 %v2961
    %2997 = vmatprep.subr.mxu0 0.0
    %2998 = vmatpush2.msra.mxu0 0.0
    %2999 = vmatprep.subr.mxu0 0.0
    %3000 = vmatpush2.msra.mxu0 0.0
    %3001 = vmatprep.subr.mxu0 0.0
    %3002 = vmatpush2.msra.mxu0 0.0
    %3003 = vmatprep.subr.mxu0 0.0
    %3004 = vmatpush2.msra.mxu0 0.0
    %3005 = vmatprep.subr.mxu0 0.0
    %3006 = vmatpush2.msra.mxu0 0.0
    %3007 = vmatprep.subr.mxu0 0.0
    %3008 = vmatpush2.msra.mxu0 0.0
    %3009 = vmatprep.subr.mxu0 0.0
    %3010 = vmatpush2.msra.mxu0 0.0
    %3011 = vmatprep.subr.mxu0 0.0
    %3012 = vmatpush2.msra.mxu0 0.0
    %3013 = vmatprep.subr.mxu0 0.0
    %3014 = vmatpush2.msra.mxu0 0.0
    %3015 = vmatprep.subr.mxu0 0.0
    %3016 = vmatpush2.msra.mxu0 0.0
    %3017 = vmatprep.subr.mxu0 0.0
    %3018 = vmatpush2.msra.mxu0 0.0
    %3019 = vmatprep.subr.mxu0 0.0
    %3020 = vmatpush2.msra.mxu0 0.0
    %3021 = vmatprep.subr.mxu0 0.0
    %3022 = vmatpush2.msra.mxu0 0.0
    %3023 = vmatprep.subr.mxu0 0.0
    %3024 = vmatpush2.msra.mxu0 0.0
    %3025 = vmatprep.subr.mxu0 0.0
    %3026 = vmatpush2.msra.mxu0 0.0
    %3027 = vmatprep.subr.mxu0 0.0
    %3028 = vmatpush2.msra.mxu0 0.0
    %3029 = vmatprep.mubr.f32.mxu0 0.0
    %3030 = vmatmul.mubr.f32.gmra.mxu0 %v298
    %v3031 = vpop.f32.mrf.mxu0
    %v3032 = vadd.f32 0.0, %v3031
    %v3033 = vpop.f32.mrf.mxu0
    %3034 = vmatprep.mubr.f32.mxu0 0.0
    %3035 = vmatmul.mubr.f32.gmra.mxu0 %v301
    %v3036 = vpop.f32.mrf.mxu0
    %v3037 = vadd.f32 0.0, %v3036
    %v3038 = vpop.f32.mrf.mxu0
    %3039 = vdwg.mxu0
    %s3040 = scalar_lea.vmem %s7, 64
    %v3041 = vld [vmem:[%s3040] sm:$0xff]
    %v3042 = vld [vmem:[%s3040 + $0x8] sm:$0xff]
    %v3043 = vld [vmem:[%s3040 + $0x10] sm:$0xff]
    %v3044 = vld [vmem:[%s3040 + $0x18] sm:$0xff]
    %3045 = vmatprep.subr.mxu0 0.0
    %3046 = vmatpush1.msra.mxu0 0.0
    %3047 = vmatprep.subr.mxu0 0.0
    %3048 = vmatpush1.msra.mxu0 0.0
    %3049 = vmatprep.subr.mxu0 0.0
    %3050 = vmatpush1.msra.mxu0 0.0
    %3051 = vmatprep.subr.mxu0 0.0
    %3052 = vmatpush1.msra.mxu0 0.0
    %3053 = vmatprep.subr.mxu0 0.0
    %3054 = vmatpush1.msra.mxu0 0.0
    %3055 = vmatprep.subr.mxu0 0.0
    %3056 = vmatpush1.msra.mxu0 0.0
    %3057 = vmatprep.subr.mxu0 0.0
    %3058 = vmatpush1.msra.mxu0 0.0
    %3059 = vmatprep.subr.mxu0 0.0
    %3060 = vmatpush1.msra.mxu0 0.0
    %3061 = vmatprep.subr.mxu0 0.0
    %3062 = vmatpush1.msra.mxu0 0.0
    %3063 = vmatprep.subr.mxu0 0.0
    %3064 = vmatpush1.msra.mxu0 0.0
    %3065 = vmatprep.subr.mxu0 0.0
    %3066 = vmatpush1.msra.mxu0 0.0
    %3067 = vmatprep.subr.mxu0 0.0
    %3068 = vmatpush1.msra.mxu0 0.0
    %3069 = vmatprep.subr.mxu0 0.0
    %3070 = vmatpush1.msra.mxu0 %v3044
    %3071 = vmatprep.subr.mxu0 0.0
    %3072 = vmatpush1.msra.mxu0 %v3043
    %3073 = vmatprep.subr.mxu0 0.0
    %3074 = vmatpush1.msra.mxu0 %v3042
    %3075 = vmatprep.subr.mxu0 0.0
    %3076 = vmatpush1.msra.mxu0 %v3041
    %3077 = vmatprep.subr.mxu0 0.0
    %3078 = vmatpush2.msra.mxu0 0.0
    %3079 = vmatprep.subr.mxu0 0.0
    %3080 = vmatpush2.msra.mxu0 0.0
    %3081 = vmatprep.subr.mxu0 0.0
    %3082 = vmatpush2.msra.mxu0 0.0
    %3083 = vmatprep.subr.mxu0 0.0
    %3084 = vmatpush2.msra.mxu0 0.0
    %3085 = vmatprep.subr.mxu0 0.0
    %3086 = vmatpush2.msra.mxu0 0.0
    %3087 = vmatprep.subr.mxu0 0.0
    %3088 = vmatpush2.msra.mxu0 0.0
    %3089 = vmatprep.subr.mxu0 0.0
    %3090 = vmatpush2.msra.mxu0 0.0
    %3091 = vmatprep.subr.mxu0 0.0
    %3092 = vmatpush2.msra.mxu0 0.0
    %3093 = vmatprep.subr.mxu0 0.0
    %3094 = vmatpush2.msra.mxu0 0.0
    %3095 = vmatprep.subr.mxu0 0.0
    %3096 = vmatpush2.msra.mxu0 0.0
    %3097 = vmatprep.subr.mxu0 0.0
    %3098 = vmatpush2.msra.mxu0 0.0
    %3099 = vmatprep.subr.mxu0 0.0
    %3100 = vmatpush2.msra.mxu0 0.0
    %3101 = vmatprep.subr.mxu0 0.0
    %3102 = vmatpush2.msra.mxu0 0.0
    %3103 = vmatprep.subr.mxu0 0.0
    %3104 = vmatpush2.msra.mxu0 0.0
    %3105 = vmatprep.subr.mxu0 0.0
    %3106 = vmatpush2.msra.mxu0 0.0
    %3107 = vmatprep.subr.mxu0 0.0
    %3108 = vmatpush2.msra.mxu0 0.0
    %3109 = vmatprep.mubr.f32.mxu0 0.0
    %3110 = vmatmul.mubr.f32.gmra.mxu0 %v298
    %v3111 = vpop.f32.mrf.mxu0
    %v3112 = vadd.f32 0.0, %v3111
    %v3113 = vpop.f32.mrf.mxu0
    %3114 = vmatprep.mubr.f32.mxu0 0.0
    %3115 = vmatmul.mubr.f32.gmra.mxu0 %v301
    %v3116 = vpop.f32.mrf.mxu0
    %v3117 = vadd.f32 0.0, %v3116
    %v3118 = vpop.f32.mrf.mxu0
    %3119 = vdwg.mxu0
    %v3121 = vsel %vm536, %v2712, 0
    %v3124 = vsel %vm536, %v3032, 0
    %3126 = vmatprep.subr.mxu0 0.0
    %3127 = vmatpush1.xpose.msra.mxu0 0.0
    %3128 = vmatprep.subr.mxu0 0.0
    %3129 = vmatpush1.xpose.msra.mxu0 0.0
    %3130 = vmatprep.subr.mxu0 0.0
    %3131 = vmatpush1.xpose.msra.mxu0 0.0
    %3132 = vmatprep.subr.mxu0 0.0
    %3133 = vmatpush1.xpose.msra.mxu0 0.0
    %3134 = vmatprep.subr.mxu0 0.0
    %3135 = vmatpush1.xpose.msra.mxu0 0.0
    %3136 = vmatprep.subr.mxu0 0.0
    %3137 = vmatpush1.xpose.msra.mxu0 0.0
    %3138 = vmatprep.subr.mxu0 0.0
    %3139 = vmatpush1.xpose.msra.mxu0 0.0
    %3140 = vmatprep.subr.mxu0 0.0
    %3141 = vmatpush1.xpose.msra.mxu0 0.0
    %3142 = vmatprep.subr.mxu0 0.0
    %3143 = vmatpush1.xpose.msra.mxu0 0.0
    %3144 = vmatprep.subr.mxu0 0.0
    %3145 = vmatpush1.xpose.msra.mxu0 0.0
    %3146 = vmatprep.subr.mxu0 0.0
    %3147 = vmatpush1.xpose.msra.mxu0 0.0
    %3148 = vmatprep.subr.mxu0 0.0
    %3149 = vmatpush1.xpose.msra.mxu0 0.0
    %3150 = vmatprep.subr.mxu0 0.0
    %3151 = vmatpush1.xpose.msra.mxu0 0.0
    %3152 = vmatprep.subr.mxu0 0.0
    %3153 = vmatpush1.xpose.msra.mxu0 0.0
    %3154 = vmatprep.subr.mxu0 0.0
    %3155 = vmatpush1.xpose.msra.mxu0 0.0
    %3156 = vmatprep.subr.mxu0 0.0
    %3157 = vmatpush1.xpose.msra.mxu0 %v3124
    %3158 = vmatprep.subr.mxu0 0.0
    %3159 = vmatpush2.xpose.msra.mxu0 0.0
    %3160 = vmatprep.subr.mxu0 0.0
    %3161 = vmatpush2.xpose.msra.mxu0 0.0
    %3162 = vmatprep.subr.mxu0 0.0
    %3163 = vmatpush2.xpose.msra.mxu0 0.0
    %3164 = vmatprep.subr.mxu0 0.0
    %3165 = vmatpush2.xpose.msra.mxu0 0.0
    %3166 = vmatprep.subr.mxu0 0.0
    %3167 = vmatpush2.xpose.msra.mxu0 0.0
    %3168 = vmatprep.subr.mxu0 0.0
    %3169 = vmatpush2.xpose.msra.mxu0 0.0
    %3170 = vmatprep.subr.mxu0 0.0
    %3171 = vmatpush2.xpose.msra.mxu0 0.0
    %3172 = vmatprep.subr.mxu0 0.0
    %3173 = vmatpush2.xpose.msra.mxu0 0.0
    %3174 = vmatprep.subr.mxu0 0.0
    %3175 = vmatpush2.xpose.msra.mxu0 0.0
    %3176 = vmatprep.subr.mxu0 0.0
    %3177 = vmatpush2.xpose.msra.mxu0 0.0
    %3178 = vmatprep.subr.mxu0 0.0
    %3179 = vmatpush2.xpose.msra.mxu0 0.0
    %3180 = vmatprep.subr.mxu0 0.0
    %3181 = vmatpush2.xpose.msra.mxu0 0.0
    %3182 = vmatprep.subr.mxu0 0.0
    %3183 = vmatpush2.xpose.msra.mxu0 0.0
    %3184 = vmatprep.subr.mxu0 0.0
    %3185 = vmatpush2.xpose.msra.mxu0 0.0
    %3186 = vmatprep.subr.mxu0 0.0
    %3187 = vmatpush2.xpose.msra.mxu0 0.0
    %3188 = vmatprep.subr.mxu0 0.0
    %3189 = vmatpush2.xpose.msra.mxu0 0.0
    %3190 = vmatprep.mubr.f32.mxu0 0.0
    %3191 = vmatmul.mubr.f32.gmra.mxu0 %v3121
    %v3192 = vpop.f32.mrf.mxu0
    %v3193 = vadd.f32 0.0, %v3192
    %v3194 = vpop.f32.mrf.mxu0
    %3195 = vdwg.mxu0
    %v3197 = vsel %vm536, %v2717, 0
    %v3200 = vsel %vm536, %v3037, 0
    %3202 = vmatprep.subr.mxu0 0.0
    %3203 = vmatpush1.xpose.msra.mxu0 0.0
    %3204 = vmatprep.subr.mxu0 0.0
    %3205 = vmatpush1.xpose.msra.mxu0 0.0
    %3206 = vmatprep.subr.mxu0 0.0
    %3207 = vmatpush1.xpose.msra.mxu0 0.0
    %3208 = vmatprep.subr.mxu0 0.0
    %3209 = vmatpush1.xpose.msra.mxu0 0.0
    %3210 = vmatprep.subr.mxu0 0.0
    %3211 = vmatpush1.xpose.msra.mxu0 0.0
    %3212 = vmatprep.subr.mxu0 0.0
    %3213 = vmatpush1.xpose.msra.mxu0 0.0
    %3214 = vmatprep.subr.mxu0 0.0
    %3215 = vmatpush1.xpose.msra.mxu0 0.0
    %3216 = vmatprep.subr.mxu0 0.0
    %3217 = vmatpush1.xpose.msra.mxu0 0.0
    %3218 = vmatprep.subr.mxu0 0.0
    %3219 = vmatpush1.xpose.msra.mxu0 0.0
    %3220 = vmatprep.subr.mxu0 0.0
    %3221 = vmatpush1.xpose.msra.mxu0 0.0
    %3222 = vmatprep.subr.mxu0 0.0
    %3223 = vmatpush1.xpose.msra.mxu0 0.0
    %3224 = vmatprep.subr.mxu0 0.0
    %3225 = vmatpush1.xpose.msra.mxu0 0.0
    %3226 = vmatprep.subr.mxu0 0.0
    %3227 = vmatpush1.xpose.msra.mxu0 0.0
    %3228 = vmatprep.subr.mxu0 0.0
    %3229 = vmatpush1.xpose.msra.mxu0 0.0
    %3230 = vmatprep.subr.mxu0 0.0
    %3231 = vmatpush1.xpose.msra.mxu0 0.0
    %3232 = vmatprep.subr.mxu0 0.0
    %3233 = vmatpush1.xpose.msra.mxu0 %v3200
    %3234 = vmatprep.subr.mxu0 0.0
    %3235 = vmatpush2.xpose.msra.mxu0 0.0
    %3236 = vmatprep.subr.mxu0 0.0
    %3237 = vmatpush2.xpose.msra.mxu0 0.0
    %3238 = vmatprep.subr.mxu0 0.0
    %3239 = vmatpush2.xpose.msra.mxu0 0.0
    %3240 = vmatprep.subr.mxu0 0.0
    %3241 = vmatpush2.xpose.msra.mxu0 0.0
    %3242 = vmatprep.subr.mxu0 0.0
    %3243 = vmatpush2.xpose.msra.mxu0 0.0
    %3244 = vmatprep.subr.mxu0 0.0
    %3245 = vmatpush2.xpose.msra.mxu0 0.0
    %3246 = vmatprep.subr.mxu0 0.0
    %3247 = vmatpush2.xpose.msra.mxu0 0.0
    %3248 = vmatprep.subr.mxu0 0.0
    %3249 = vmatpush2.xpose.msra.mxu0 0.0
    %3250 = vmatprep.subr.mxu0 0.0
    %3251 = vmatpush2.xpose.msra.mxu0 0.0
    %3252 = vmatprep.subr.mxu0 0.0
    %3253 = vmatpush2.xpose.msra.mxu0 0.0
    %3254 = vmatprep.subr.mxu0 0.0
    %3255 = vmatpush2.xpose.msra.mxu0 0.0
    %3256 = vmatprep.subr.mxu0 0.0
    %3257 = vmatpush2.xpose.msra.mxu0 0.0
    %3258 = vmatprep.subr.mxu0 0.0
    %3259 = vmatpush2.xpose.msra.mxu0 0.0
    %3260 = vmatprep.subr.mxu0 0.0
    %3261 = vmatpush2.xpose.msra.mxu0 0.0
    %3262 = vmatprep.subr.mxu0 0.0
    %3263 = vmatpush2.xpose.msra.mxu0 0.0
    %3264 = vmatprep.subr.mxu0 0.0
    %3265 = vmatpush2.xpose.msra.mxu0 0.0
    %3266 = vmatprep.mubr.f32.mxu0 0.0
    %3267 = vmatmul.mubr.f32.gmra.mxu0 %v3197
    %v3268 = vpop.f32.mrf.mxu0
    %v3269 = vadd.f32 0.0, %v3268
    %v3270 = vpop.f32.mrf.mxu0
    %3271 = vdwg.mxu0
    %v3272 = vmul.f32 %v3193, 0.25
    %v3273 = vmul.f32 %v3269, 0.25
    %v3274 = vsel %vm691, %v3272, -inf
    %3275 = vmax.xlane.f32.xlu0 %v3274
    %v3276 = vpop.xlane.xlu0 %3275
    %v3277 = vsel %vm691, %v3273, -inf
    %3278 = vmax.xlane.f32.xlu0 %v3277
    %v3279 = vpop.xlane.xlu0 %3278
    %v3280 = vsub.f32 %v3272, %v3276
    %v3281 = vsub.f32 %v3273, %v3279
    %v3282 = vmul.f32 %v3280, 1.442695
    %v3283 = vpow.pop %v3282
    %v3284 = vmul.f32 %v3281, 1.442695
    %v3285 = vpow.pop %v3284
    %v3286 = vsel %vm691, %v3283, 0.0
    %3287 = vadd.xlane.f32.xlu0 %v3286
    %v3288 = vpop.xlane.xlu0 %3287
    %v3289 = vsel %vm691, %v3285, 0.0
    %3290 = vadd.xlane.f32.xlu0 %v3289
    %v3291 = vpop.xlane.xlu0 %3290
    %v3292 = vrcp.pop %v3288
    %v3293 = vrcp.pop %v3291
    %v3294 = vmul.f32 %v3283, %v3292
    %v3295 = vmul.f32 %v3285, %v3293
    %v3297 = vsel %vm691, %v3294, 0
    %3299 = vmatprep.subr.mxu0 0.0
    %3300 = vmatpush1.msra.mxu0 0.0
    %3301 = vmatprep.subr.mxu0 0.0
    %3302 = vmatpush1.msra.mxu0 0.0
    %3303 = vmatprep.subr.mxu0 0.0
    %3304 = vmatpush1.msra.mxu0 0.0
    %3305 = vmatprep.subr.mxu0 0.0
    %3306 = vmatpush1.msra.mxu0 0.0
    %3307 = vmatprep.subr.mxu0 0.0
    %3308 = vmatpush1.msra.mxu0 0.0
    %3309 = vmatprep.subr.mxu0 0.0
    %3310 = vmatpush1.msra.mxu0 0.0
    %3311 = vmatprep.subr.mxu0 0.0
    %3312 = vmatpush1.msra.mxu0 0.0
    %3313 = vmatprep.subr.mxu0 0.0
    %3314 = vmatpush1.msra.mxu0 0.0
    %3315 = vmatprep.subr.mxu0 0.0
    %3316 = vmatpush1.msra.mxu0 0.0
    %3317 = vmatprep.subr.mxu0 0.0
    %3318 = vmatpush1.msra.mxu0 0.0
    %3319 = vmatprep.subr.mxu0 0.0
    %3320 = vmatpush1.msra.mxu0 0.0
    %3321 = vmatprep.subr.mxu0 0.0
    %3322 = vmatpush1.msra.mxu0 0.0
    %3323 = vmatprep.subr.mxu0 0.0
    %3324 = vmatpush1.msra.mxu0 0.0
    %3325 = vmatprep.subr.mxu0 0.0
    %3326 = vmatpush1.msra.mxu0 0.0
    %3327 = vmatprep.subr.mxu0 0.0
    %3328 = vmatpush1.msra.mxu0 0.0
    %3329 = vmatprep.subr.mxu0 0.0
    %3330 = vmatpush1.msra.mxu0 %v3112
    %3331 = vmatprep.subr.mxu0 0.0
    %3332 = vmatpush2.msra.mxu0 0.0
    %3333 = vmatprep.subr.mxu0 0.0
    %3334 = vmatpush2.msra.mxu0 0.0
    %3335 = vmatprep.subr.mxu0 0.0
    %3336 = vmatpush2.msra.mxu0 0.0
    %3337 = vmatprep.subr.mxu0 0.0
    %3338 = vmatpush2.msra.mxu0 0.0
    %3339 = vmatprep.subr.mxu0 0.0
    %3340 = vmatpush2.msra.mxu0 0.0
    %3341 = vmatprep.subr.mxu0 0.0
    %3342 = vmatpush2.msra.mxu0 0.0
    %3343 = vmatprep.subr.mxu0 0.0
    %3344 = vmatpush2.msra.mxu0 0.0
    %3345 = vmatprep.subr.mxu0 0.0
    %3346 = vmatpush2.msra.mxu0 0.0
    %3347 = vmatprep.subr.mxu0 0.0
    %3348 = vmatpush2.msra.mxu0 0.0
    %3349 = vmatprep.subr.mxu0 0.0
    %3350 = vmatpush2.msra.mxu0 0.0
    %3351 = vmatprep.subr.mxu0 0.0
    %3352 = vmatpush2.msra.mxu0 0.0
    %3353 = vmatprep.subr.mxu0 0.0
    %3354 = vmatpush2.msra.mxu0 0.0
    %3355 = vmatprep.subr.mxu0 0.0
    %3356 = vmatpush2.msra.mxu0 0.0
    %3357 = vmatprep.subr.mxu0 0.0
    %3358 = vmatpush2.msra.mxu0 0.0
    %3359 = vmatprep.subr.mxu0 0.0
    %3360 = vmatpush2.msra.mxu0 0.0
    %3361 = vmatprep.subr.mxu0 0.0
    %3362 = vmatpush2.msra.mxu0 0.0
    %3363 = vmatprep.mubr.f32.mxu0 0.0
    %3364 = vmatmul.mubr.f32.gmra.mxu0 %v3297
    %v3365 = vpop.f32.mrf.mxu0
    %v3366 = vadd.f32 0.0, %v3365
    %v3367 = vpop.f32.mrf.mxu0
    %3368 = vdwg.mxu0
    %v3370 = vsel %vm691, %v3295, 0
    %3372 = vmatprep.subr.mxu0 0.0
    %3373 = vmatpush1.msra.mxu0 0.0
    %3374 = vmatprep.subr.mxu0 0.0
    %3375 = vmatpush1.msra.mxu0 0.0
    %3376 = vmatprep.subr.mxu0 0.0
    %3377 = vmatpush1.msra.mxu0 0.0
    %3378 = vmatprep.subr.mxu0 0.0
    %3379 = vmatpush1.msra.mxu0 0.0
    %3380 = vmatprep.subr.mxu0 0.0
    %3381 = vmatpush1.msra.mxu0 0.0
    %3382 = vmatprep.subr.mxu0 0.0
    %3383 = vmatpush1.msra.mxu0 0.0
    %3384 = vmatprep.subr.mxu0 0.0
    %3385 = vmatpush1.msra.mxu0 0.0
    %3386 = vmatprep.subr.mxu0 0.0
    %3387 = vmatpush1.msra.mxu0 0.0
    %3388 = vmatprep.subr.mxu0 0.0
    %3389 = vmatpush1.msra.mxu0 0.0
    %3390 = vmatprep.subr.mxu0 0.0
    %3391 = vmatpush1.msra.mxu0 0.0
    %3392 = vmatprep.subr.mxu0 0.0
    %3393 = vmatpush1.msra.mxu0 0.0
    %3394 = vmatprep.subr.mxu0 0.0
    %3395 = vmatpush1.msra.mxu0 0.0
    %3396 = vmatprep.subr.mxu0 0.0
    %3397 = vmatpush1.msra.mxu0 0.0
    %3398 = vmatprep.subr.mxu0 0.0
    %3399 = vmatpush1.msra.mxu0 0.0
    %3400 = vmatprep.subr.mxu0 0.0
    %3401 = vmatpush1.msra.mxu0 0.0
    %3402 = vmatprep.subr.mxu0 0.0
    %3403 = vmatpush1.msra.mxu0 %v3117
    %3404 = vmatprep.subr.mxu0 0.0
    %3405 = vmatpush2.msra.mxu0 0.0
    %3406 = vmatprep.subr.mxu0 0.0
    %3407 = vmatpush2.msra.mxu0 0.0
    %3408 = vmatprep.subr.mxu0 0.0
    %3409 = vmatpush2.msra.mxu0 0.0
    %3410 = vmatprep.subr.mxu0 0.0
    %3411 = vmatpush2.msra.mxu0 0.0
    %3412 = vmatprep.subr.mxu0 0.0
    %3413 = vmatpush2.msra.mxu0 0.0
    %3414 = vmatprep.subr.mxu0 0.0
    %3415 = vmatpush2.msra.mxu0 0.0
    %3416 = vmatprep.subr.mxu0 0.0
    %3417 = vmatpush2.msra.mxu0 0.0
    %3418 = vmatprep.subr.mxu0 0.0
    %3419 = vmatpush2.msra.mxu0 0.0
    %3420 = vmatprep.subr.mxu0 0.0
    %3421 = vmatpush2.msra.mxu0 0.0
    %3422 = vmatprep.subr.mxu0 0.0
    %3423 = vmatpush2.msra.mxu0 0.0
    %3424 = vmatprep.subr.mxu0 0.0
    %3425 = vmatpush2.msra.mxu0 0.0
    %3426 = vmatprep.subr.mxu0 0.0
    %3427 = vmatpush2.msra.mxu0 0.0
    %3428 = vmatprep.subr.mxu0 0.0
    %3429 = vmatpush2.msra.mxu0 0.0
    %3430 = vmatprep.subr.mxu0 0.0
    %3431 = vmatpush2.msra.mxu0 0.0
    %3432 = vmatprep.subr.mxu0 0.0
    %3433 = vmatpush2.msra.mxu0 0.0
    %3434 = vmatprep.subr.mxu0 0.0
    %3435 = vmatpush2.msra.mxu0 0.0
    %3436 = vmatprep.mubr.f32.mxu0 0.0
    %3437 = vmatmul.mubr.f32.gmra.mxu0 %v3370
    %v3438 = vpop.f32.mrf.mxu0
    %v3439 = vadd.f32 0.0, %v3438
    %v3440 = vpop.f32.mrf.mxu0
    %3441 = vdwg.mxu0
    %v3443 = vsel %vm536, %v2952, 0
    %v3446 = vsel %vm536, %v2792, 0
    %3448 = vmatprep.subr.mxu0 0.0
    %3449 = vmatpush1.xpose.msra.mxu0 0.0
    %3450 = vmatprep.subr.mxu0 0.0
    %3451 = vmatpush1.xpose.msra.mxu0 0.0
    %3452 = vmatprep.subr.mxu0 0.0
    %3453 = vmatpush1.xpose.msra.mxu0 0.0
    %3454 = vmatprep.subr.mxu0 0.0
    %3455 = vmatpush1.xpose.msra.mxu0 0.0
    %3456 = vmatprep.subr.mxu0 0.0
    %3457 = vmatpush1.xpose.msra.mxu0 0.0
    %3458 = vmatprep.subr.mxu0 0.0
    %3459 = vmatpush1.xpose.msra.mxu0 0.0
    %3460 = vmatprep.subr.mxu0 0.0
    %3461 = vmatpush1.xpose.msra.mxu0 0.0
    %3462 = vmatprep.subr.mxu0 0.0
    %3463 = vmatpush1.xpose.msra.mxu0 0.0
    %3464 = vmatprep.subr.mxu0 0.0
    %3465 = vmatpush1.xpose.msra.mxu0 0.0
    %3466 = vmatprep.subr.mxu0 0.0
    %3467 = vmatpush1.xpose.msra.mxu0 0.0
    %3468 = vmatprep.subr.mxu0 0.0
    %3469 = vmatpush1.xpose.msra.mxu0 0.0
    %3470 = vmatprep.subr.mxu0 0.0
    %3471 = vmatpush1.xpose.msra.mxu0 0.0
    %3472 = vmatprep.subr.mxu0 0.0
    %3473 = vmatpush1.xpose.msra.mxu0 0.0
    %3474 = vmatprep.subr.mxu0 0.0
    %3475 = vmatpush1.xpose.msra.mxu0 0.0
    %3476 = vmatprep.subr.mxu0 0.0
    %3477 = vmatpush1.xpose.msra.mxu0 0.0
    %3478 = vmatprep.subr.mxu0 0.0
    %3479 = vmatpush1.xpose.msra.mxu0 %v3446
    %3480 = vmatprep.subr.mxu0 0.0
    %3481 = vmatpush2.xpose.msra.mxu0 0.0
    %3482 = vmatprep.subr.mxu0 0.0
    %3483 = vmatpush2.xpose.msra.mxu0 0.0
    %3484 = vmatprep.subr.mxu0 0.0
    %3485 = vmatpush2.xpose.msra.mxu0 0.0
    %3486 = vmatprep.subr.mxu0 0.0
    %3487 = vmatpush2.xpose.msra.mxu0 0.0
    %3488 = vmatprep.subr.mxu0 0.0
    %3489 = vmatpush2.xpose.msra.mxu0 0.0
    %3490 = vmatprep.subr.mxu0 0.0
    %3491 = vmatpush2.xpose.msra.mxu0 0.0
    %3492 = vmatprep.subr.mxu0 0.0
    %3493 = vmatpush2.xpose.msra.mxu0 0.0
    %3494 = vmatprep.subr.mxu0 0.0
    %3495 = vmatpush2.xpose.msra.mxu0 0.0
    %3496 = vmatprep.subr.mxu0 0.0
    %3497 = vmatpush2.xpose.msra.mxu0 0.0
    %3498 = vmatprep.subr.mxu0 0.0
    %3499 = vmatpush2.xpose.msra.mxu0 0.0
    %3500 = vmatprep.subr.mxu0 0.0
    %3501 = vmatpush2.xpose.msra.mxu0 0.0
    %3502 = vmatprep.subr.mxu0 0.0
    %3503 = vmatpush2.xpose.msra.mxu0 0.0
    %3504 = vmatprep.subr.mxu0 0.0
    %3505 = vmatpush2.xpose.msra.mxu0 0.0
    %3506 = vmatprep.subr.mxu0 0.0
    %3507 = vmatpush2.xpose.msra.mxu0 0.0
    %3508 = vmatprep.subr.mxu0 0.0
    %3509 = vmatpush2.xpose.msra.mxu0 0.0
    %3510 = vmatprep.subr.mxu0 0.0
    %3511 = vmatpush2.xpose.msra.mxu0 0.0
    %3512 = vmatprep.mubr.f32.mxu0 0.0
    %3513 = vmatmul.mubr.f32.gmra.mxu0 %v3443
    %v3514 = vpop.f32.mrf.mxu0
    %v3515 = vadd.f32 0.0, %v3514
    %v3516 = vpop.f32.mrf.mxu0
    %3517 = vdwg.mxu0
    %v3519 = vsel %vm536, %v2957, 0
    %v3522 = vsel %vm536, %v2797, 0
    %3524 = vmatprep.subr.mxu0 0.0
    %3525 = vmatpush1.xpose.msra.mxu0 0.0
    %3526 = vmatprep.subr.mxu0 0.0
    %3527 = vmatpush1.xpose.msra.mxu0 0.0
    %3528 = vmatprep.subr.mxu0 0.0
    %3529 = vmatpush1.xpose.msra.mxu0 0.0
    %3530 = vmatprep.subr.mxu0 0.0
    %3531 = vmatpush1.xpose.msra.mxu0 0.0
    %3532 = vmatprep.subr.mxu0 0.0
    %3533 = vmatpush1.xpose.msra.mxu0 0.0
    %3534 = vmatprep.subr.mxu0 0.0
    %3535 = vmatpush1.xpose.msra.mxu0 0.0
    %3536 = vmatprep.subr.mxu0 0.0
    %3537 = vmatpush1.xpose.msra.mxu0 0.0
    %3538 = vmatprep.subr.mxu0 0.0
    %3539 = vmatpush1.xpose.msra.mxu0 0.0
    %3540 = vmatprep.subr.mxu0 0.0
    %3541 = vmatpush1.xpose.msra.mxu0 0.0
    %3542 = vmatprep.subr.mxu0 0.0
    %3543 = vmatpush1.xpose.msra.mxu0 0.0
    %3544 = vmatprep.subr.mxu0 0.0
    %3545 = vmatpush1.xpose.msra.mxu0 0.0
    %3546 = vmatprep.subr.mxu0 0.0
    %3547 = vmatpush1.xpose.msra.mxu0 0.0
    %3548 = vmatprep.subr.mxu0 0.0
    %3549 = vmatpush1.xpose.msra.mxu0 0.0
    %3550 = vmatprep.subr.mxu0 0.0
    %3551 = vmatpush1.xpose.msra.mxu0 0.0
    %3552 = vmatprep.subr.mxu0 0.0
    %3553 = vmatpush1.xpose.msra.mxu0 0.0
    %3554 = vmatprep.subr.mxu0 0.0
    %3555 = vmatpush1.xpose.msra.mxu0 %v3522
    %3556 = vmatprep.subr.mxu0 0.0
    %3557 = vmatpush2.xpose.msra.mxu0 0.0
    %3558 = vmatprep.subr.mxu0 0.0
    %3559 = vmatpush2.xpose.msra.mxu0 0.0
    %3560 = vmatprep.subr.mxu0 0.0
    %3561 = vmatpush2.xpose.msra.mxu0 0.0
    %3562 = vmatprep.subr.mxu0 0.0
    %3563 = vmatpush2.xpose.msra.mxu0 0.0
    %3564 = vmatprep.subr.mxu0 0.0
    %3565 = vmatpush2.xpose.msra.mxu0 0.0
    %3566 = vmatprep.subr.mxu0 0.0
    %3567 = vmatpush2.xpose.msra.mxu0 0.0
    %3568 = vmatprep.subr.mxu0 0.0
    %3569 = vmatpush2.xpose.msra.mxu0 0.0
    %3570 = vmatprep.subr.mxu0 0.0
    %3571 = vmatpush2.xpose.msra.mxu0 0.0
    %3572 = vmatprep.subr.mxu0 0.0
    %3573 = vmatpush2.xpose.msra.mxu0 0.0
    %3574 = vmatprep.subr.mxu0 0.0
    %3575 = vmatpush2.xpose.msra.mxu0 0.0
    %3576 = vmatprep.subr.mxu0 0.0
    %3577 = vmatpush2.xpose.msra.mxu0 0.0
    %3578 = vmatprep.subr.mxu0 0.0
    %3579 = vmatpush2.xpose.msra.mxu0 0.0
    %3580 = vmatprep.subr.mxu0 0.0
    %3581 = vmatpush2.xpose.msra.mxu0 0.0
    %3582 = vmatprep.subr.mxu0 0.0
    %3583 = vmatpush2.xpose.msra.mxu0 0.0
    %3584 = vmatprep.subr.mxu0 0.0
    %3585 = vmatpush2.xpose.msra.mxu0 0.0
    %3586 = vmatprep.subr.mxu0 0.0
    %3587 = vmatpush2.xpose.msra.mxu0 0.0
    %3588 = vmatprep.mubr.f32.mxu0 0.0
    %3589 = vmatmul.mubr.f32.gmra.mxu0 %v3519
    %v3590 = vpop.f32.mrf.mxu0
    %v3591 = vadd.f32 0.0, %v3590
    %v3592 = vpop.f32.mrf.mxu0
    %3593 = vdwg.mxu0
    %v3594 = vmul.f32 %v3515, 0.25
    %v3595 = vmul.f32 %v3591, 0.25
    %v3596 = vsel %vm691, %v3594, -inf
    %3597 = vmax.xlane.f32.xlu0 %v3596
    %v3598 = vpop.xlane.xlu0 %3597
    %v3599 = vsel %vm691, %v3595, -inf
    %3600 = vmax.xlane.f32.xlu0 %v3599
    %v3601 = vpop.xlane.xlu0 %3600
    %v3602 = vsub.f32 %v3594, %v3598
    %v3603 = vsub.f32 %v3595, %v3601
    %v3604 = vmul.f32 %v3602, 1.442695
    %v3605 = vpow.pop %v3604
    %v3606 = vmul.f32 %v3603, 1.442695
    %v3607 = vpow.pop %v3606
    %v3608 = vsel %vm691, %v3605, 0.0
    %3609 = vadd.xlane.f32.xlu0 %v3608
    %v3610 = vpop.xlane.xlu0 %3609
    %v3611 = vsel %vm691, %v3607, 0.0
    %3612 = vadd.xlane.f32.xlu0 %v3611
    %v3613 = vpop.xlane.xlu0 %3612
    %v3614 = vrcp.pop %v3610
    %v3615 = vrcp.pop %v3613
    %v3616 = vmul.f32 %v3605, %v3614
    %v3617 = vmul.f32 %v3607, %v3615
    %v3619 = vsel %vm691, %v3616, 0
    %3621 = vmatprep.subr.mxu0 0.0
    %3622 = vmatpush1.msra.mxu0 0.0
    %3623 = vmatprep.subr.mxu0 0.0
    %3624 = vmatpush1.msra.mxu0 0.0
    %3625 = vmatprep.subr.mxu0 0.0
    %3626 = vmatpush1.msra.mxu0 0.0
    %3627 = vmatprep.subr.mxu0 0.0
    %3628 = vmatpush1.msra.mxu0 0.0
    %3629 = vmatprep.subr.mxu0 0.0
    %3630 = vmatpush1.msra.mxu0 0.0
    %3631 = vmatprep.subr.mxu0 0.0
    %3632 = vmatpush1.msra.mxu0 0.0
    %3633 = vmatprep.subr.mxu0 0.0
    %3634 = vmatpush1.msra.mxu0 0.0
    %3635 = vmatprep.subr.mxu0 0.0
    %3636 = vmatpush1.msra.mxu0 0.0
    %3637 = vmatprep.subr.mxu0 0.0
    %3638 = vmatpush1.msra.mxu0 0.0
    %3639 = vmatprep.subr.mxu0 0.0
    %3640 = vmatpush1.msra.mxu0 0.0
    %3641 = vmatprep.subr.mxu0 0.0
    %3642 = vmatpush1.msra.mxu0 0.0
    %3643 = vmatprep.subr.mxu0 0.0
    %3644 = vmatpush1.msra.mxu0 0.0
    %3645 = vmatprep.subr.mxu0 0.0
    %3646 = vmatpush1.msra.mxu0 0.0
    %3647 = vmatprep.subr.mxu0 0.0
    %3648 = vmatpush1.msra.mxu0 0.0
    %3649 = vmatprep.subr.mxu0 0.0
    %3650 = vmatpush1.msra.mxu0 0.0
    %3651 = vmatprep.subr.mxu0 0.0
    %3652 = vmatpush1.msra.mxu0 %v2872
    %3653 = vmatprep.subr.mxu0 0.0
    %3654 = vmatpush2.msra.mxu0 0.0
    %3655 = vmatprep.subr.mxu0 0.0
    %3656 = vmatpush2.msra.mxu0 0.0
    %3657 = vmatprep.subr.mxu0 0.0
    %3658 = vmatpush2.msra.mxu0 0.0
    %3659 = vmatprep.subr.mxu0 0.0
    %3660 = vmatpush2.msra.mxu0 0.0
    %3661 = vmatprep.subr.mxu0 0.0
    %3662 = vmatpush2.msra.mxu0 0.0
    %3663 = vmatprep.subr.mxu0 0.0
    %3664 = vmatpush2.msra.mxu0 0.0
    %3665 = vmatprep.subr.mxu0 0.0
    %3666 = vmatpush2.msra.mxu0 0.0
    %3667 = vmatprep.subr.mxu0 0.0
    %3668 = vmatpush2.msra.mxu0 0.0
    %3669 = vmatprep.subr.mxu0 0.0
    %3670 = vmatpush2.msra.mxu0 0.0
    %3671 = vmatprep.subr.mxu0 0.0
    %3672 = vmatpush2.msra.mxu0 0.0
    %3673 = vmatprep.subr.mxu0 0.0
    %3674 = vmatpush2.msra.mxu0 0.0
    %3675 = vmatprep.subr.mxu0 0.0
    %3676 = vmatpush2.msra.mxu0 0.0
    %3677 = vmatprep.subr.mxu0 0.0
    %3678 = vmatpush2.msra.mxu0 0.0
    %3679 = vmatprep.subr.mxu0 0.0
    %3680 = vmatpush2.msra.mxu0 0.0
    %3681 = vmatprep.subr.mxu0 0.0
    %3682 = vmatpush2.msra.mxu0 0.0
    %3683 = vmatprep.subr.mxu0 0.0
    %3684 = vmatpush2.msra.mxu0 0.0
    %3685 = vmatprep.mubr.f32.mxu0 0.0
    %3686 = vmatmul.mubr.f32.gmra.mxu0 %v3619
    %v3687 = vpop.f32.mrf.mxu0
    %v3688 = vadd.f32 0.0, %v3687
    %v3689 = vpop.f32.mrf.mxu0
    %3690 = vdwg.mxu0
    %v3692 = vsel %vm691, %v3617, 0
    %3694 = vmatprep.subr.mxu0 0.0
    %3695 = vmatpush1.msra.mxu0 0.0
    %3696 = vmatprep.subr.mxu0 0.0
    %3697 = vmatpush1.msra.mxu0 0.0
    %3698 = vmatprep.subr.mxu0 0.0
    %3699 = vmatpush1.msra.mxu0 0.0
    %3700 = vmatprep.subr.mxu0 0.0
    %3701 = vmatpush1.msra.mxu0 0.0
    %3702 = vmatprep.subr.mxu0 0.0
    %3703 = vmatpush1.msra.mxu0 0.0
    %3704 = vmatprep.subr.mxu0 0.0
    %3705 = vmatpush1.msra.mxu0 0.0
    %3706 = vmatprep.subr.mxu0 0.0
    %3707 = vmatpush1.msra.mxu0 0.0
    %3708 = vmatprep.subr.mxu0 0.0
    %3709 = vmatpush1.msra.mxu0 0.0
    %3710 = vmatprep.subr.mxu0 0.0
    %3711 = vmatpush1.msra.mxu0 0.0
    %3712 = vmatprep.subr.mxu0 0.0
    %3713 = vmatpush1.msra.mxu0 0.0
    %3714 = vmatprep.subr.mxu0 0.0
    %3715 = vmatpush1.msra.mxu0 0.0
    %3716 = vmatprep.subr.mxu0 0.0
    %3717 = vmatpush1.msra.mxu0 0.0
    %3718 = vmatprep.subr.mxu0 0.0
    %3719 = vmatpush1.msra.mxu0 0.0
    %3720 = vmatprep.subr.mxu0 0.0
    %3721 = vmatpush1.msra.mxu0 0.0
    %3722 = vmatprep.subr.mxu0 0.0
    %3723 = vmatpush1.msra.mxu0 0.0
    %3724 = vmatprep.subr.mxu0 0.0
    %3725 = vmatpush1.msra.mxu0 %v2877
    %3726 = vmatprep.subr.mxu0 0.0
    %3727 = vmatpush2.msra.mxu0 0.0
    %3728 = vmatprep.subr.mxu0 0.0
    %3729 = vmatpush2.msra.mxu0 0.0
    %3730 = vmatprep.subr.mxu0 0.0
    %3731 = vmatpush2.msra.mxu0 0.0
    %3732 = vmatprep.subr.mxu0 0.0
    %3733 = vmatpush2.msra.mxu0 0.0
    %3734 = vmatprep.subr.mxu0 0.0
    %3735 = vmatpush2.msra.mxu0 0.0
    %3736 = vmatprep.subr.mxu0 0.0
    %3737 = vmatpush2.msra.mxu0 0.0
    %3738 = vmatprep.subr.mxu0 0.0
    %3739 = vmatpush2.msra.mxu0 0.0
    %3740 = vmatprep.subr.mxu0 0.0
    %3741 = vmatpush2.msra.mxu0 0.0
    %3742 = vmatprep.subr.mxu0 0.0
    %3743 = vmatpush2.msra.mxu0 0.0
    %3744 = vmatprep.subr.mxu0 0.0
    %3745 = vmatpush2.msra.mxu0 0.0
    %3746 = vmatprep.subr.mxu0 0.0
    %3747 = vmatpush2.msra.mxu0 0.0
    %3748 = vmatprep.subr.mxu0 0.0
    %3749 = vmatpush2.msra.mxu0 0.0
    %3750 = vmatprep.subr.mxu0 0.0
    %3751 = vmatpush2.msra.mxu0 0.0
    %3752 = vmatprep.subr.mxu0 0.0
    %3753 = vmatpush2.msra.mxu0 0.0
    %3754 = vmatprep.subr.mxu0 0.0
    %3755 = vmatpush2.msra.mxu0 0.0
    %3756 = vmatprep.subr.mxu0 0.0
    %3757 = vmatpush2.msra.mxu0 0.0
    %3758 = vmatprep.mubr.f32.mxu0 0.0
    %3759 = vmatmul.mubr.f32.gmra.mxu0 %v3692
    %v3760 = vpop.f32.mrf.mxu0
    %v3761 = vadd.f32 0.0, %v3760
    %v3762 = vpop.f32.mrf.mxu0
    %3763 = vdwg.mxu0
    %s3764 = scalar_lea.vmem %s8, 32
    %v3765 = vld [vmem:[%s3764] sm:$0xff]
    %v3766 = vld [vmem:[%s3764 + $0x8] sm:$0xff]
    %v3768 = vsel %vm536, %v3366, 0
    %v3771 = vsel %vm536, %v3439, 0
    %3773 = vmatprep.subr.mxu0 0.0
    %3774 = vmatpush1.msra.mxu0 0.0
    %3775 = vmatprep.subr.mxu0 0.0
    %3776 = vmatpush1.msra.mxu0 0.0
    %3777 = vmatprep.subr.mxu0 0.0
    %3778 = vmatpush1.msra.mxu0 0.0
    %3779 = vmatprep.subr.mxu0 0.0
    %3780 = vmatpush1.msra.mxu0 0.0
    %3781 = vmatprep.subr.mxu0 0.0
    %3782 = vmatpush1.msra.mxu0 0.0
    %3783 = vmatprep.subr.mxu0 0.0
    %3784 = vmatpush1.msra.mxu0 0.0
    %3785 = vmatprep.subr.mxu0 0.0
    %3786 = vmatpush1.msra.mxu0 0.0
    %3787 = vmatprep.subr.mxu0 0.0
    %3788 = vmatpush1.msra.mxu0 0.0
    %3789 = vmatprep.subr.mxu0 0.0
    %3790 = vmatpush1.msra.mxu0 0.0
    %3791 = vmatprep.subr.mxu0 0.0
    %3792 = vmatpush1.msra.mxu0 0.0
    %3793 = vmatprep.subr.mxu0 0.0
    %3794 = vmatpush1.msra.mxu0 0.0
    %3795 = vmatprep.subr.mxu0 0.0
    %3796 = vmatpush1.msra.mxu0 0.0
    %3797 = vmatprep.subr.mxu0 0.0
    %3798 = vmatpush1.msra.mxu0 0.0
    %3799 = vmatprep.subr.mxu0 0.0
    %3800 = vmatpush1.msra.mxu0 0.0
    %3801 = vmatprep.subr.mxu0 0.0
    %3802 = vmatpush1.msra.mxu0 %v3766
    %3803 = vmatprep.subr.mxu0 0.0
    %3804 = vmatpush1.msra.mxu0 %v3765
    %3805 = vmatprep.subr.mxu0 0.0
    %3806 = vmatpush2.msra.mxu0 0.0
    %3807 = vmatprep.subr.mxu0 0.0
    %3808 = vmatpush2.msra.mxu0 0.0
    %3809 = vmatprep.subr.mxu0 0.0
    %3810 = vmatpush2.msra.mxu0 0.0
    %3811 = vmatprep.subr.mxu0 0.0
    %3812 = vmatpush2.msra.mxu0 0.0
    %3813 = vmatprep.subr.mxu0 0.0
    %3814 = vmatpush2.msra.mxu0 0.0
    %3815 = vmatprep.subr.mxu0 0.0
    %3816 = vmatpush2.msra.mxu0 0.0
    %3817 = vmatprep.subr.mxu0 0.0
    %3818 = vmatpush2.msra.mxu0 0.0
    %3819 = vmatprep.subr.mxu0 0.0
    %3820 = vmatpush2.msra.mxu0 0.0
    %3821 = vmatprep.subr.mxu0 0.0
    %3822 = vmatpush2.msra.mxu0 0.0
    %3823 = vmatprep.subr.mxu0 0.0
    %3824 = vmatpush2.msra.mxu0 0.0
    %3825 = vmatprep.subr.mxu0 0.0
    %3826 = vmatpush2.msra.mxu0 0.0
    %3827 = vmatprep.subr.mxu0 0.0
    %3828 = vmatpush2.msra.mxu0 0.0
    %3829 = vmatprep.subr.mxu0 0.0
    %3830 = vmatpush2.msra.mxu0 0.0
    %3831 = vmatprep.subr.mxu0 0.0
    %3832 = vmatpush2.msra.mxu0 0.0
    %3833 = vmatprep.subr.mxu0 0.0
    %3834 = vmatpush2.msra.mxu0 0.0
    %3835 = vmatprep.subr.mxu0 0.0
    %3836 = vmatpush2.msra.mxu0 0.0
    %3837 = vmatprep.mubr.f32.mxu0 0.0
    %3838 = vmatmul.mubr.f32.gmra.mxu0 %v3768
    %v3839 = vpop.f32.mrf.mxu0
    %v3840 = vadd.f32 0.0, %v3839
    %v3841 = vpop.f32.mrf.mxu0
    %3842 = vmatprep.mubr.f32.mxu0 0.0
    %3843 = vmatmul.mubr.f32.gmra.mxu0 %v3771
    %v3844 = vpop.f32.mrf.mxu0
    %v3845 = vadd.f32 0.0, %v3844
    %v3846 = vpop.f32.mrf.mxu0
    %3847 = vdwg.mxu0
    %v3848 = vadd.f32 %v2467, %v3840
    %v3849 = vadd.f32 %v2472, %v3845
    %s3850 = scalar_lea.vmem %s10, 32
    %v3851 = vld [vmem:[%s3850] sm:$0xff]
    %v3852 = vld [vmem:[%s3850 + $0x8] sm:$0xff]
    %v3854 = vsel %vm536, %v3688, 0
    %v3857 = vsel %vm536, %v3761, 0
    %3859 = vmatprep.subr.mxu0 0.0
    %3860 = vmatpush1.msra.mxu0 0.0
    %3861 = vmatprep.subr.mxu0 0.0
    %3862 = vmatpush1.msra.mxu0 0.0
    %3863 = vmatprep.subr.mxu0 0.0
    %3864 = vmatpush1.msra.mxu0 0.0
    %3865 = vmatprep.subr.mxu0 0.0
    %3866 = vmatpush1.msra.mxu0 0.0
    %3867 = vmatprep.subr.mxu0 0.0
    %3868 = vmatpush1.msra.mxu0 0.0
    %3869 = vmatprep.subr.mxu0 0.0
    %3870 = vmatpush1.msra.mxu0 0.0
    %3871 = vmatprep.subr.mxu0 0.0
    %3872 = vmatpush1.msra.mxu0 0.0
    %3873 = vmatprep.subr.mxu0 0.0
    %3874 = vmatpush1.msra.mxu0 0.0
    %3875 = vmatprep.subr.mxu0 0.0
    %3876 = vmatpush1.msra.mxu0 0.0
    %3877 = vmatprep.subr.mxu0 0.0
    %3878 = vmatpush1.msra.mxu0 0.0
    %3879 = vmatprep.subr.mxu0 0.0
    %3880 = vmatpush1.msra.mxu0 0.0
    %3881 = vmatprep.subr.mxu0 0.0
    %3882 = vmatpush1.msra.mxu0 0.0
    %3883 = vmatprep.subr.mxu0 0.0
    %3884 = vmatpush1.msra.mxu0 0.0
    %3885 = vmatprep.subr.mxu0 0.0
    %3886 = vmatpush1.msra.mxu0 0.0
    %3887 = vmatprep.subr.mxu0 0.0
    %3888 = vmatpush1.msra.mxu0 %v3852
    %3889 = vmatprep.subr.mxu0 0.0
    %3890 = vmatpush1.msra.mxu0 %v3851
    %3891 = vmatprep.subr.mxu0 0.0
    %3892 = vmatpush2.msra.mxu0 0.0
    %3893 = vmatprep.subr.mxu0 0.0
    %3894 = vmatpush2.msra.mxu0 0.0
    %3895 = vmatprep.subr.mxu0 0.0
    %3896 = vmatpush2.msra.mxu0 0.0
    %3897 = vmatprep.subr.mxu0 0.0
    %3898 = vmatpush2.msra.mxu0 0.0
    %3899 = vmatprep.subr.mxu0 0.0
    %3900 = vmatpush2.msra.mxu0 0.0
    %3901 = vmatprep.subr.mxu0 0.0
    %3902 = vmatpush2.msra.mxu0 0.0
    %3903 = vmatprep.subr.mxu0 0.0
    %3904 = vmatpush2.msra.mxu0 0.0
    %3905 = vmatprep.subr.mxu0 0.0
    %3906 = vmatpush2.msra.mxu0 0.0
    %3907 = vmatprep.subr.mxu0 0.0
    %3908 = vmatpush2.msra.mxu0 0.0
    %3909 = vmatprep.subr.mxu0 0.0
    %3910 = vmatpush2.msra.mxu0 0.0
    %3911 = vmatprep.subr.mxu0 0.0
    %3912 = vmatpush2.msra.mxu0 0.0
    %3913 = vmatprep.subr.mxu0 0.0
    %3914 = vmatpush2.msra.mxu0 0.0
    %3915 = vmatprep.subr.mxu0 0.0
    %3916 = vmatpush2.msra.mxu0 0.0
    %3917 = vmatprep.subr.mxu0 0.0
    %3918 = vmatpush2.msra.mxu0 0.0
    %3919 = vmatprep.subr.mxu0 0.0
    %3920 = vmatpush2.msra.mxu0 0.0
    %3921 = vmatprep.subr.mxu0 0.0
    %3922 = vmatpush2.msra.mxu0 0.0
    %3923 = vmatprep.mubr.f32.mxu0 0.0
    %3924 = vmatmul.mubr.f32.gmra.mxu0 %v3854
    %v3925 = vpop.f32.mrf.mxu0
    %v3926 = vadd.f32 0.0, %v3925
    %v3927 = vpop.f32.mrf.mxu0
    %3928 = vmatprep.mubr.f32.mxu0 0.0
    %3929 = vmatmul.mubr.f32.gmra.mxu0 %v3857
    %v3930 = vpop.f32.mrf.mxu0
    %v3931 = vadd.f32 0.0, %v3930
    %v3932 = vpop.f32.mrf.mxu0
    %3933 = vdwg.mxu0
    %v3934 = vadd.f32 %v2632, %v3926
    %v3935 = vadd.f32 %v2637, %v3931
    %s3936 = scalar_lea.vmem %s2, 96
    %v3937 = vld [vmem:[%s3936] sm:$0xff]
    %v3938 = vld [vmem:[%s3936 + $0x8] sm:$0xff]
    %v3939 = vld [vmem:[%s3936 + $0x10] sm:$0xff]
    %v3940 = vld [vmem:[%s3936 + $0x18] sm:$0xff]
    %3941 = vmatprep.subr.mxu0 0.0
    %3942 = vmatpush1.msra.mxu0 0.0
    %3943 = vmatprep.subr.mxu0 0.0
    %3944 = vmatpush1.msra.mxu0 0.0
    %3945 = vmatprep.subr.mxu0 0.0
    %3946 = vmatpush1.msra.mxu0 0.0
    %3947 = vmatprep.subr.mxu0 0.0
    %3948 = vmatpush1.msra.mxu0 0.0
    %3949 = vmatprep.subr.mxu0 0.0
    %3950 = vmatpush1.msra.mxu0 0.0
    %3951 = vmatprep.subr.mxu0 0.0
    %3952 = vmatpush1.msra.mxu0 0.0
    %3953 = vmatprep.subr.mxu0 0.0
    %3954 = vmatpush1.msra.mxu0 0.0
    %3955 = vmatprep.subr.mxu0 0.0
    %3956 = vmatpush1.msra.mxu0 0.0
    %3957 = vmatprep.subr.mxu0 0.0
    %3958 = vmatpush1.msra.mxu0 0.0
    %3959 = vmatprep.subr.mxu0 0.0
    %3960 = vmatpush1.msra.mxu0 0.0
    %3961 = vmatprep.subr.mxu0 0.0
    %3962 = vmatpush1.msra.mxu0 0.0
    %3963 = vmatprep.subr.mxu0 0.0
    %3964 = vmatpush1.msra.mxu0 0.0
    %3965 = vmatprep.subr.mxu0 0.0
    %3966 = vmatpush1.msra.mxu0 %v3940
    %3967 = vmatprep.subr.mxu0 0.0
    %3968 = vmatpush1.msra.mxu0 %v3939
    %3969 = vmatprep.subr.mxu0 0.0
    %3970 = vmatpush1.msra.mxu0 %v3938
    %3971 = vmatprep.subr.mxu0 0.0
    %3972 = vmatpush1.msra.mxu0 %v3937
    %3973 = vmatprep.subr.mxu0 0.0
    %3974 = vmatpush2.msra.mxu0 0.0
    %3975 = vmatprep.subr.mxu0 0.0
    %3976 = vmatpush2.msra.mxu0 0.0
    %3977 = vmatprep.subr.mxu0 0.0
    %3978 = vmatpush2.msra.mxu0 0.0
    %3979 = vmatprep.subr.mxu0 0.0
    %3980 = vmatpush2.msra.mxu0 0.0
    %3981 = vmatprep.subr.mxu0 0.0
    %3982 = vmatpush2.msra.mxu0 0.0
    %3983 = vmatprep.subr.mxu0 0.0
    %3984 = vmatpush2.msra.mxu0 0.0
    %3985 = vmatprep.subr.mxu0 0.0
    %3986 = vmatpush2.msra.mxu0 0.0
    %3987 = vmatprep.subr.mxu0 0.0
    %3988 = vmatpush2.msra.mxu0 0.0
    %3989 = vmatprep.subr.mxu0 0.0
    %3990 = vmatpush2.msra.mxu0 0.0
    %3991 = vmatprep.subr.mxu0 0.0
    %3992 = vmatpush2.msra.mxu0 0.0
    %3993 = vmatprep.subr.mxu0 0.0
    %3994 = vmatpush2.msra.mxu0 0.0
    %3995 = vmatprep.subr.mxu0 0.0
    %3996 = vmatpush2.msra.mxu0 0.0
    %3997 = vmatprep.subr.mxu0 0.0
    %3998 = vmatpush2.msra.mxu0 0.0
    %3999 = vmatprep.subr.mxu0 0.0
    %4000 = vmatpush2.msra.mxu0 0.0
    %4001 = vmatprep.subr.mxu0 0.0
    %4002 = vmatpush2.msra.mxu0 0.0
    %4003 = vmatprep.subr.mxu0 0.0
    %4004 = vmatpush2.msra.mxu0 0.0
    %4005 = vmatprep.mubr.f32.mxu0 0.0
    %4006 = vmatmul.mubr.f32.gmra.mxu0 %v55
    %v4007 = vpop.f32.mrf.mxu0
    %v4008 = vadd.f32 0.0, %v4007
    %v4009 = vpop.f32.mrf.mxu0
    %4010 = vmatprep.mubr.f32.mxu0 0.0
    %4011 = vmatmul.mubr.f32.gmra.mxu0 %v58
    %v4012 = vpop.f32.mrf.mxu0
    %v4013 = vadd.f32 0.0, %v4012
    %v4014 = vpop.f32.mrf.mxu0
    %4015 = vdwg.mxu0
    %s4016 = scalar_lea.vmem %s3, 96
    %v4017 = vld [vmem:[%s4016] sm:$0xff]
    %v4018 = vld [vmem:[%s4016 + $0x8] sm:$0xff]
    %v4019 = vld [vmem:[%s4016 + $0x10] sm:$0xff]
    %v4020 = vld [vmem:[%s4016 + $0x18] sm:$0xff]
    %4021 = vmatprep.subr.mxu0 0.0
    %4022 = vmatpush1.msra.mxu0 0.0
    %4023 = vmatprep.subr.mxu0 0.0
    %4024 = vmatpush1.msra.mxu0 0.0
    %4025 = vmatprep.subr.mxu0 0.0
    %4026 = vmatpush1.msra.mxu0 0.0
    %4027 = vmatprep.subr.mxu0 0.0
    %4028 = vmatpush1.msra.mxu0 0.0
    %4029 = vmatprep.subr.mxu0 0.0
    %4030 = vmatpush1.msra.mxu0 0.0
    %4031 = vmatprep.subr.mxu0 0.0
    %4032 = vmatpush1.msra.mxu0 0.0
    %4033 = vmatprep.subr.mxu0 0.0
    %4034 = vmatpush1.msra.mxu0 0.0
    %4035 = vmatprep.subr.mxu0 0.0
    %4036 = vmatpush1.msra.mxu0 0.0
    %4037 = vmatprep.subr.mxu0 0.0
    %4038 = vmatpush1.msra.mxu0 0.0
    %4039 = vmatprep.subr.mxu0 0.0
    %4040 = vmatpush1.msra.mxu0 0.0
    %4041 = vmatprep.subr.mxu0 0.0
    %4042 = vmatpush1.msra.mxu0 0.0
    %4043 = vmatprep.subr.mxu0 0.0
    %4044 = vmatpush1.msra.mxu0 0.0
    %4045 = vmatprep.subr.mxu0 0.0
    %4046 = vmatpush1.msra.mxu0 %v4020
    %4047 = vmatprep.subr.mxu0 0.0
    %4048 = vmatpush1.msra.mxu0 %v4019
    %4049 = vmatprep.subr.mxu0 0.0
    %4050 = vmatpush1.msra.mxu0 %v4018
    %4051 = vmatprep.subr.mxu0 0.0
    %4052 = vmatpush1.msra.mxu0 %v4017
    %4053 = vmatprep.subr.mxu0 0.0
    %4054 = vmatpush2.msra.mxu0 0.0
    %4055 = vmatprep.subr.mxu0 0.0
    %4056 = vmatpush2.msra.mxu0 0.0
    %4057 = vmatprep.subr.mxu0 0.0
    %4058 = vmatpush2.msra.mxu0 0.0
    %4059 = vmatprep.subr.mxu0 0.0
    %4060 = vmatpush2.msra.mxu0 0.0
    %4061 = vmatprep.subr.mxu0 0.0
    %4062 = vmatpush2.msra.mxu0 0.0
    %4063 = vmatprep.subr.mxu0 0.0
    %4064 = vmatpush2.msra.mxu0 0.0
    %4065 = vmatprep.subr.mxu0 0.0
    %4066 = vmatpush2.msra.mxu0 0.0
    %4067 = vmatprep.subr.mxu0 0.0
    %4068 = vmatpush2.msra.mxu0 0.0
    %4069 = vmatprep.subr.mxu0 0.0
    %4070 = vmatpush2.msra.mxu0 0.0
    %4071 = vmatprep.subr.mxu0 0.0
    %4072 = vmatpush2.msra.mxu0 0.0
    %4073 = vmatprep.subr.mxu0 0.0
    %4074 = vmatpush2.msra.mxu0 0.0
    %4075 = vmatprep.subr.mxu0 0.0
    %4076 = vmatpush2.msra.mxu0 0.0
    %4077 = vmatprep.subr.mxu0 0.0
    %4078 = vmatpush2.msra.mxu0 0.0
    %4079 = vmatprep.subr.mxu0 0.0
    %4080 = vmatpush2.msra.mxu0 0.0
    %4081 = vmatprep.subr.mxu0 0.0
    %4082 = vmatpush2.msra.mxu0 0.0
    %4083 = vmatprep.subr.mxu0 0.0
    %4084 = vmatpush2.msra.mxu0 0.0
    %4085 = vmatprep.mubr.f32.mxu0 0.0
    %4086 = vmatmul.mubr.f32.gmra.mxu0 %v55
    %v4087 = vpop.f32.mrf.mxu0
    %v4088 = vadd.f32 0.0, %v4087
    %v4089 = vpop.f32.mrf.mxu0
    %4090 = vmatprep.mubr.f32.mxu0 0.0
    %4091 = vmatmul.mubr.f32.gmra.mxu0 %v58
    %v4092 = vpop.f32.mrf.mxu0
    %v4093 = vadd.f32 0.0, %v4092
    %v4094 = vpop.f32.mrf.mxu0
    %4095 = vdwg.mxu0
    %s4096 = scalar_lea.vmem %s4, 96
    %v4097 = vld [vmem:[%s4096] sm:$0xff]
    %v4098 = vld [vmem:[%s4096 + $0x8] sm:$0xff]
    %v4099 = vld [vmem:[%s4096 + $0x10] sm:$0xff]
    %v4100 = vld [vmem:[%s4096 + $0x18] sm:$0xff]
    %4101 = vmatprep.subr.mxu0 0.0
    %4102 = vmatpush1.msra.mxu0 0.0
    %4103 = vmatprep.subr.mxu0 0.0
    %4104 = vmatpush1.msra.mxu0 0.0
    %4105 = vmatprep.subr.mxu0 0.0
    %4106 = vmatpush1.msra.mxu0 0.0
    %4107 = vmatprep.subr.mxu0 0.0
    %4108 = vmatpush1.msra.mxu0 0.0
    %4109 = vmatprep.subr.mxu0 0.0
    %4110 = vmatpush1.msra.mxu0 0.0
    %4111 = vmatprep.subr.mxu0 0.0
    %4112 = vmatpush1.msra.mxu0 0.0
    %4113 = vmatprep.subr.mxu0 0.0
    %4114 = vmatpush1.msra.mxu0 0.0
    %4115 = vmatprep.subr.mxu0 0.0
    %4116 = vmatpush1.msra.mxu0 0.0
    %4117 = vmatprep.subr.mxu0 0.0
    %4118 = vmatpush1.msra.mxu0 0.0
    %4119 = vmatprep.subr.mxu0 0.0
    %4120 = vmatpush1.msra.mxu0 0.0
    %4121 = vmatprep.subr.mxu0 0.0
    %4122 = vmatpush1.msra.mxu0 0.0
    %4123 = vmatprep.subr.mxu0 0.0
    %4124 = vmatpush1.msra.mxu0 0.0
    %4125 = vmatprep.subr.mxu0 0.0
    %4126 = vmatpush1.msra.mxu0 %v4100
    %4127 = vmatprep.subr.mxu0 0.0
    %4128 = vmatpush1.msra.mxu0 %v4099
    %4129 = vmatprep.subr.mxu0 0.0
    %4130 = vmatpush1.msra.mxu0 %v4098
    %4131 = vmatprep.subr.mxu0 0.0
    %4132 = vmatpush1.msra.mxu0 %v4097
    %4133 = vmatprep.subr.mxu0 0.0
    %4134 = vmatpush2.msra.mxu0 0.0
    %4135 = vmatprep.subr.mxu0 0.0
    %4136 = vmatpush2.msra.mxu0 0.0
    %4137 = vmatprep.subr.mxu0 0.0
    %4138 = vmatpush2.msra.mxu0 0.0
    %4139 = vmatprep.subr.mxu0 0.0
    %4140 = vmatpush2.msra.mxu0 0.0
    %4141 = vmatprep.subr.mxu0 0.0
    %4142 = vmatpush2.msra.mxu0 0.0
    %4143 = vmatprep.subr.mxu0 0.0
    %4144 = vmatpush2.msra.mxu0 0.0
    %4145 = vmatprep.subr.mxu0 0.0
    %4146 = vmatpush2.msra.mxu0 0.0
    %4147 = vmatprep.subr.mxu0 0.0
    %4148 = vmatpush2.msra.mxu0 0.0
    %4149 = vmatprep.subr.mxu0 0.0
    %4150 = vmatpush2.msra.mxu0 0.0
    %4151 = vmatprep.subr.mxu0 0.0
    %4152 = vmatpush2.msra.mxu0 0.0
    %4153 = vmatprep.subr.mxu0 0.0
    %4154 = vmatpush2.msra.mxu0 0.0
    %4155 = vmatprep.subr.mxu0 0.0
    %4156 = vmatpush2.msra.mxu0 0.0
    %4157 = vmatprep.subr.mxu0 0.0
    %4158 = vmatpush2.msra.mxu0 0.0
    %4159 = vmatprep.subr.mxu0 0.0
    %4160 = vmatpush2.msra.mxu0 0.0
    %4161 = vmatprep.subr.mxu0 0.0
    %4162 = vmatpush2.msra.mxu0 0.0
    %4163 = vmatprep.subr.mxu0 0.0
    %4164 = vmatpush2.msra.mxu0 0.0
    %4165 = vmatprep.mubr.f32.mxu0 0.0
    %4166 = vmatmul.mubr.f32.gmra.mxu0 %v55
    %v4167 = vpop.f32.mrf.mxu0
    %v4168 = vadd.f32 0.0, %v4167
    %v4169 = vpop.f32.mrf.mxu0
    %4170 = vmatprep.mubr.f32.mxu0 0.0
    %4171 = vmatmul.mubr.f32.gmra.mxu0 %v58
    %v4172 = vpop.f32.mrf.mxu0
    %v4173 = vadd.f32 0.0, %v4172
    %v4174 = vpop.f32.mrf.mxu0
    %4175 = vdwg.mxu0
    %s4176 = scalar_lea.vmem %s5, 96
    %v4177 = vld [vmem:[%s4176] sm:$0xff]
    %v4178 = vld [vmem:[%s4176 + $0x8] sm:$0xff]
    %v4179 = vld [vmem:[%s4176 + $0x10] sm:$0xff]
    %v4180 = vld [vmem:[%s4176 + $0x18] sm:$0xff]
    %4181 = vmatprep.subr.mxu0 0.0
    %4182 = vmatpush1.msra.mxu0 0.0
    %4183 = vmatprep.subr.mxu0 0.0
    %4184 = vmatpush1.msra.mxu0 0.0
    %4185 = vmatprep.subr.mxu0 0.0
    %4186 = vmatpush1.msra.mxu0 0.0
    %4187 = vmatprep.subr.mxu0 0.0
    %4188 = vmatpush1.msra.mxu0 0.0
    %4189 = vmatprep.subr.mxu0 0.0
    %4190 = vmatpush1.msra.mxu0 0.0
    %4191 = vmatprep.subr.mxu0 0.0
    %4192 = vmatpush1.msra.mxu0 0.0
    %4193 = vmatprep.subr.mxu0 0.0
    %4194 = vmatpush1.msra.mxu0 0.0
    %4195 = vmatprep.subr.mxu0 0.0
    %4196 = vmatpush1.msra.mxu0 0.0
    %4197 = vmatprep.subr.mxu0 0.0
    %4198 = vmatpush1.msra.mxu0 0.0
    %4199 = vmatprep.subr.mxu0 0.0
    %4200 = vmatpush1.msra.mxu0 0.0
    %4201 = vmatprep.subr.mxu0 0.0
    %4202 = vmatpush1.msra.mxu0 0.0
    %4203 = vmatprep.subr.mxu0 0.0
    %4204 = vmatpush1.msra.mxu0 0.0
    %4205 = vmatprep.subr.mxu0 0.0
    %4206 = vmatpush1.msra.mxu0 %v4180
    %4207 = vmatprep.subr.mxu0 0.0
    %4208 = vmatpush1.msra.mxu0 %v4179
    %4209 = vmatprep.subr.mxu0 0.0
    %4210 = vmatpush1.msra.mxu0 %v4178
    %4211 = vmatprep.subr.mxu0 0.0
    %4212 = vmatpush1.msra.mxu0 %v4177
    %4213 = vmatprep.subr.mxu0 0.0
    %4214 = vmatpush2.msra.mxu0 0.0
    %4215 = vmatprep.subr.mxu0 0.0
    %4216 = vmatpush2.msra.mxu0 0.0
    %4217 = vmatprep.subr.mxu0 0.0
    %4218 = vmatpush2.msra.mxu0 0.0
    %4219 = vmatprep.subr.mxu0 0.0
    %4220 = vmatpush2.msra.mxu0 0.0
    %4221 = vmatprep.subr.mxu0 0.0
    %4222 = vmatpush2.msra.mxu0 0.0
    %4223 = vmatprep.subr.mxu0 0.0
    %4224 = vmatpush2.msra.mxu0 0.0
    %4225 = vmatprep.subr.mxu0 0.0
    %4226 = vmatpush2.msra.mxu0 0.0
    %4227 = vmatprep.subr.mxu0 0.0
    %4228 = vmatpush2.msra.mxu0 0.0
    %4229 = vmatprep.subr.mxu0 0.0
    %4230 = vmatpush2.msra.mxu0 0.0
    %4231 = vmatprep.subr.mxu0 0.0
    %4232 = vmatpush2.msra.mxu0 0.0
    %4233 = vmatprep.subr.mxu0 0.0
    %4234 = vmatpush2.msra.mxu0 0.0
    %4235 = vmatprep.subr.mxu0 0.0
    %4236 = vmatpush2.msra.mxu0 0.0
    %4237 = vmatprep.subr.mxu0 0.0
    %4238 = vmatpush2.msra.mxu0 0.0
    %4239 = vmatprep.subr.mxu0 0.0
    %4240 = vmatpush2.msra.mxu0 0.0
    %4241 = vmatprep.subr.mxu0 0.0
    %4242 = vmatpush2.msra.mxu0 0.0
    %4243 = vmatprep.subr.mxu0 0.0
    %4244 = vmatpush2.msra.mxu0 0.0
    %4245 = vmatprep.mubr.f32.mxu0 0.0
    %4246 = vmatmul.mubr.f32.gmra.mxu0 %v298
    %v4247 = vpop.f32.mrf.mxu0
    %v4248 = vadd.f32 0.0, %v4247
    %v4249 = vpop.f32.mrf.mxu0
    %4250 = vmatprep.mubr.f32.mxu0 0.0
    %4251 = vmatmul.mubr.f32.gmra.mxu0 %v301
    %v4252 = vpop.f32.mrf.mxu0
    %v4253 = vadd.f32 0.0, %v4252
    %v4254 = vpop.f32.mrf.mxu0
    %4255 = vdwg.mxu0
    %s4256 = scalar_lea.vmem %s6, 96
    %v4257 = vld [vmem:[%s4256] sm:$0xff]
    %v4258 = vld [vmem:[%s4256 + $0x8] sm:$0xff]
    %v4259 = vld [vmem:[%s4256 + $0x10] sm:$0xff]
    %v4260 = vld [vmem:[%s4256 + $0x18] sm:$0xff]
    %4261 = vmatprep.subr.mxu0 0.0
    %4262 = vmatpush1.msra.mxu0 0.0
    %4263 = vmatprep.subr.mxu0 0.0
    %4264 = vmatpush1.msra.mxu0 0.0
    %4265 = vmatprep.subr.mxu0 0.0
    %4266 = vmatpush1.msra.mxu0 0.0
    %4267 = vmatprep.subr.mxu0 0.0
    %4268 = vmatpush1.msra.mxu0 0.0
    %4269 = vmatprep.subr.mxu0 0.0
    %4270 = vmatpush1.msra.mxu0 0.0
    %4271 = vmatprep.subr.mxu0 0.0
    %4272 = vmatpush1.msra.mxu0 0.0
    %4273 = vmatprep.subr.mxu0 0.0
    %4274 = vmatpush1.msra.mxu0 0.0
    %4275 = vmatprep.subr.mxu0 0.0
    %4276 = vmatpush1.msra.mxu0 0.0
    %4277 = vmatprep.subr.mxu0 0.0
    %4278 = vmatpush1.msra.mxu0 0.0
    %4279 = vmatprep.subr.mxu0 0.0
    %4280 = vmatpush1.msra.mxu0 0.0
    %4281 = vmatprep.subr.mxu0 0.0
    %4282 = vmatpush1.msra.mxu0 0.0
    %4283 = vmatprep.subr.mxu0 0.0
    %4284 = vmatpush1.msra.mxu0 0.0
    %4285 = vmatprep.subr.mxu0 0.0
    %4286 = vmatpush1.msra.mxu0 %v4260
    %4287 = vmatprep.subr.mxu0 0.0
    %4288 = vmatpush1.msra.mxu0 %v4259
    %4289 = vmatprep.subr.mxu0 0.0
    %4290 = vmatpush1.msra.mxu0 %v4258
    %4291 = vmatprep.subr.mxu0 0.0
    %4292 = vmatpush1.msra.mxu0 %v4257
    %4293 = vmatprep.subr.mxu0 0.0
    %4294 = vmatpush2.msra.mxu0 0.0
    %4295 = vmatprep.subr.mxu0 0.0
    %4296 = vmatpush2.msra.mxu0 0.0
    %4297 = vmatprep.subr.mxu0 0.0
    %4298 = vmatpush2.msra.mxu0 0.0
    %4299 = vmatprep.subr.mxu0 0.0
    %4300 = vmatpush2.msra.mxu0 0.0
    %4301 = vmatprep.subr.mxu0 0.0
    %4302 = vmatpush2.msra.mxu0 0.0
    %4303 = vmatprep.subr.mxu0 0.0
    %4304 = vmatpush2.msra.mxu0 0.0
    %4305 = vmatprep.subr.mxu0 0.0
    %4306 = vmatpush2.msra.mxu0 0.0
    %4307 = vmatprep.subr.mxu0 0.0
    %4308 = vmatpush2.msra.mxu0 0.0
    %4309 = vmatprep.subr.mxu0 0.0
    %4310 = vmatpush2.msra.mxu0 0.0
    %4311 = vmatprep.subr.mxu0 0.0
    %4312 = vmatpush2.msra.mxu0 0.0
    %4313 = vmatprep.subr.mxu0 0.0
    %4314 = vmatpush2.msra.mxu0 0.0
    %4315 = vmatprep.subr.mxu0 0.0
    %4316 = vmatpush2.msra.mxu0 0.0
    %4317 = vmatprep.subr.mxu0 0.0
    %4318 = vmatpush2.msra.mxu0 0.0
    %4319 = vmatprep.subr.mxu0 0.0
    %4320 = vmatpush2.msra.mxu0 0.0
    %4321 = vmatprep.subr.mxu0 0.0
    %4322 = vmatpush2.msra.mxu0 0.0
    %4323 = vmatprep.subr.mxu0 0.0
    %4324 = vmatpush2.msra.mxu0 0.0
    %4325 = vmatprep.mubr.f32.mxu0 0.0
    %4326 = vmatmul.mubr.f32.gmra.mxu0 %v298
    %v4327 = vpop.f32.mrf.mxu0
    %v4328 = vadd.f32 0.0, %v4327
    %v4329 = vpop.f32.mrf.mxu0
    %4330 = vmatprep.mubr.f32.mxu0 0.0
    %4331 = vmatmul.mubr.f32.gmra.mxu0 %v301
    %v4332 = vpop.f32.mrf.mxu0
    %v4333 = vadd.f32 0.0, %v4332
    %v4334 = vpop.f32.mrf.mxu0
    %4335 = vdwg.mxu0
    %s4336 = scalar_lea.vmem %s7, 96
    %v4337 = vld [vmem:[%s4336] sm:$0xff]
    %v4338 = vld [vmem:[%s4336 + $0x8] sm:$0xff]
    %v4339 = vld [vmem:[%s4336 + $0x10] sm:$0xff]
    %v4340 = vld [vmem:[%s4336 + $0x18] sm:$0xff]
    %4341 = vmatprep.subr.mxu0 0.0
    %4342 = vmatpush1.msra.mxu0 0.0
    %4343 = vmatprep.subr.mxu0 0.0
    %4344 = vmatpush1.msra.mxu0 0.0
    %4345 = vmatprep.subr.mxu0 0.0
    %4346 = vmatpush1.msra.mxu0 0.0
    %4347 = vmatprep.subr.mxu0 0.0
    %4348 = vmatpush1.msra.mxu0 0.0
    %4349 = vmatprep.subr.mxu0 0.0
    %4350 = vmatpush1.msra.mxu0 0.0
    %4351 = vmatprep.subr.mxu0 0.0
    %4352 = vmatpush1.msra.mxu0 0.0
    %4353 = vmatprep.subr.mxu0 0.0
    %4354 = vmatpush1.msra.mxu0 0.0
    %4355 = vmatprep.subr.mxu0 0.0
    %4356 = vmatpush1.msra.mxu0 0.0
    %4357 = vmatprep.subr.mxu0 0.0
    %4358 = vmatpush1.msra.mxu0 0.0
    %4359 = vmatprep.subr.mxu0 0.0
    %4360 = vmatpush1.msra.mxu0 0.0
    %4361 = vmatprep.subr.mxu0 0.0
    %4362 = vmatpush1.msra.mxu0 0.0
    %4363 = vmatprep.subr.mxu0 0.0
    %4364 = vmatpush1.msra.mxu0 0.0
    %4365 = vmatprep.subr.mxu0 0.0
    %4366 = vmatpush1.msra.mxu0 %v4340
    %4367 = vmatprep.subr.mxu0 0.0
    %4368 = vmatpush1.msra.mxu0 %v4339
    %4369 = vmatprep.subr.mxu0 0.0
    %4370 = vmatpush1.msra.mxu0 %v4338
    %4371 = vmatprep.subr.mxu0 0.0
    %4372 = vmatpush1.msra.mxu0 %v4337
    %4373 = vmatprep.subr.mxu0 0.0
    %4374 = vmatpush2.msra.mxu0 0.0
    %4375 = vmatprep.subr.mxu0 0.0
    %4376 = vmatpush2.msra.mxu0 0.0
    %4377 = vmatprep.subr.mxu0 0.0
    %4378 = vmatpush2.msra.mxu0 0.0
    %4379 = vmatprep.subr.mxu0 0.0
    %4380 = vmatpush2.msra.mxu0 0.0
    %4381 = vmatprep.subr.mxu0 0.0
    %4382 = vmatpush2.msra.mxu0 0.0
    %4383 = vmatprep.subr.mxu0 0.0
    %4384 = vmatpush2.msra.mxu0 0.0
    %4385 = vmatprep.subr.mxu0 0.0
    %4386 = vmatpush2.msra.mxu0 0.0
    %4387 = vmatprep.subr.mxu0 0.0
    %4388 = vmatpush2.msra.mxu0 0.0
    %4389 = vmatprep.subr.mxu0 0.0
    %4390 = vmatpush2.msra.mxu0 0.0
    %4391 = vmatprep.subr.mxu0 0.0
    %4392 = vmatpush2.msra.mxu0 0.0
    %4393 = vmatprep.subr.mxu0 0.0
    %4394 = vmatpush2.msra.mxu0 0.0
    %4395 = vmatprep.subr.mxu0 0.0
    %4396 = vmatpush2.msra.mxu0 0.0
    %4397 = vmatprep.subr.mxu0 0.0
    %4398 = vmatpush2.msra.mxu0 0.0
    %4399 = vmatprep.subr.mxu0 0.0
    %4400 = vmatpush2.msra.mxu0 0.0
    %4401 = vmatprep.subr.mxu0 0.0
    %4402 = vmatpush2.msra.mxu0 0.0
    %4403 = vmatprep.subr.mxu0 0.0
    %4404 = vmatpush2.msra.mxu0 0.0
    %4405 = vmatprep.mubr.f32.mxu0 0.0
    %4406 = vmatmul.mubr.f32.gmra.mxu0 %v298
    %v4407 = vpop.f32.mrf.mxu0
    %v4408 = vadd.f32 0.0, %v4407
    %v4409 = vpop.f32.mrf.mxu0
    %4410 = vmatprep.mubr.f32.mxu0 0.0
    %4411 = vmatmul.mubr.f32.gmra.mxu0 %v301
    %v4412 = vpop.f32.mrf.mxu0
    %v4413 = vadd.f32 0.0, %v4412
    %v4414 = vpop.f32.mrf.mxu0
    %4415 = vdwg.mxu0
    %v4417 = vsel %vm536, %v4008, 0
    %v4420 = vsel %vm536, %v4328, 0
    %4422 = vmatprep.subr.mxu0 0.0
    %4423 = vmatpush1.xpose.msra.mxu0 0.0
    %4424 = vmatprep.subr.mxu0 0.0
    %4425 = vmatpush1.xpose.msra.mxu0 0.0
    %4426 = vmatprep.subr.mxu0 0.0
    %4427 = vmatpush1.xpose.msra.mxu0 0.0
    %4428 = vmatprep.subr.mxu0 0.0
    %4429 = vmatpush1.xpose.msra.mxu0 0.0
    %4430 = vmatprep.subr.mxu0 0.0
    %4431 = vmatpush1.xpose.msra.mxu0 0.0
    %4432 = vmatprep.subr.mxu0 0.0
    %4433 = vmatpush1.xpose.msra.mxu0 0.0
    %4434 = vmatprep.subr.mxu0 0.0
    %4435 = vmatpush1.xpose.msra.mxu0 0.0
    %4436 = vmatprep.subr.mxu0 0.0
    %4437 = vmatpush1.xpose.msra.mxu0 0.0
    %4438 = vmatprep.subr.mxu0 0.0
    %4439 = vmatpush1.xpose.msra.mxu0 0.0
    %4440 = vmatprep.subr.mxu0 0.0
    %4441 = vmatpush1.xpose.msra.mxu0 0.0
    %4442 = vmatprep.subr.mxu0 0.0
    %4443 = vmatpush1.xpose.msra.mxu0 0.0
    %4444 = vmatprep.subr.mxu0 0.0
    %4445 = vmatpush1.xpose.msra.mxu0 0.0
    %4446 = vmatprep.subr.mxu0 0.0
    %4447 = vmatpush1.xpose.msra.mxu0 0.0
    %4448 = vmatprep.subr.mxu0 0.0
    %4449 = vmatpush1.xpose.msra.mxu0 0.0
    %4450 = vmatprep.subr.mxu0 0.0
    %4451 = vmatpush1.xpose.msra.mxu0 0.0
    %4452 = vmatprep.subr.mxu0 0.0
    %4453 = vmatpush1.xpose.msra.mxu0 %v4420
    %4454 = vmatprep.subr.mxu0 0.0
    %4455 = vmatpush2.xpose.msra.mxu0 0.0
    %4456 = vmatprep.subr.mxu0 0.0
    %4457 = vmatpush2.xpose.msra.mxu0 0.0
    %4458 = vmatprep.subr.mxu0 0.0
    %4459 = vmatpush2.xpose.msra.mxu0 0.0
    %4460 = vmatprep.subr.mxu0 0.0
    %4461 = vmatpush2.xpose.msra.mxu0 0.0
    %4462 = vmatprep.subr.mxu0 0.0
    %4463 = vmatpush2.xpose.msra.mxu0 0.0
    %4464 = vmatprep.subr.mxu0 0.0
    %4465 = vmatpush2.xpose.msra.mxu0 0.0
    %4466 = vmatprep.subr.mxu0 0.0
    %4467 = vmatpush2.xpose.msra.mxu0 0.0
    %4468 = vmatprep.subr.mxu0 0.0
    %4469 = vmatpush2.xpose.msra.mxu0 0.0
    %4470 = vmatprep.subr.mxu0 0.0
    %4471 = vmatpush2.xpose.msra.mxu0 0.0
    %4472 = vmatprep.subr.mxu0 0.0
    %4473 = vmatpush2.xpose.msra.mxu0 0.0
    %4474 = vmatprep.subr.mxu0 0.0
    %4475 = vmatpush2.xpose.msra.mxu0 0.0
    %4476 = vmatprep.subr.mxu0 0.0
    %4477 = vmatpush2.xpose.msra.mxu0 0.0
    %4478 = vmatprep.subr.mxu0 0.0
    %4479 = vmatpush2.xpose.msra.mxu0 0.0
    %4480 = vmatprep.subr.mxu0 0.0
    %4481 = vmatpush2.xpose.msra.mxu0 0.0
    %4482 = vmatprep.subr.mxu0 0.0
    %4483 = vmatpush2.xpose.msra.mxu0 0.0
    %4484 = vmatprep.subr.mxu0 0.0
    %4485 = vmatpush2.xpose.msra.mxu0 0.0
    %4486 = vmatprep.mubr.f32.mxu0 0.0
    %4487 = vmatmul.mubr.f32.gmra.mxu0 %v4417
    %v4488 = vpop.f32.mrf.mxu0
    %v4489 = vadd.f32 0.0, %v4488
    %v4490 = vpop.f32.mrf.mxu0
    %4491 = vdwg.mxu0
    %v4493 = vsel %vm536, %v4013, 0
    %v4496 = vsel %vm536, %v4333, 0
    %4498 = vmatprep.subr.mxu0 0.0
    %4499 = vmatpush1.xpose.msra.mxu0 0.0
    %4500 = vmatprep.subr.mxu0 0.0
    %4501 = vmatpush1.xpose.msra.mxu0 0.0
    %4502 = vmatprep.subr.mxu0 0.0
    %4503 = vmatpush1.xpose.msra.mxu0 0.0
    %4504 = vmatprep.subr.mxu0 0.0
    %4505 = vmatpush1.xpose.msra.mxu0 0.0
    %4506 = vmatprep.subr.mxu0 0.0
    %4507 = vmatpush1.xpose.msra.mxu0 0.0
    %4508 = vmatprep.subr.mxu0 0.0
    %4509 = vmatpush1.xpose.msra.mxu0 0.0
    %4510 = vmatprep.subr.mxu0 0.0
    %4511 = vmatpush1.xpose.msra.mxu0 0.0
    %4512 = vmatprep.subr.mxu0 0.0
    %4513 = vmatpush1.xpose.msra.mxu0 0.0
    %4514 = vmatprep.subr.mxu0 0.0
    %4515 = vmatpush1.xpose.msra.mxu0 0.0
    %4516 = vmatprep.subr.mxu0 0.0
    %4517 = vmatpush1.xpose.msra.mxu0 0.0
    %4518 = vmatprep.subr.mxu0 0.0
    %4519 = vmatpush1.xpose.msra.mxu0 0.0
    %4520 = vmatprep.subr.mxu0 0.0
    %4521 = vmatpush1.xpose.msra.mxu0 0.0
    %4522 = vmatprep.subr.mxu0 0.0
    %4523 = vmatpush1.xpose.msra.mxu0 0.0
    %4524 = vmatprep.subr.mxu0 0.0
    %4525 = vmatpush1.xpose.msra.mxu0 0.0
    %4526 = vmatprep.subr.mxu0 0.0
    %4527 = vmatpush1.xpose.msra.mxu0 0.0
    %4528 = vmatprep.subr.mxu0 0.0
    %4529 = vmatpush1.xpose.msra.mxu0 %v4496
    %4530 = vmatprep.subr.mxu0 0.0
    %4531 = vmatpush2.xpose.msra.mxu0 0.0
    %4532 = vmatprep.subr.mxu0 0.0
    %4533 = vmatpush2.xpose.msra.mxu0 0.0
    %4534 = vmatprep.subr.mxu0 0.0
    %4535 = vmatpush2.xpose.msra.mxu0 0.0
    %4536 = vmatprep.subr.mxu0 0.0
    %4537 = vmatpush2.xpose.msra.mxu0 0.0
    %4538 = vmatprep.subr.mxu0 0.0
    %4539 = vmatpush2.xpose.msra.mxu0 0.0
    %4540 = vmatprep.subr.mxu0 0.0
    %4541 = vmatpush2.xpose.msra.mxu0 0.0
    %4542 = vmatprep.subr.mxu0 0.0
    %4543 = vmatpush2.xpose.msra.mxu0 0.0
    %4544 = vmatprep.subr.mxu0 0.0
    %4545 = vmatpush2.xpose.msra.mxu0 0.0
    %4546 = vmatprep.subr.mxu0 0.0
    %4547 = vmatpush2.xpose.msra.mxu0 0.0
    %4548 = vmatprep.subr.mxu0 0.0
    %4549 = vmatpush2.xpose.msra.mxu0 0.0
    %4550 = vmatprep.subr.mxu0 0.0
    %4551 = vmatpush2.xpose.msra.mxu0 0.0
    %4552 = vmatprep.subr.mxu0 0.0
    %4553 = vmatpush2.xpose.msra.mxu0 0.0
    %4554 = vmatprep.subr.mxu0 0.0
    %4555 = vmatpush2.xpose.msra.mxu0 0.0
    %4556 = vmatprep.subr.mxu0 0.0
    %4557 = vmatpush2.xpose.msra.mxu0 0.0
    %4558 = vmatprep.subr.mxu0 0.0
    %4559 = vmatpush2.xpose.msra.mxu0 0.0
    %4560 = vmatprep.subr.mxu0 0.0
    %4561 = vmatpush2.xpose.msra.mxu0 0.0
    %4562 = vmatprep.mubr.f32.mxu0 0.0
    %4563 = vmatmul.mubr.f32.gmra.mxu0 %v4493
    %v4564 = vpop.f32.mrf.mxu0
    %v4565 = vadd.f32 0.0, %v4564
    %v4566 = vpop.f32.mrf.mxu0
    %4567 = vdwg.mxu0
    %v4568 = vmul.f32 %v4489, 0.25
    %v4569 = vmul.f32 %v4565, 0.25
    %v4570 = vsel %vm691, %v4568, -inf
    %4571 = vmax.xlane.f32.xlu0 %v4570
    %v4572 = vpop.xlane.xlu0 %4571
    %v4573 = vsel %vm691, %v4569, -inf
    %4574 = vmax.xlane.f32.xlu0 %v4573
    %v4575 = vpop.xlane.xlu0 %4574
    %v4576 = vsub.f32 %v4568, %v4572
    %v4577 = vsub.f32 %v4569, %v4575
    %v4578 = vmul.f32 %v4576, 1.442695
    %v4579 = vpow.pop %v4578
    %v4580 = vmul.f32 %v4577, 1.442695
    %v4581 = vpow.pop %v4580
    %v4582 = vsel %vm691, %v4579, 0.0
    %4583 = vadd.xlane.f32.xlu0 %v4582
    %v4584 = vpop.xlane.xlu0 %4583
    %v4585 = vsel %vm691, %v4581, 0.0
    %4586 = vadd.xlane.f32.xlu0 %v4585
    %v4587 = vpop.xlane.xlu0 %4586
    %v4588 = vrcp.pop %v4584
    %v4589 = vrcp.pop %v4587
    %v4590 = vmul.f32 %v4579, %v4588
    %v4591 = vmul.f32 %v4581, %v4589
    %v4593 = vsel %vm691, %v4590, 0
    %4595 = vmatprep.subr.mxu0 0.0
    %4596 = vmatpush1.msra.mxu0 0.0
    %4597 = vmatprep.subr.mxu0 0.0
    %4598 = vmatpush1.msra.mxu0 0.0
    %4599 = vmatprep.subr.mxu0 0.0
    %4600 = vmatpush1.msra.mxu0 0.0
    %4601 = vmatprep.subr.mxu0 0.0
    %4602 = vmatpush1.msra.mxu0 0.0
    %4603 = vmatprep.subr.mxu0 0.0
    %4604 = vmatpush1.msra.mxu0 0.0
    %4605 = vmatprep.subr.mxu0 0.0
    %4606 = vmatpush1.msra.mxu0 0.0
    %4607 = vmatprep.subr.mxu0 0.0
    %4608 = vmatpush1.msra.mxu0 0.0
    %4609 = vmatprep.subr.mxu0 0.0
    %4610 = vmatpush1.msra.mxu0 0.0
    %4611 = vmatprep.subr.mxu0 0.0
    %4612 = vmatpush1.msra.mxu0 0.0
    %4613 = vmatprep.subr.mxu0 0.0
    %4614 = vmatpush1.msra.mxu0 0.0
    %4615 = vmatprep.subr.mxu0 0.0
    %4616 = vmatpush1.msra.mxu0 0.0
    %4617 = vmatprep.subr.mxu0 0.0
    %4618 = vmatpush1.msra.mxu0 0.0
    %4619 = vmatprep.subr.mxu0 0.0
    %4620 = vmatpush1.msra.mxu0 0.0
    %4621 = vmatprep.subr.mxu0 0.0
    %4622 = vmatpush1.msra.mxu0 0.0
    %4623 = vmatprep.subr.mxu0 0.0
    %4624 = vmatpush1.msra.mxu0 0.0
    %4625 = vmatprep.subr.mxu0 0.0
    %4626 = vmatpush1.msra.mxu0 %v4408
    %4627 = vmatprep.subr.mxu0 0.0
    %4628 = vmatpush2.msra.mxu0 0.0
    %4629 = vmatprep.subr.mxu0 0.0
    %4630 = vmatpush2.msra.mxu0 0.0
    %4631 = vmatprep.subr.mxu0 0.0
    %4632 = vmatpush2.msra.mxu0 0.0
    %4633 = vmatprep.subr.mxu0 0.0
    %4634 = vmatpush2.msra.mxu0 0.0
    %4635 = vmatprep.subr.mxu0 0.0
    %4636 = vmatpush2.msra.mxu0 0.0
    %4637 = vmatprep.subr.mxu0 0.0
    %4638 = vmatpush2.msra.mxu0 0.0
    %4639 = vmatprep.subr.mxu0 0.0
    %4640 = vmatpush2.msra.mxu0 0.0
    %4641 = vmatprep.subr.mxu0 0.0
    %4642 = vmatpush2.msra.mxu0 0.0
    %4643 = vmatprep.subr.mxu0 0.0
    %4644 = vmatpush2.msra.mxu0 0.0
    %4645 = vmatprep.subr.mxu0 0.0
    %4646 = vmatpush2.msra.mxu0 0.0
    %4647 = vmatprep.subr.mxu0 0.0
    %4648 = vmatpush2.msra.mxu0 0.0
    %4649 = vmatprep.subr.mxu0 0.0
    %4650 = vmatpush2.msra.mxu0 0.0
    %4651 = vmatprep.subr.mxu0 0.0
    %4652 = vmatpush2.msra.mxu0 0.0
    %4653 = vmatprep.subr.mxu0 0.0
    %4654 = vmatpush2.msra.mxu0 0.0
    %4655 = vmatprep.subr.mxu0 0.0
    %4656 = vmatpush2.msra.mxu0 0.0
    %4657 = vmatprep.subr.mxu0 0.0
    %4658 = vmatpush2.msra.mxu0 0.0
    %4659 = vmatprep.mubr.f32.mxu0 0.0
    %4660 = vmatmul.mubr.f32.gmra.mxu0 %v4593
    %v4661 = vpop.f32.mrf.mxu0
    %v4662 = vadd.f32 0.0, %v4661
    %v4663 = vpop.f32.mrf.mxu0
    %4664 = vdwg.mxu0
    %v4666 = vsel %vm691, %v4591, 0
    %4668 = vmatprep.subr.mxu0 0.0
    %4669 = vmatpush1.msra.mxu0 0.0
    %4670 = vmatprep.subr.mxu0 0.0
    %4671 = vmatpush1.msra.mxu0 0.0
    %4672 = vmatprep.subr.mxu0 0.0
    %4673 = vmatpush1.msra.mxu0 0.0
    %4674 = vmatprep.subr.mxu0 0.0
    %4675 = vmatpush1.msra.mxu0 0.0
    %4676 = vmatprep.subr.mxu0 0.0
    %4677 = vmatpush1.msra.mxu0 0.0
    %4678 = vmatprep.subr.mxu0 0.0
    %4679 = vmatpush1.msra.mxu0 0.0
    %4680 = vmatprep.subr.mxu0 0.0
    %4681 = vmatpush1.msra.mxu0 0.0
    %4682 = vmatprep.subr.mxu0 0.0
    %4683 = vmatpush1.msra.mxu0 0.0
    %4684 = vmatprep.subr.mxu0 0.0
    %4685 = vmatpush1.msra.mxu0 0.0
    %4686 = vmatprep.subr.mxu0 0.0
    %4687 = vmatpush1.msra.mxu0 0.0
    %4688 = vmatprep.subr.mxu0 0.0
    %4689 = vmatpush1.msra.mxu0 0.0
    %4690 = vmatprep.subr.mxu0 0.0
    %4691 = vmatpush1.msra.mxu0 0.0
    %4692 = vmatprep.subr.mxu0 0.0
    %4693 = vmatpush1.msra.mxu0 0.0
    %4694 = vmatprep.subr.mxu0 0.0
    %4695 = vmatpush1.msra.mxu0 0.0
    %4696 = vmatprep.subr.mxu0 0.0
    %4697 = vmatpush1.msra.mxu0 0.0
    %4698 = vmatprep.subr.mxu0 0.0
    %4699 = vmatpush1.msra.mxu0 %v4413
    %4700 = vmatprep.subr.mxu0 0.0
    %4701 = vmatpush2.msra.mxu0 0.0
    %4702 = vmatprep.subr.mxu0 0.0
    %4703 = vmatpush2.msra.mxu0 0.0
    %4704 = vmatprep.subr.mxu0 0.0
    %4705 = vmatpush2.msra.mxu0 0.0
    %4706 = vmatprep.subr.mxu0 0.0
    %4707 = vmatpush2.msra.mxu0 0.0
    %4708 = vmatprep.subr.mxu0 0.0
    %4709 = vmatpush2.msra.mxu0 0.0
    %4710 = vmatprep.subr.mxu0 0.0
    %4711 = vmatpush2.msra.mxu0 0.0
    %4712 = vmatprep.subr.mxu0 0.0
    %4713 = vmatpush2.msra.mxu0 0.0
    %4714 = vmatprep.subr.mxu0 0.0
    %4715 = vmatpush2.msra.mxu0 0.0
    %4716 = vmatprep.subr.mxu0 0.0
    %4717 = vmatpush2.msra.mxu0 0.0
    %4718 = vmatprep.subr.mxu0 0.0
    %4719 = vmatpush2.msra.mxu0 0.0
    %4720 = vmatprep.subr.mxu0 0.0
    %4721 = vmatpush2.msra.mxu0 0.0
    %4722 = vmatprep.subr.mxu0 0.0
    %4723 = vmatpush2.msra.mxu0 0.0
    %4724 = vmatprep.subr.mxu0 0.0
    %4725 = vmatpush2.msra.mxu0 0.0
    %4726 = vmatprep.subr.mxu0 0.0
    %4727 = vmatpush2.msra.mxu0 0.0
    %4728 = vmatprep.subr.mxu0 0.0
    %4729 = vmatpush2.msra.mxu0 0.0
    %4730 = vmatprep.subr.mxu0 0.0
    %4731 = vmatpush2.msra.mxu0 0.0
    %4732 = vmatprep.mubr.f32.mxu0 0.0
    %4733 = vmatmul.mubr.f32.gmra.mxu0 %v4666
    %v4734 = vpop.f32.mrf.mxu0
    %v4735 = vadd.f32 0.0, %v4734
    %v4736 = vpop.f32.mrf.mxu0
    %4737 = vdwg.mxu0
    %v4739 = vsel %vm536, %v4248, 0
    %v4742 = vsel %vm536, %v4088, 0
    %4744 = vmatprep.subr.mxu0 0.0
    %4745 = vmatpush1.xpose.msra.mxu0 0.0
    %4746 = vmatprep.subr.mxu0 0.0
    %4747 = vmatpush1.xpose.msra.mxu0 0.0
    %4748 = vmatprep.subr.mxu0 0.0
    %4749 = vmatpush1.xpose.msra.mxu0 0.0
    %4750 = vmatprep.subr.mxu0 0.0
    %4751 = vmatpush1.xpose.msra.mxu0 0.0
    %4752 = vmatprep.subr.mxu0 0.0
    %4753 = vmatpush1.xpose.msra.mxu0 0.0
    %4754 = vmatprep.subr.mxu0 0.0
    %4755 = vmatpush1.xpose.msra.mxu0 0.0
    %4756 = vmatprep.subr.mxu0 0.0
    %4757 = vmatpush1.xpose.msra.mxu0 0.0
    %4758 = vmatprep.subr.mxu0 0.0
    %4759 = vmatpush1.xpose.msra.mxu0 0.0
    %4760 = vmatprep.subr.mxu0 0.0
    %4761 = vmatpush1.xpose.msra.mxu0 0.0
    %4762 = vmatprep.subr.mxu0 0.0
    %4763 = vmatpush1.xpose.msra.mxu0 0.0
    %4764 = vmatprep.subr.mxu0 0.0
    %4765 = vmatpush1.xpose.msra.mxu0 0.0
    %4766 = vmatprep.subr.mxu0 0.0
    %4767 = vmatpush1.xpose.msra.mxu0 0.0
    %4768 = vmatprep.subr.mxu0 0.0
    %4769 = vmatpush1.xpose.msra.mxu0 0.0
    %4770 = vmatprep.subr.mxu0 0.0
    %4771 = vmatpush1.xpose.msra.mxu0 0.0
    %4772 = vmatprep.subr.mxu0 0.0
    %4773 = vmatpush1.xpose.msra.mxu0 0.0
    %4774 = vmatprep.subr.mxu0 0.0
    %4775 = vmatpush1.xpose.msra.mxu0 %v4742
    %4776 = vmatprep.subr.mxu0 0.0
    %4777 = vmatpush2.xpose.msra.mxu0 0.0
    %4778 = vmatprep.subr.mxu0 0.0
    %4779 = vmatpush2.xpose.msra.mxu0 0.0
    %4780 = vmatprep.subr.mxu0 0.0
    %4781 = vmatpush2.xpose.msra.mxu0 0.0
    %4782 = vmatprep.subr.mxu0 0.0
    %4783 = vmatpush2.xpose.msra.mxu0 0.0
    %4784 = vmatprep.subr.mxu0 0.0
    %4785 = vmatpush2.xpose.msra.mxu0 0.0
    %4786 = vmatprep.subr.mxu0 0.0
    %4787 = vmatpush2.xpose.msra.mxu0 0.0
    %4788 = vmatprep.subr.mxu0 0.0
    %4789 = vmatpush2.xpose.msra.mxu0 0.0
    %4790 = vmatprep.subr.mxu0 0.0
    %4791 = vmatpush2.xpose.msra.mxu0 0.0
    %4792 = vmatprep.subr.mxu0 0.0
    %4793 = vmatpush2.xpose.msra.mxu0 0.0
    %4794 = vmatprep.subr.mxu0 0.0
    %4795 = vmatpush2.xpose.msra.mxu0 0.0
    %4796 = vmatprep.subr.mxu0 0.0
    %4797 = vmatpush2.xpose.msra.mxu0 0.0
    %4798 = vmatprep.subr.mxu0 0.0
    %4799 = vmatpush2.xpose.msra.mxu0 0.0
    %4800 = vmatprep.subr.mxu0 0.0
    %4801 = vmatpush2.xpose.msra.mxu0 0.0
    %4802 = vmatprep.subr.mxu0 0.0
    %4803 = vmatpush2.xpose.msra.mxu0 0.0
    %4804 = vmatprep.subr.mxu0 0.0
    %4805 = vmatpush2.xpose.msra.mxu0 0.0
    %4806 = vmatprep.subr.mxu0 0.0
    %4807 = vmatpush2.xpose.msra.mxu0 0.0
    %4808 = vmatprep.mubr.f32.mxu0 0.0
    %4809 = vmatmul.mubr.f32.gmra.mxu0 %v4739
    %v4810 = vpop.f32.mrf.mxu0
    %v4811 = vadd.f32 0.0, %v4810
    %v4812 = vpop.f32.mrf.mxu0
    %4813 = vdwg.mxu0
    %v4815 = vsel %vm536, %v4253, 0
    %v4818 = vsel %vm536, %v4093, 0
    %4820 = vmatprep.subr.mxu0 0.0
    %4821 = vmatpush1.xpose.msra.mxu0 0.0
    %4822 = vmatprep.subr.mxu0 0.0
    %4823 = vmatpush1.xpose.msra.mxu0 0.0
    %4824 = vmatprep.subr.mxu0 0.0
    %4825 = vmatpush1.xpose.msra.mxu0 0.0
    %4826 = vmatprep.subr.mxu0 0.0
    %4827 = vmatpush1.xpose.msra.mxu0 0.0
    %4828 = vmatprep.subr.mxu0 0.0
    %4829 = vmatpush1.xpose.msra.mxu0 0.0
    %4830 = vmatprep.subr.mxu0 0.0
    %4831 = vmatpush1.xpose.msra.mxu0 0.0
    %4832 = vmatprep.subr.mxu0 0.0
    %4833 = vmatpush1.xpose.msra.mxu0 0.0
    %4834 = vmatprep.subr.mxu0 0.0
    %4835 = vmatpush1.xpose.msra.mxu0 0.0
    %4836 = vmatprep.subr.mxu0 0.0
    %4837 = vmatpush1.xpose.msra.mxu0 0.0
    %4838 = vmatprep.subr.mxu0 0.0
    %4839 = vmatpush1.xpose.msra.mxu0 0.0
    %4840 = vmatprep.subr.mxu0 0.0
    %4841 = vmatpush1.xpose.msra.mxu0 0.0
    %4842 = vmatprep.subr.mxu0 0.0
    %4843 = vmatpush1.xpose.msra.mxu0 0.0
    %4844 = vmatprep.subr.mxu0 0.0
    %4845 = vmatpush1.xpose.msra.mxu0 0.0
    %4846 = vmatprep.subr.mxu0 0.0
    %4847 = vmatpush1.xpose.msra.mxu0 0.0
    %4848 = vmatprep.subr.mxu0 0.0
    %4849 = vmatpush1.xpose.msra.mxu0 0.0
    %4850 = vmatprep.subr.mxu0 0.0
    %4851 = vmatpush1.xpose.msra.mxu0 %v4818
    %4852 = vmatprep.subr.mxu0 0.0
    %4853 = vmatpush2.xpose.msra.mxu0 0.0
    %4854 = vmatprep.subr.mxu0 0.0
    %4855 = vmatpush2.xpose.msra.mxu0 0.0
    %4856 = vmatprep.subr.mxu0 0.0
    %4857 = vmatpush2.xpose.msra.mxu0 0.0
    %4858 = vmatprep.subr.mxu0 0.0
    %4859 = vmatpush2.xpose.msra.mxu0 0.0
    %4860 = vmatprep.subr.mxu0 0.0
    %4861 = vmatpush2.xpose.msra.mxu0 0.0
    %4862 = vmatprep.subr.mxu0 0.0
    %4863 = vmatpush2.xpose.msra.mxu0 0.0
    %4864 = vmatprep.subr.mxu0 0.0
    %4865 = vmatpush2.xpose.msra.mxu0 0.0
    %4866 = vmatprep.subr.mxu0 0.0
    %4867 = vmatpush2.xpose.msra.mxu0 0.0
    %4868 = vmatprep.subr.mxu0 0.0
    %4869 = vmatpush2.xpose.msra.mxu0 0.0
    %4870 = vmatprep.subr.mxu0 0.0
    %4871 = vmatpush2.xpose.msra.mxu0 0.0
    %4872 = vmatprep.subr.mxu0 0.0
    %4873 = vmatpush2.xpose.msra.mxu0 0.0
    %4874 = vmatprep.subr.mxu0 0.0
    %4875 = vmatpush2.xpose.msra.mxu0 0.0
    %4876 = vmatprep.subr.mxu0 0.0
    %4877 = vmatpush2.xpose.msra.mxu0 0.0
    %4878 = vmatprep.subr.mxu0 0.0
    %4879 = vmatpush2.xpose.msra.mxu0 0.0
    %4880 = vmatprep.subr.mxu0 0.0
    %4881 = vmatpush2.xpose.msra.mxu0 0.0
    %4882 = vmatprep.subr.mxu0 0.0
    %4883 = vmatpush2.xpose.msra.mxu0 0.0
    %4884 = vmatprep.mubr.f32.mxu0 0.0
    %4885 = vmatmul.mubr.f32.gmra.mxu0 %v4815
    %v4886 = vpop.f32.mrf.mxu0
    %v4887 = vadd.f32 0.0, %v4886
    %v4888 = vpop.f32.mrf.mxu0
    %4889 = vdwg.mxu0
    %v4890 = vmul.f32 %v4811, 0.25
    %v4891 = vmul.f32 %v4887, 0.25
    %v4892 = vsel %vm691, %v4890, -inf
    %4893 = vmax.xlane.f32.xlu0 %v4892
    %v4894 = vpop.xlane.xlu0 %4893
    %v4895 = vsel %vm691, %v4891, -inf
    %4896 = vmax.xlane.f32.xlu0 %v4895
    %v4897 = vpop.xlane.xlu0 %4896
    %v4898 = vsub.f32 %v4890, %v4894
    %v4899 = vsub.f32 %v4891, %v4897
    %v4900 = vmul.f32 %v4898, 1.442695
    %v4901 = vpow.pop %v4900
    %v4902 = vmul.f32 %v4899, 1.442695
    %v4903 = vpow.pop %v4902
    %v4904 = vsel %vm691, %v4901, 0.0
    %4905 = vadd.xlane.f32.xlu0 %v4904
    %v4906 = vpop.xlane.xlu0 %4905
    %v4907 = vsel %vm691, %v4903, 0.0
    %4908 = vadd.xlane.f32.xlu0 %v4907
    %v4909 = vpop.xlane.xlu0 %4908
    %v4910 = vrcp.pop %v4906
    %v4911 = vrcp.pop %v4909
    %v4912 = vmul.f32 %v4901, %v4910
    %v4913 = vmul.f32 %v4903, %v4911
    %v4915 = vsel %vm691, %v4912, 0
    %4917 = vmatprep.subr.mxu0 0.0
    %4918 = vmatpush1.msra.mxu0 0.0
    %4919 = vmatprep.subr.mxu0 0.0
    %4920 = vmatpush1.msra.mxu0 0.0
    %4921 = vmatprep.subr.mxu0 0.0
    %4922 = vmatpush1.msra.mxu0 0.0
    %4923 = vmatprep.subr.mxu0 0.0
    %4924 = vmatpush1.msra.mxu0 0.0
    %4925 = vmatprep.subr.mxu0 0.0
    %4926 = vmatpush1.msra.mxu0 0.0
    %4927 = vmatprep.subr.mxu0 0.0
    %4928 = vmatpush1.msra.mxu0 0.0
    %4929 = vmatprep.subr.mxu0 0.0
    %4930 = vmatpush1.msra.mxu0 0.0
    %4931 = vmatprep.subr.mxu0 0.0
    %4932 = vmatpush1.msra.mxu0 0.0
    %4933 = vmatprep.subr.mxu0 0.0
    %4934 = vmatpush1.msra.mxu0 0.0
    %4935 = vmatprep.subr.mxu0 0.0
    %4936 = vmatpush1.msra.mxu0 0.0
    %4937 = vmatprep.subr.mxu0 0.0
    %4938 = vmatpush1.msra.mxu0 0.0
    %4939 = vmatprep.subr.mxu0 0.0
    %4940 = vmatpush1.msra.mxu0 0.0
    %4941 = vmatprep.subr.mxu0 0.0
    %4942 = vmatpush1.msra.mxu0 0.0
    %4943 = vmatprep.subr.mxu0 0.0
    %4944 = vmatpush1.msra.mxu0 0.0
    %4945 = vmatprep.subr.mxu0 0.0
    %4946 = vmatpush1.msra.mxu0 0.0
    %4947 = vmatprep.subr.mxu0 0.0
    %4948 = vmatpush1.msra.mxu0 %v4168
    %4949 = vmatprep.subr.mxu0 0.0
    %4950 = vmatpush2.msra.mxu0 0.0
    %4951 = vmatprep.subr.mxu0 0.0
    %4952 = vmatpush2.msra.mxu0 0.0
    %4953 = vmatprep.subr.mxu0 0.0
    %4954 = vmatpush2.msra.mxu0 0.0
    %4955 = vmatprep.subr.mxu0 0.0
    %4956 = vmatpush2.msra.mxu0 0.0
    %4957 = vmatprep.subr.mxu0 0.0
    %4958 = vmatpush2.msra.mxu0 0.0
    %4959 = vmatprep.subr.mxu0 0.0
    %4960 = vmatpush2.msra.mxu0 0.0
    %4961 = vmatprep.subr.mxu0 0.0
    %4962 = vmatpush2.msra.mxu0 0.0
    %4963 = vmatprep.subr.mxu0 0.0
    %4964 = vmatpush2.msra.mxu0 0.0
    %4965 = vmatprep.subr.mxu0 0.0
    %4966 = vmatpush2.msra.mxu0 0.0
    %4967 = vmatprep.subr.mxu0 0.0
    %4968 = vmatpush2.msra.mxu0 0.0
    %4969 = vmatprep.subr.mxu0 0.0
    %4970 = vmatpush2.msra.mxu0 0.0
    %4971 = vmatprep.subr.mxu0 0.0
    %4972 = vmatpush2.msra.mxu0 0.0
    %4973 = vmatprep.subr.mxu0 0.0
    %4974 = vmatpush2.msra.mxu0 0.0
    %4975 = vmatprep.subr.mxu0 0.0
    %4976 = vmatpush2.msra.mxu0 0.0
    %4977 = vmatprep.subr.mxu0 0.0
    %4978 = vmatpush2.msra.mxu0 0.0
    %4979 = vmatprep.subr.mxu0 0.0
    %4980 = vmatpush2.msra.mxu0 0.0
    %4981 = vmatprep.mubr.f32.mxu0 0.0
    %4982 = vmatmul.mubr.f32.gmra.mxu0 %v4915
    %v4983 = vpop.f32.mrf.mxu0
    %v4984 = vadd.f32 0.0, %v4983
    %v4985 = vpop.f32.mrf.mxu0
    %4986 = vdwg.mxu0
    %v4988 = vsel %vm691, %v4913, 0
    %4990 = vmatprep.subr.mxu0 0.0
    %4991 = vmatpush1.msra.mxu0 0.0
    %4992 = vmatprep.subr.mxu0 0.0
    %4993 = vmatpush1.msra.mxu0 0.0
    %4994 = vmatprep.subr.mxu0 0.0
    %4995 = vmatpush1.msra.mxu0 0.0
    %4996 = vmatprep.subr.mxu0 0.0
    %4997 = vmatpush1.msra.mxu0 0.0
    %4998 = vmatprep.subr.mxu0 0.0
    %4999 = vmatpush1.msra.mxu0 0.0
    %5000 = vmatprep.subr.mxu0 0.0
    %5001 = vmatpush1.msra.mxu0 0.0
    %5002 = vmatprep.subr.mxu0 0.0
    %5003 = vmatpush1.msra.mxu0 0.0
    %5004 = vmatprep.subr.mxu0 0.0
    %5005 = vmatpush1.msra.mxu0 0.0
    %5006 = vmatprep.subr.mxu0 0.0
    %5007 = vmatpush1.msra.mxu0 0.0
    %5008 = vmatprep.subr.mxu0 0.0
    %5009 = vmatpush1.msra.mxu0 0.0
    %5010 = vmatprep.subr.mxu0 0.0
    %5011 = vmatpush1.msra.mxu0 0.0
    %5012 = vmatprep.subr.mxu0 0.0
    %5013 = vmatpush1.msra.mxu0 0.0
    %5014 = vmatprep.subr.mxu0 0.0
    %5015 = vmatpush1.msra.mxu0 0.0
    %5016 = vmatprep.subr.mxu0 0.0
    %5017 = vmatpush1.msra.mxu0 0.0
    %5018 = vmatprep.subr.mxu0 0.0
    %5019 = vmatpush1.msra.mxu0 0.0
    %5020 = vmatprep.subr.mxu0 0.0
    %5021 = vmatpush1.msra.mxu0 %v4173
    %5022 = vmatprep.subr.mxu0 0.0
    %5023 = vmatpush2.msra.mxu0 0.0
    %5024 = vmatprep.subr.mxu0 0.0
    %5025 = vmatpush2.msra.mxu0 0.0
    %5026 = vmatprep.subr.mxu0 0.0
    %5027 = vmatpush2.msra.mxu0 0.0
    %5028 = vmatprep.subr.mxu0 0.0
    %5029 = vmatpush2.msra.mxu0 0.0
    %5030 = vmatprep.subr.mxu0 0.0
    %5031 = vmatpush2.msra.mxu0 0.0
    %5032 = vmatprep.subr.mxu0 0.0
    %5033 = vmatpush2.msra.mxu0 0.0
    %5034 = vmatprep.subr.mxu0 0.0
    %5035 = vmatpush2.msra.mxu0 0.0
    %5036 = vmatprep.subr.mxu0 0.0
    %5037 = vmatpush2.msra.mxu0 0.0
    %5038 = vmatprep.subr.mxu0 0.0
    %5039 = vmatpush2.msra.mxu0 0.0
    %5040 = vmatprep.subr.mxu0 0.0
    %5041 = vmatpush2.msra.mxu0 0.0
    %5042 = vmatprep.subr.mxu0 0.0
    %5043 = vmatpush2.msra.mxu0 0.0
    %5044 = vmatprep.subr.mxu0 0.0
    %5045 = vmatpush2.msra.mxu0 0.0
    %5046 = vmatprep.subr.mxu0 0.0
    %5047 = vmatpush2.msra.mxu0 0.0
    %5048 = vmatprep.subr.mxu0 0.0
    %5049 = vmatpush2.msra.mxu0 0.0
    %5050 = vmatprep.subr.mxu0 0.0
    %5051 = vmatpush2.msra.mxu0 0.0
    %5052 = vmatprep.subr.mxu0 0.0
    %5053 = vmatpush2.msra.mxu0 0.0
    %5054 = vmatprep.mubr.f32.mxu0 0.0
    %5055 = vmatmul.mubr.f32.gmra.mxu0 %v4988
    %v5056 = vpop.f32.mrf.mxu0
    %v5057 = vadd.f32 0.0, %v5056
    %v5058 = vpop.f32.mrf.mxu0
    %5059 = vdwg.mxu0
    %s5060 = scalar_lea.vmem %s8, 48
    %v5061 = vld [vmem:[%s5060] sm:$0xff]
    %v5062 = vld [vmem:[%s5060 + $0x8] sm:$0xff]
    %v5064 = vsel %vm536, %v4662, 0
    %v5067 = vsel %vm536, %v4735, 0
    %5069 = vmatprep.subr.mxu0 0.0
    %5070 = vmatpush1.msra.mxu0 0.0
    %5071 = vmatprep.subr.mxu0 0.0
    %5072 = vmatpush1.msra.mxu0 0.0
    %5073 = vmatprep.subr.mxu0 0.0
    %5074 = vmatpush1.msra.mxu0 0.0
    %5075 = vmatprep.subr.mxu0 0.0
    %5076 = vmatpush1.msra.mxu0 0.0
    %5077 = vmatprep.subr.mxu0 0.0
    %5078 = vmatpush1.msra.mxu0 0.0
    %5079 = vmatprep.subr.mxu0 0.0
    %5080 = vmatpush1.msra.mxu0 0.0
    %5081 = vmatprep.subr.mxu0 0.0
    %5082 = vmatpush1.msra.mxu0 0.0
    %5083 = vmatprep.subr.mxu0 0.0
    %5084 = vmatpush1.msra.mxu0 0.0
    %5085 = vmatprep.subr.mxu0 0.0
    %5086 = vmatpush1.msra.mxu0 0.0
    %5087 = vmatprep.subr.mxu0 0.0
    %5088 = vmatpush1.msra.mxu0 0.0
    %5089 = vmatprep.subr.mxu0 0.0
    %5090 = vmatpush1.msra.mxu0 0.0
    %5091 = vmatprep.subr.mxu0 0.0
    %5092 = vmatpush1.msra.mxu0 0.0
    %5093 = vmatprep.subr.mxu0 0.0
    %5094 = vmatpush1.msra.mxu0 0.0
    %5095 = vmatprep.subr.mxu0 0.0
    %5096 = vmatpush1.msra.mxu0 0.0
    %5097 = vmatprep.subr.mxu0 0.0
    %5098 = vmatpush1.msra.mxu0 %v5062
    %5099 = vmatprep.subr.mxu0 0.0
    %5100 = vmatpush1.msra.mxu0 %v5061
    %5101 = vmatprep.subr.mxu0 0.0
    %5102 = vmatpush2.msra.mxu0 0.0
    %5103 = vmatprep.subr.mxu0 0.0
    %5104 = vmatpush2.msra.mxu0 0.0
    %5105 = vmatprep.subr.mxu0 0.0
    %5106 = vmatpush2.msra.mxu0 0.0
    %5107 = vmatprep.subr.mxu0 0.0
    %5108 = vmatpush2.msra.mxu0 0.0
    %5109 = vmatprep.subr.mxu0 0.0
    %5110 = vmatpush2.msra.mxu0 0.0
    %5111 = vmatprep.subr.mxu0 0.0
    %5112 = vmatpush2.msra.mxu0 0.0
    %5113 = vmatprep.subr.mxu0 0.0
    %5114 = vmatpush2.msra.mxu0 0.0
    %5115 = vmatprep.subr.mxu0 0.0
    %5116 = vmatpush2.msra.mxu0 0.0
    %5117 = vmatprep.subr.mxu0 0.0
    %5118 = vmatpush2.msra.mxu0 0.0
    %5119 = vmatprep.subr.mxu0 0.0
    %5120 = vmatpush2.msra.mxu0 0.0
    %5121 = vmatprep.subr.mxu0 0.0
    %5122 = vmatpush2.msra.mxu0 0.0
    %5123 = vmatprep.subr.mxu0 0.0
    %5124 = vmatpush2.msra.mxu0 0.0
    %5125 = vmatprep.subr.mxu0 0.0
    %5126 = vmatpush2.msra.mxu0 0.0
    %5127 = vmatprep.subr.mxu0 0.0
    %5128 = vmatpush2.msra.mxu0 0.0
    %5129 = vmatprep.subr.mxu0 0.0
    %5130 = vmatpush2.msra.mxu0 0.0
    %5131 = vmatprep.subr.mxu0 0.0
    %5132 = vmatpush2.msra.mxu0 0.0
    %5133 = vmatprep.mubr.f32.mxu0 0.0
    %5134 = vmatmul.mubr.f32.gmra.mxu0 %v5064
    %v5135 = vpop.f32.mrf.mxu0
    %v5136 = vadd.f32 0.0, %v5135
    %v5137 = vpop.f32.mrf.mxu0
    %5138 = vmatprep.mubr.f32.mxu0 0.0
    %5139 = vmatmul.mubr.f32.gmra.mxu0 %v5067
    %v5140 = vpop.f32.mrf.mxu0
    %v5141 = vadd.f32 0.0, %v5140
    %v5142 = vpop.f32.mrf.mxu0
    %5143 = vdwg.mxu0
    %v5144 = vadd.f32 %v3848, %v5136
    %v5145 = vadd.f32 %v3849, %v5141
    %s5146 = scalar_lea.vmem %s10, 48
    %v5147 = vld [vmem:[%s5146] sm:$0xff]
    %v5148 = vld [vmem:[%s5146 + $0x8] sm:$0xff]
    %v5150 = vsel %vm536, %v4984, 0
    %v5153 = vsel %vm536, %v5057, 0
    %5155 = vmatprep.subr.mxu0 0.0
    %5156 = vmatpush1.msra.mxu0 0.0
    %5157 = vmatprep.subr.mxu0 0.0
    %5158 = vmatpush1.msra.mxu0 0.0
    %5159 = vmatprep.subr.mxu0 0.0
    %5160 = vmatpush1.msra.mxu0 0.0
    %5161 = vmatprep.subr.mxu0 0.0
    %5162 = vmatpush1.msra.mxu0 0.0
    %5163 = vmatprep.subr.mxu0 0.0
    %5164 = vmatpush1.msra.mxu0 0.0
    %5165 = vmatprep.subr.mxu0 0.0
    %5166 = vmatpush1.msra.mxu0 0.0
    %5167 = vmatprep.subr.mxu0 0.0
    %5168 = vmatpush1.msra.mxu0 0.0
    %5169 = vmatprep.subr.mxu0 0.0
    %5170 = vmatpush1.msra.mxu0 0.0
    %5171 = vmatprep.subr.mxu0 0.0
    %5172 = vmatpush1.msra.mxu0 0.0
    %5173 = vmatprep.subr.mxu0 0.0
    %5174 = vmatpush1.msra.mxu0 0.0
    %5175 = vmatprep.subr.mxu0 0.0
    %5176 = vmatpush1.msra.mxu0 0.0
    %5177 = vmatprep.subr.mxu0 0.0
    %5178 = vmatpush1.msra.mxu0 0.0
    %5179 = vmatprep.subr.mxu0 0.0
    %5180 = vmatpush1.msra.mxu0 0.0
    %5181 = vmatprep.subr.mxu0 0.0
    %5182 = vmatpush1.msra.mxu0 0.0
    %5183 = vmatprep.subr.mxu0 0.0
    %5184 = vmatpush1.msra.mxu0 %v5148
    %5185 = vmatprep.subr.mxu0 0.0
    %5186 = vmatpush1.msra.mxu0 %v5147
    %5187 = vmatprep.subr.mxu0 0.0
    %5188 = vmatpush2.msra.mxu0 0.0
    %5189 = vmatprep.subr.mxu0 0.0
    %5190 = vmatpush2.msra.mxu0 0.0
    %5191 = vmatprep.subr.mxu0 0.0
    %5192 = vmatpush2.msra.mxu0 0.0
    %5193 = vmatprep.subr.mxu0 0.0
    %5194 = vmatpush2.msra.mxu0 0.0
    %5195 = vmatprep.subr.mxu0 0.0
    %5196 = vmatpush2.msra.mxu0 0.0
    %5197 = vmatprep.subr.mxu0 0.0
    %5198 = vmatpush2.msra.mxu0 0.0
    %5199 = vmatprep.subr.mxu0 0.0
    %5200 = vmatpush2.msra.mxu0 0.0
    %5201 = vmatprep.subr.mxu0 0.0
    %5202 = vmatpush2.msra.mxu0 0.0
    %5203 = vmatprep.subr.mxu0 0.0
    %5204 = vmatpush2.msra.mxu0 0.0
    %5205 = vmatprep.subr.mxu0 0.0
    %5206 = vmatpush2.msra.mxu0 0.0
    %5207 = vmatprep.subr.mxu0 0.0
    %5208 = vmatpush2.msra.mxu0 0.0
    %5209 = vmatprep.subr.mxu0 0.0
    %5210 = vmatpush2.msra.mxu0 0.0
    %5211 = vmatprep.subr.mxu0 0.0
    %5212 = vmatpush2.msra.mxu0 0.0
    %5213 = vmatprep.subr.mxu0 0.0
    %5214 = vmatpush2.msra.mxu0 0.0
    %5215 = vmatprep.subr.mxu0 0.0
    %5216 = vmatpush2.msra.mxu0 0.0
    %5217 = vmatprep.subr.mxu0 0.0
    %5218 = vmatpush2.msra.mxu0 0.0
    %5219 = vmatprep.mubr.f32.mxu0 0.0
    %5220 = vmatmul.mubr.f32.gmra.mxu0 %v5150
    %v5221 = vpop.f32.mrf.mxu0
    %v5222 = vadd.f32 0.0, %v5221
    %v5223 = vpop.f32.mrf.mxu0
    %5224 = vmatprep.mubr.f32.mxu0 0.0
    %5225 = vmatmul.mubr.f32.gmra.mxu0 %v5153
    %v5226 = vpop.f32.mrf.mxu0
    %v5227 = vadd.f32 0.0, %v5226
    %v5228 = vpop.f32.mrf.mxu0
    %5229 = vdwg.mxu0
    %v5230 = vadd.f32 %v3934, %v5222
    %v5231 = vadd.f32 %v3935, %v5227
    %v5232 = vld [vmem:[%s9] sm:$0x1]
    %v5234 = vlaneseq
    %v5235 = vshrl.u32 %v5234, 7
    %v5236 = vsub.s32 0, %v5235
    %v5237 = vrot.slane %v5232, %v5236
    %v5239 = vadd.f32 %v5144, %v5237
    %v5240 = vadd.f32 %v5145, %v5237
    %5241 = vst.msk [vmem:[#allocation2] sm:$0xff] %vm53, %v5239
    %5242 = vst.msk [vmem:[#allocation2 + $0x8] sm:$0xff] %vm53, %v5240
    %v5243 = vld [vmem:[%s11] sm:$0x1]
    %v5245 = vlaneseq
    %v5246 = vshrl.u32 %v5245, 7
    %v5247 = vsub.s32 0, %v5246
    %v5248 = vrot.slane %v5243, %v5247
    %v5250 = vadd.f32 %v5230, %v5248
    %v5251 = vadd.f32 %v5231, %v5248
    %5252 = vst.msk [vmem:[#allocation4] sm:$0xff] %vm53, %v5250
    %5253 = vst.msk [vmem:[#allocation4 + $0x8] sm:$0xff] %vm53, %v5251
    // Predicated region
    $region50: #{cross_attention.1} parent=1 // pred_check
      _
    $region51: #{cross_attention.1} parent=1 // pred_check_branch
      %5255 = sbr.rel (0) target = $region53
    $region52: #{cross_attention.1} parent=1 // pred_region
      %s5257 = ssub.s32 256, 256
      %5258 = vsyncadd [#allocation3], %s5257
      %s5259 = sshll.u32 [#allocation2], 4
      %s5260 = int_to_ptr.vmem [resolvable:$true] %s5259
      %5265 = dma.vmem_to_hbm [thread:$0]  %s5260, 256, %s12, [#allocation3], 128, 128, 8
    $region53: #{cross_attention.1} parent=1 // pred_fallthru
      _
    // Predicated region
    $region54: #{cross_attention.1} parent=1 // pred_check
      _
    $region55: #{cross_attention.1} parent=1 // pred_check_branch
      %5267 = sbr.rel (0) target = $region57
    $region56: #{cross_attention.1} parent=1 // pred_region
      %s5269 = ssub.s32 256, 256
      %5270 = vsyncadd [#allocation5], %s5269
      %s5271 = sshll.u32 [#allocation4], 4
      %s5272 = int_to_ptr.vmem [resolvable:$true] %s5271
      %5277 = dma.vmem_to_hbm [thread:$0]  %s5272, 256, %s13, [#allocation5], 128, 128, 8
    $region57: #{cross_attention.1} parent=1 // pred_fallthru
      _
    // Predicated region
    $region58: #{cross_attention.1} parent=1 // pred_check
      _
    $region59: #{cross_attention.1} parent=1 // pred_check_branch
      %5279 = sbr.rel (0) target = $region61
    $region60: #{cross_attention.1} parent=1 // pred_region
      %5280 = dma.done [#allocation3], 256
    $region61: #{cross_attention.1} parent=1 // pred_fallthru
      _
    // Predicated region
    $region62: #{cross_attention.1} parent=1 // pred_check
      _
    $region63: #{cross_attention.1} parent=1 // pred_check_branch
      %5282 = sbr.rel (0) target = $region65
    $region64: #{cross_attention.1} parent=1 // pred_region
      %5283 = dma.done [#allocation5], 256
    $region65: #{cross_attention.1} parent=1 // pred_fallthru
      _
    %5284 = vsyncpa [#allocation3], 1
    %5285 = vsyncpa [#allocation5], 1

</llo_original>
